<compile_context>
chip_gen: v5e
topology: v5e:2x2
jax: 0.10.0
libtpu: 0.0.40
codegen_flags: <defaults>
</compile_context>

<pallas_src>
import jax
import jax.numpy as jnp
from jax.experimental import pallas as pl
from jax.experimental.pallas import tpu as pltpu


# ----------------------------------------------------------------------------
# Pallas kernel: whole LeNet forward as a weight-resident fused MLP.
# bf16 MXU operands, f32 accumulation; bias-add / tanh in f32 on the VPU.
# ----------------------------------------------------------------------------
def _lenet_fused_kernel(x_ref,
                        w1_ref, b1_ref, w2_ref, b2_ref, w3_ref, b3_ref,
                        w4_ref, b4_ref, w5_ref, b5_ref, o_ref):
    f32 = jnp.float32
    bf16 = jnp.bfloat16
    h = jnp.tanh(jnp.dot(x_ref[...], w1_ref[...],
                         preferred_element_type=f32) + b1_ref[...])
    h = jnp.tanh(jnp.dot(h.astype(bf16), w2_ref[...],
                         preferred_element_type=f32) + b2_ref[...])
    h = jnp.tanh(jnp.dot(h.astype(bf16), w3_ref[...],
                         preferred_element_type=f32) + b3_ref[...])
    h = jnp.tanh(jnp.dot(h.astype(bf16), w4_ref[...],
                         preferred_element_type=f32) + b4_ref[...])
    o_ref[...] = jnp.dot(h.astype(bf16), w5_ref[...],
                         preferred_element_type=f32) + b5_ref[...]


# ----------------------------------------------------------------------------
# Host-side weight preprocessing (runs once per parameter set, data-free).
# ----------------------------------------------------------------------------
def _pad2(a, rows, cols):
    return jnp.zeros((rows, cols), a.dtype).at[:a.shape[0], :a.shape[1]].set(a)


def _pad_bias(b, cols):
    return jnp.zeros((1, cols), b.dtype).at[0, :b.shape[0]].set(b)


def _avgpool_nchw(y):
    n, c, h, w = y.shape
    return y.reshape(n, c, h // 2, 2, w // 2, 2).mean(axis=(3, 5))


def build_dense_params(p):
    """Constant-fold conv1+pool1 and conv2+pool2 into dense matrices.

    Each conv+avgpool stage is linear, so its matrix is obtained exactly by
    pushing an identity basis through lax.conv + avgpool (weights only; the
    activation data path never touches XLA convs).  Feature order is always
    (c, h, w), i.e. exactly torch.flatten(start_dim=1) order, so linear1's
    weight applies without any activation transpose.

    Weights are returned in bfloat16 (MXU operands); biases stay float32
    (bias-add/tanh run in f32).  Padded rows/columns/bias entries are exact
    zeros, so padding never changes the numerics.
    """
    hi = jax.lax.Precision.HIGHEST
    dn = ("NCHW", "OIHW", "NCHW")

    # conv1(pad=2) + avgpool2 : R^784 -> R^1176
    eye1 = jnp.eye(28 * 28, dtype=jnp.float32).reshape(-1, 1, 28, 28)
    y = jax.lax.conv_general_dilated(eye1, p["w1"], (1, 1), [(2, 2), (2, 2)],
                                     dimension_numbers=dn, precision=hi)
    w1d = _avgpool_nchw(y).reshape(28 * 28, 6 * 14 * 14)
    b1d = jnp.repeat(p["b1"], 14 * 14)

    # conv2(valid) + avgpool2 : R^1176 -> R^400
    eye2 = jnp.eye(6 * 14 * 14, dtype=jnp.float32).reshape(-1, 6, 14, 14)
    y = jax.lax.conv_general_dilated(eye2, p["w2"], (1, 1), "VALID",
                                     dimension_numbers=dn, precision=hi)
    w2d = _avgpool_nchw(y).reshape(6 * 14 * 14, 16 * 5 * 5)
    b2d = jnp.repeat(p["b2"], 5 * 5)

    bf16 = jnp.bfloat16
    # Pad K of layer 1 to 896 (=7*128) and every output width to a multiple
    # of 128 (lane-dense loads & stores).
    return (
        _pad2(w1d, 896, 1280).astype(bf16),        _pad_bias(b1d, 1280),
        _pad2(w2d, 1280, 512).astype(bf16),        _pad_bias(b2d, 512),
        _pad2(p["wl1"].T, 512, 128).astype(bf16),  _pad_bias(p["bl1"], 128),
        _pad2(p["wl2"].T, 128, 128).astype(bf16),  _pad_bias(p["bl2"], 128),
        _pad2(p["wo"].T, 128, 128).astype(bf16),   _pad_bias(p["bo"], 128),
    )


# ----------------------------------------------------------------------------
# Forward: one gridded pallas_call, weights resident via constant index_maps.
# ----------------------------------------------------------------------------
def lenet_forward(x_nchw, dense_params, block_rows=512):
    n = x_nchw.shape[0]
    # C == 1, so the NCHW flatten is already the (h, w) pixel order W1 expects.
    x = x_nchw.reshape(n, 28 * 28).astype(jnp.float32)
    # Lane-align the streamed K dimension: 784 -> 896 = 7 * 128 zero columns,
    # and stream the image in bf16 (halves HBM bytes per image).
    x = jnp.pad(x, ((0, 0), (0, 896 - 784))).astype(jnp.bfloat16)

    # Batch tile: multiple of 8, <= block_rows, and (for v7x's two TensorCores)
    # no more than half the 8-rounded batch so the grid has >= 2 steps whenever
    # the batch allows it.
    n8 = ((n + 7) // 8) * 8
    nb = min(block_rows, max(8, (n8 // 2) // 8 * 8))
    n_pad = ((n + nb - 1) // nb) * nb
    if n_pad != n:
        x = jnp.pad(x, ((0, n_pad - n), (0, 0)))

    def const_spec(a):  # full-array block, fetched once, resident in VMEM
        return pl.BlockSpec(a.shape, lambda i: (0, 0))

    flops_per_row = 2 * (896 * 1280 + 1280 * 512 + 512 * 128
                         + 128 * 128 + 128 * 128)
    cost = pl.CostEstimate(
        flops=n_pad * flops_per_row,
        transcendentals=n_pad * (1280 + 512 + 128 + 128),
        bytes_accessed=(n_pad * (896 * 2 + 128 * 4)
                        + sum(int(a.size) * a.dtype.itemsize
                              for a in dense_params)),
    )

    out = pl.pallas_call(
        _lenet_fused_kernel,
        out_shape=jax.ShapeDtypeStruct((n_pad, 128), jnp.float32),
        grid=(n_pad // nb,),
        in_specs=[pl.BlockSpec((nb, 896), lambda i: (i, 0))]
                 + [const_spec(a) for a in dense_params],
        out_specs=pl.BlockSpec((nb, 128), lambda i: (i, 0)),
        compiler_params=pltpu.CompilerParams(
            dimension_semantics=("parallel",),
            # bf16 weights: ~3.8 MiB resident (~7.6 MiB if double-buffered);
            # 32 MiB leaves ample headroom on v7x's 64 MiB VMEM and overrides
            # v5e's 16 MiB scoped default.
            vmem_limit_bytes=32 * 1024 * 1024),
        cost_estimate=cost,
    )(x, *dense_params)
    return out[:n, :10]


# ----------------------------------------------------------------------------
# Pure-JAX reference (for sanity check against the PyTorch spec)
# ----------------------------------------------------------------------------
def lenet_ref(x, p):
    hi = jax.lax.Precision.HIGHEST
    dn = ("NCHW", "OIHW", "NCHW")
    y = jax.lax.conv_general_dilated(x, p["w1"], (1, 1), [(2, 2), (2, 2)],
                                     dimension_numbers=dn, precision=hi)
    y = y + p["b1"][None, :, None, None]
    y = jnp.tanh(_avgpool_nchw(y))
    y = jax.lax.conv_general_dilated(y, p["w2"], (1, 1), "VALID",
                                     dimension_numbers=dn, precision=hi)
    y = y + p["b2"][None, :, None, None]
    y = jnp.tanh(_avgpool_nchw(y))
    y = y.reshape(y.shape[0], -1)
    y = jnp.tanh(jnp.dot(y, p["wl1"].T, precision=hi) + p["bl1"])
    y = jnp.tanh(jnp.dot(y, p["wl2"].T, precision=hi) + p["bl2"])
    return jnp.dot(y, p["wo"].T, precision=hi) + p["bo"]


def init_params(key):
    def uni(k, shape, fan_in):
        bound = 1.0 / float(fan_in) ** 0.5
        return jax.random.uniform(k, shape, jnp.float32, -bound, bound)

    ks = jax.random.split(key, 10)
    return {
        "w1": uni(ks[0], (6, 1, 5, 5), 25),   "b1": uni(ks[1], (6,), 25),
        "w2": uni(ks[2], (16, 6, 5, 5), 150), "b2": uni(ks[3], (16,), 150),
        "wl1": uni(ks[4], (120, 400), 400),   "bl1": uni(ks[5], (120,), 400),
        "wl2": uni(ks[6], (84, 120), 120),    "bl2": uni(ks[7], (84,), 120),
        "wo": uni(ks[8], (10, 84), 84),       "bo": uni(ks[9], (10,), 84),
    }


if __name__ == "__main__":
    key = jax.random.PRNGKey(0)
    kx, kp = jax.random.split(key)
    # LeNet's linear1 (400 = 16*5*5) implies 28x28 single-channel input.
    x = jax.random.normal(kx, (4, 1, 28, 28), jnp.float32)
    params = init_params(kp)

    dense_params = build_dense_params(params)   # one-time weight constant-fold
    out = jax.block_until_ready(lenet_forward(x, dense_params))
    ref = jax.block_until_ready(lenet_ref(x, params))

    assert out.shape == (4, 10), out.shape
    err = float(jnp.max(jnp.abs(out - ref)))
    # bf16 MXU operands with f32 accumulation: observed error ~1e-3, far
    # inside the tolerance against the f32 HIGHEST-precision reference.
    assert jnp.allclose(out, ref, rtol=2e-2, atol=2e-2), err
    print("KERNEL_OK")
</pallas_src>

<mosaic_0001>
module attributes {stable_mosaic.version = 11 : i64} {
  func.func @_lenet_fused_kernel(%arg0: i32, %arg1: memref<8x896xbf16, #tpu.memory_space<vmem>>, %arg2: memref<896x1280xbf16, #tpu.memory_space<vmem>>, %arg3: memref<1x1280xf32, #tpu.memory_space<vmem>>, %arg4: memref<1280x512xbf16, #tpu.memory_space<vmem>>, %arg5: memref<1x512xf32, #tpu.memory_space<vmem>>, %arg6: memref<512x128xbf16, #tpu.memory_space<vmem>>, %arg7: memref<1x128xf32, #tpu.memory_space<vmem>>, %arg8: memref<128x128xbf16, #tpu.memory_space<vmem>>, %arg9: memref<1x128xf32, #tpu.memory_space<vmem>>, %arg10: memref<128x128xbf16, #tpu.memory_space<vmem>>, %arg11: memref<1x128xf32, #tpu.memory_space<vmem>>, %arg12: memref<8x128xf32, #tpu.memory_space<vmem>>) attributes {dimension_semantics = [#tpu.dimension_semantics<parallel>], iteration_bounds = array<i64: 1>, scalar_prefetch = 0 : i64, scratch_operands = 0 : i64, tpu.core_type = #tpu.core_type<tc>, window_params = [{transform_indices = @transform_0, window_bounds = array<i64: 8, 896>}, {pipeline_mode = #tpu.pipeline_mode<synchronous>, transform_indices = @transform_1, window_bounds = array<i64: 896, 1280>}, {pipeline_mode = #tpu.pipeline_mode<synchronous>, transform_indices = @transform_2, window_bounds = array<i64: 1, 1280>}, {pipeline_mode = #tpu.pipeline_mode<synchronous>, transform_indices = @transform_3, window_bounds = array<i64: 1280, 512>}, {pipeline_mode = #tpu.pipeline_mode<synchronous>, transform_indices = @transform_4, window_bounds = array<i64: 1, 512>}, {pipeline_mode = #tpu.pipeline_mode<synchronous>, transform_indices = @transform_5, window_bounds = array<i64: 512, 128>}, {pipeline_mode = #tpu.pipeline_mode<synchronous>, transform_indices = @transform_6, window_bounds = array<i64: 1, 128>}, {pipeline_mode = #tpu.pipeline_mode<synchronous>, transform_indices = @transform_7, window_bounds = array<i64: 128, 128>}, {pipeline_mode = #tpu.pipeline_mode<synchronous>, transform_indices = @transform_8, window_bounds = array<i64: 1, 128>}, {pipeline_mode = #tpu.pipeline_mode<synchronous>, transform_indices = @transform_9, window_bounds = array<i64: 128, 128>}, {pipeline_mode = #tpu.pipeline_mode<synchronous>, transform_indices = @transform_10, window_bounds = array<i64: 1, 128>}, {transform_indices = @transform_11, window_bounds = array<i64: 8, 128>}]} {
    %c0 = arith.constant 0 : index
    %c0_0 = arith.constant 0 : index
    %0 = vector.load %arg1[%c0, %c0_0] : memref<8x896xbf16, #tpu.memory_space<vmem>>, vector<8x896xbf16>
    %c0_1 = arith.constant 0 : index
    %c0_2 = arith.constant 0 : index
    %1 = vector.load %arg2[%c0_1, %c0_2] : memref<896x1280xbf16, #tpu.memory_space<vmem>>, vector<896x1280xbf16>
    %cst = arith.constant dense<0.000000e+00> : vector<8x1280xf32>
    %2 = tpu.matmul %0, %1, %cst {dimension_numbers = #tpu.dot_dimension_numbers<[1], [0], [0], [1], [0, 0, 1, 1], [], []>} : vector<8x896xbf16>, vector<896x1280xbf16>, vector<8x1280xf32> -> vector<8x1280xf32>
    %c0_3 = arith.constant 0 : index
    %c0_4 = arith.constant 0 : index
    %3 = vector.load %arg3[%c0_3, %c0_4] : memref<1x1280xf32, #tpu.memory_space<vmem>>, vector<1x1280xf32>
    %4 = vector.broadcast %3 : vector<1x1280xf32> to vector<8x1280xf32>
    %5 = arith.addf %2, %4 : vector<8x1280xf32>
    %6 = math.tanh %5 : vector<8x1280xf32>
    %7 = arith.truncf %6 : vector<8x1280xf32> to vector<8x1280xbf16>
    %c0_5 = arith.constant 0 : index
    %c0_6 = arith.constant 0 : index
    %8 = vector.load %arg4[%c0_5, %c0_6] : memref<1280x512xbf16, #tpu.memory_space<vmem>>, vector<1280x512xbf16>
    %cst_7 = arith.constant dense<0.000000e+00> : vector<8x512xf32>
    %9 = tpu.matmul %7, %8, %cst_7 {dimension_numbers = #tpu.dot_dimension_numbers<[1], [0], [0], [1], [0, 0, 1, 1], [], []>} : vector<8x1280xbf16>, vector<1280x512xbf16>, vector<8x512xf32> -> vector<8x512xf32>
    %c0_8 = arith.constant 0 : index
    %c0_9 = arith.constant 0 : index
    %10 = vector.load %arg5[%c0_8, %c0_9] : memref<1x512xf32, #tpu.memory_space<vmem>>, vector<1x512xf32>
    %11 = vector.broadcast %10 : vector<1x512xf32> to vector<8x512xf32>
    %12 = arith.addf %9, %11 : vector<8x512xf32>
    %13 = math.tanh %12 : vector<8x512xf32>
    %14 = arith.truncf %13 : vector<8x512xf32> to vector<8x512xbf16>
    %c0_10 = arith.constant 0 : index
    %c0_11 = arith.constant 0 : index
    %15 = vector.load %arg6[%c0_10, %c0_11] : memref<512x128xbf16, #tpu.memory_space<vmem>>, vector<512x128xbf16>
    %cst_12 = arith.constant dense<0.000000e+00> : vector<8x128xf32>
    %16 = tpu.matmul %14, %15, %cst_12 {dimension_numbers = #tpu.dot_dimension_numbers<[1], [0], [0], [1], [0, 0, 1, 1], [], []>} : vector<8x512xbf16>, vector<512x128xbf16>, vector<8x128xf32> -> vector<8x128xf32>
    %c0_13 = arith.constant 0 : index
    %c0_14 = arith.constant 0 : index
    %17 = vector.load %arg7[%c0_13, %c0_14] : memref<1x128xf32, #tpu.memory_space<vmem>>, vector<1x128xf32>
    %18 = vector.broadcast %17 : vector<1x128xf32> to vector<8x128xf32>
    %19 = arith.addf %16, %18 : vector<8x128xf32>
    %20 = math.tanh %19 : vector<8x128xf32>
    %21 = arith.truncf %20 : vector<8x128xf32> to vector<8x128xbf16>
    %c0_15 = arith.constant 0 : index
    %c0_16 = arith.constant 0 : index
    %22 = vector.load %arg8[%c0_15, %c0_16] : memref<128x128xbf16, #tpu.memory_space<vmem>>, vector<128x128xbf16>
    %cst_17 = arith.constant dense<0.000000e+00> : vector<8x128xf32>
    %23 = tpu.matmul %21, %22, %cst_17 {dimension_numbers = #tpu.dot_dimension_numbers<[1], [0], [0], [1], [0, 0, 1, 1], [], []>} : vector<8x128xbf16>, vector<128x128xbf16>, vector<8x128xf32> -> vector<8x128xf32>
    %c0_18 = arith.constant 0 : index
    %c0_19 = arith.constant 0 : index
    %24 = vector.load %arg9[%c0_18, %c0_19] : memref<1x128xf32, #tpu.memory_space<vmem>>, vector<1x128xf32>
    %25 = vector.broadcast %24 : vector<1x128xf32> to vector<8x128xf32>
    %26 = arith.addf %23, %25 : vector<8x128xf32>
    %27 = math.tanh %26 : vector<8x128xf32>
    %28 = arith.truncf %27 : vector<8x128xf32> to vector<8x128xbf16>
    %c0_20 = arith.constant 0 : index
    %c0_21 = arith.constant 0 : index
    %29 = vector.load %arg10[%c0_20, %c0_21] : memref<128x128xbf16, #tpu.memory_space<vmem>>, vector<128x128xbf16>
    %cst_22 = arith.constant dense<0.000000e+00> : vector<8x128xf32>
    %30 = tpu.matmul %28, %29, %cst_22 {dimension_numbers = #tpu.dot_dimension_numbers<[1], [0], [0], [1], [0, 0, 1, 1], [], []>} : vector<8x128xbf16>, vector<128x128xbf16>, vector<8x128xf32> -> vector<8x128xf32>
    %c0_23 = arith.constant 0 : index
    %c0_24 = arith.constant 0 : index
    %31 = vector.load %arg11[%c0_23, %c0_24] : memref<1x128xf32, #tpu.memory_space<vmem>>, vector<1x128xf32>
    %32 = vector.broadcast %31 : vector<1x128xf32> to vector<8x128xf32>
    %33 = arith.addf %30, %32 : vector<8x128xf32>
    %c0_25 = arith.constant 0 : index
    %c0_26 = arith.constant 0 : index
    %34 = vector.load %arg12[%c0_25, %c0_26] : memref<8x128xf32, #tpu.memory_space<vmem>>, vector<8x128xf32>
    tpu.vector_store %arg12[%c0_25, %c0_26], %33 {strides = array<i32>} : memref<8x128xf32, #tpu.memory_space<vmem>>, vector<8x128xf32>,
    return
  }
  func.func @transform_0(%arg0: i32) -> (i32, i32) {
    %c0_i32 = arith.constant 0 : i32
    %c0_i32_0 = arith.constant 0 : i32
    return %arg0, %c0_i32 : i32, i32
  }
  func.func @transform_1(%arg0: i32) -> (i32, i32) {
    %c0_i32 = arith.constant 0 : i32
    %c0_i32_0 = arith.constant 0 : i32
    %c0_i32_1 = arith.constant 0 : i32
    return %c0_i32, %c0_i32_0 : i32, i32
  }
  func.func @transform_2(%arg0: i32) -> (i32, i32) {
    %c0_i32 = arith.constant 0 : i32
    %c0_i32_0 = arith.constant 0 : i32
    %c0_i32_1 = arith.constant 0 : i32
    return %c0_i32, %c0_i32_0 : i32, i32
  }
  func.func @transform_3(%arg0: i32) -> (i32, i32) {
    %c0_i32 = arith.constant 0 : i32
    %c0_i32_0 = arith.constant 0 : i32
    %c0_i32_1 = arith.constant 0 : i32
    return %c0_i32, %c0_i32_0 : i32, i32
  }
  func.func @transform_4(%arg0: i32) -> (i32, i32) {
    %c0_i32 = arith.constant 0 : i32
    %c0_i32_0 = arith.constant 0 : i32
    %c0_i32_1 = arith.constant 0 : i32
    return %c0_i32, %c0_i32_0 : i32, i32
  }
  func.func @transform_5(%arg0: i32) -> (i32, i32) {
    %c0_i32 = arith.constant 0 : i32
    %c0_i32_0 = arith.constant 0 : i32
    %c0_i32_1 = arith.constant 0 : i32
    return %c0_i32, %c0_i32_0 : i32, i32
  }
  func.func @transform_6(%arg0: i32) -> (i32, i32) {
    %c0_i32 = arith.constant 0 : i32
    %c0_i32_0 = arith.constant 0 : i32
    %c0_i32_1 = arith.constant 0 : i32
    return %c0_i32, %c0_i32_0 : i32, i32
  }
  func.func @transform_7(%arg0: i32) -> (i32, i32) {
    %c0_i32 = arith.constant 0 : i32
    %c0_i32_0 = arith.constant 0 : i32
    %c0_i32_1 = arith.constant 0 : i32
    return %c0_i32, %c0_i32_0 : i32, i32
  }
  func.func @transform_8(%arg0: i32) -> (i32, i32) {
    %c0_i32 = arith.constant 0 : i32
    %c0_i32_0 = arith.constant 0 : i32
    %c0_i32_1 = arith.constant 0 : i32
    return %c0_i32, %c0_i32_0 : i32, i32
  }
  func.func @transform_9(%arg0: i32) -> (i32, i32) {
    %c0_i32 = arith.constant 0 : i32
    %c0_i32_0 = arith.constant 0 : i32
    %c0_i32_1 = arith.constant 0 : i32
    return %c0_i32, %c0_i32_0 : i32, i32
  }
  func.func @transform_10(%arg0: i32) -> (i32, i32) {
    %c0_i32 = arith.constant 0 : i32
    %c0_i32_0 = arith.constant 0 : i32
    %c0_i32_1 = arith.constant 0 : i32
    return %c0_i32, %c0_i32_0 : i32, i32
  }
  func.func @transform_11(%arg0: i32) -> (i32, i32) {
    %c0_i32 = arith.constant 0 : i32
    %c0_i32_0 = arith.constant 0 : i32
    return %arg0, %c0_i32 : i32, i32
  }
}

</mosaic_0001>

<llo_original>
// kernel: tpu_custom_call.1
$region0: #{tpu_custom_call.1}
  #allocation0 [shape = 'u32[]', space=smem, size = 0x4, offset = 0x4, fixed_abs, tag = 'smem constant byte address 0x4 - core index']
  #allocation1 [shape = 'u32[72,128]{1,0:T(1,128)}', space=vmem, size = 0x9000, scoped, tag = 'internal scratch']
  %s0 = inlined_call_operand.hbm [shape: bf16[8,896], index: 0, kind: input, shape index: {}]
  %s1 = inlined_call_operand.hbm [shape: bf16[896,1280], index: 1, kind: input, shape index: {}]
  %s2 = inlined_call_operand.hbm [shape: f32[1,1280], index: 2, kind: input, shape index: {}]
  %s3 = inlined_call_operand.hbm [shape: bf16[1280,512], index: 3, kind: input, shape index: {}]
  %s4 = inlined_call_operand.hbm [shape: f32[1,512], index: 4, kind: input, shape index: {}]
  %s5 = inlined_call_operand.hbm [shape: bf16[512,128], index: 5, kind: input, shape index: {}]
  %s6 = inlined_call_operand.hbm [shape: f32[1,128], index: 6, kind: input, shape index: {}]
  %s7 = inlined_call_operand.hbm [shape: bf16[128,128], index: 7, kind: input, shape index: {}]
  %s8 = inlined_call_operand.hbm [shape: f32[1,128], index: 8, kind: input, shape index: {}]
  %s9 = inlined_call_operand.hbm [shape: bf16[128,128], index: 9, kind: input, shape index: {}]
  %s10 = inlined_call_operand.hbm [shape: f32[1,128], index: 10, kind: input, shape index: {}]
  %s11 = inlined_call_operand.hbm [shape: f32[8,128], index: 11, kind: output, shape index: {}]
  %s12 = sld [smem:[#allocation0]]
  $region98: #{tpu_custom_call.1} parent=0
    _
  %s14 = ssub.s32 1, %s12
  %s15 = scalar_select 0, %s14, %s12
  $region1: #{tpu_custom_call.1} parent=0
    #allocation2 [shape = 'u8[14336]{0}', space=vmem, size = 0x3800, scoped, tag = 'input window, operand 0, single buffered']
    #allocation3 [shape = 's32[1]{0}', space=sflag, size = 0x4, scoped, tag = 'scoped memory for tpu_custom_call.1']
    #allocation4 [shape = 's32[1]{0}', space=sflag, size = 0x4, scoped, tag = 'scoped memory for tpu_custom_call.1']
    #allocation5 [shape = 'u8[2293760]{0}', space=vmem, size = 0x230000, scoped, tag = 'input window, operand 1, single buffered']
    #allocation6 [shape = 's32[1]{0}', space=sflag, size = 0x4, scoped, tag = 'scoped memory for tpu_custom_call.1']
    #allocation7 [shape = 'u8[5120]{0}', space=vmem, size = 0x1400, scoped, tag = 'input window, operand 2, single buffered']
    #allocation8 [shape = 'u8[1310720]{0}', space=vmem, size = 0x140000, scoped, tag = 'input window, operand 3, single buffered']
    #allocation9 [shape = 's32[1]{0}', space=sflag, size = 0x4, scoped, tag = 'scoped memory for tpu_custom_call.1']
    #allocation10 [shape = 'u8[2048]{0}', space=vmem, size = 0x800, scoped, tag = 'input window, operand 4, single buffered']
    #allocation11 [shape = 'u8[131072]{0}', space=vmem, size = 0x20000, scoped, tag = 'input window, operand 5, single buffered']
    #allocation12 [shape = 's32[1]{0}', space=sflag, size = 0x4, scoped, tag = 'scoped memory for tpu_custom_call.1']
    #allocation13 [shape = 'u8[512]{0}', space=vmem, size = 0x400, scoped, tag = 'input window, operand 6, single buffered']
    #allocation14 [shape = 'u8[32768]{0}', space=vmem, size = 0x8000, scoped, tag = 'input window, operand 7, single buffered']
    #allocation15 [shape = 's32[1]{0}', space=sflag, size = 0x4, scoped, tag = 'scoped memory for tpu_custom_call.1']
    #allocation16 [shape = 'u8[512]{0}', space=vmem, size = 0x400, scoped, tag = 'input window, operand 8, single buffered']
    #allocation17 [shape = 'u8[32768]{0}', space=vmem, size = 0x8000, scoped, tag = 'input window, operand 9, single buffered']
    #allocation18 [shape = 's32[1]{0}', space=sflag, size = 0x4, scoped, tag = 'scoped memory for tpu_custom_call.1']
    #allocation19 [shape = 'u8[512]{0}', space=vmem, size = 0x400, scoped, tag = 'input window, operand 10, single buffered']
    #allocation20 [shape = 'u8[4096]{0}', space=vmem, size = 0x1000, scoped, tag = 'output window, operand 0, single buffered']
    %16 = vsyncpa [#allocation3], 0
    %17 = vsyncpa [#allocation6], 0
    %18 = vsyncpa [#allocation9], 0
    %19 = vsyncpa [#allocation12], 0
    %20 = vsyncpa [#allocation15], 0
    %21 = vsyncpa [#allocation18], 0
    %22 = vsyncpa [#allocation4], 0
    // Predicated region
    $region2: #{tpu_custom_call.1} parent=1 // pred_check
      _
    $region3: #{tpu_custom_call.1} parent=1 // pred_check_branch
      %24 = sbr.rel (0) target = $region5
    $region4: #{tpu_custom_call.1} parent=1 // pred_region
      %26 = vsyncadd [#allocation3], 0
      %s28 = sshll.u32 %s0, 4
      %s29 = int_to_ptr.hbm [resolvable:$true] %s28
      %s30 = sshll.u32 [#allocation2], 4
      %s31 = int_to_ptr.vmem [resolvable:$true] %s30
      %33 = dma.hbm_to_vmem [thread:$0]  %s29, 448, %s31, [#allocation3]
    $region5: #{tpu_custom_call.1} parent=1 // pred_fallthru
      _
    // Predicated region
    $region6: #{tpu_custom_call.1} parent=1 // pred_check
      _
    $region7: #{tpu_custom_call.1} parent=1 // pred_check_branch
      %35 = sbr.rel (0) target = $region9
    $region8: #{tpu_custom_call.1} parent=1 // pred_region
      %37 = vsyncadd [#allocation6], 0
      %s38 = sshll.u32 %s1, 4
      %s39 = int_to_ptr.hbm [resolvable:$true] %s38
      %s40 = sshll.u32 [#allocation5], 4
      %s41 = int_to_ptr.vmem [resolvable:$true] %s40
      %46 = dma.hbm_to_vmem [thread:$0]  %s39, 71680, %s41, [#allocation6], 640, 640, 40
    $region9: #{tpu_custom_call.1} parent=1 // pred_fallthru
      _
    // Predicated region
    $region10: #{tpu_custom_call.1} parent=1 // pred_check
      _
    $region11: #{tpu_custom_call.1} parent=1 // pred_check_branch
      %48 = sbr.rel (0) target = $region13
    $region12: #{tpu_custom_call.1} parent=1 // pred_region
      %50 = vsyncadd [#allocation6], 0
      %s52 = sshll.u32 %s2, 4
      %s53 = int_to_ptr.hbm [resolvable:$true] %s52
      %s54 = sshll.u32 [#allocation7], 4
      %s55 = int_to_ptr.vmem [resolvable:$true] %s54
      %57 = dma.hbm_to_vmem [thread:$0]  %s53, 160, %s55, [#allocation6]
    $region13: #{tpu_custom_call.1} parent=1 // pred_fallthru
      _
    // Predicated region
    $region14: #{tpu_custom_call.1} parent=1 // pred_check
      _
    $region15: #{tpu_custom_call.1} parent=1 // pred_check_branch
      %59 = sbr.rel (0) target = $region17
    $region16: #{tpu_custom_call.1} parent=1 // pred_region
      %61 = vsyncadd [#allocation9], 0
      %s62 = sshll.u32 %s3, 4
      %s63 = int_to_ptr.hbm [resolvable:$true] %s62
      %s64 = sshll.u32 [#allocation8], 4
      %s65 = int_to_ptr.vmem [resolvable:$true] %s64
      %70 = dma.hbm_to_vmem [thread:$0]  %s63, 40960, %s65, [#allocation9], 256, 256, 16
    $region17: #{tpu_custom_call.1} parent=1 // pred_fallthru
      _
    // Predicated region
    $region18: #{tpu_custom_call.1} parent=1 // pred_check
      _
    $region19: #{tpu_custom_call.1} parent=1 // pred_check_branch
      %72 = sbr.rel (0) target = $region21
    $region20: #{tpu_custom_call.1} parent=1 // pred_region
      %74 = vsyncadd [#allocation9], 0
      %s76 = sshll.u32 %s4, 4
      %s77 = int_to_ptr.hbm [resolvable:$true] %s76
      %s78 = sshll.u32 [#allocation10], 4
      %s79 = int_to_ptr.vmem [resolvable:$true] %s78
      %81 = dma.hbm_to_vmem [thread:$0]  %s77, 64, %s79, [#allocation9]
    $region21: #{tpu_custom_call.1} parent=1 // pred_fallthru
      _
    // Predicated region
    $region22: #{tpu_custom_call.1} parent=1 // pred_check
      _
    $region23: #{tpu_custom_call.1} parent=1 // pred_check_branch
      %83 = sbr.rel (0) target = $region25
    $region24: #{tpu_custom_call.1} parent=1 // pred_region
      %85 = vsyncadd [#allocation12], 0
      %s86 = sshll.u32 %s5, 4
      %s87 = int_to_ptr.hbm [resolvable:$true] %s86
      %s88 = sshll.u32 [#allocation11], 4
      %s89 = int_to_ptr.vmem [resolvable:$true] %s88
      %94 = dma.hbm_to_vmem [thread:$0]  %s87, 4096, %s89, [#allocation12], 64, 64, 4
    $region25: #{tpu_custom_call.1} parent=1 // pred_fallthru
      _
    // Predicated region
    $region26: #{tpu_custom_call.1} parent=1 // pred_check
      _
    $region27: #{tpu_custom_call.1} parent=1 // pred_check_branch
      %96 = sbr.rel (0) target = $region29
    $region28: #{tpu_custom_call.1} parent=1 // pred_region
      %98 = vsyncadd [#allocation12], 0
      %s100 = sshll.u32 %s6, 4
      %s101 = int_to_ptr.hbm [resolvable:$true] %s100
      %s102 = sshll.u32 [#allocation13], 4
      %s103 = int_to_ptr.vmem [resolvable:$true] %s102
      %105 = dma.hbm_to_vmem [thread:$0]  %s101, 16, %s103, [#allocation12]
    $region29: #{tpu_custom_call.1} parent=1 // pred_fallthru
      _
    // Predicated region
    $region30: #{tpu_custom_call.1} parent=1 // pred_check
      _
    $region31: #{tpu_custom_call.1} parent=1 // pred_check_branch
      %107 = sbr.rel (0) target = $region33
    $region32: #{tpu_custom_call.1} parent=1 // pred_region
      %109 = vsyncadd [#allocation15], 0
      %s110 = sshll.u32 %s7, 4
      %s111 = int_to_ptr.hbm [resolvable:$true] %s110
      %s112 = sshll.u32 [#allocation14], 4
      %s113 = int_to_ptr.vmem [resolvable:$true] %s112
      %118 = dma.hbm_to_vmem [thread:$0]  %s111, 1024, %s113, [#allocation15], 64, 64, 4
    $region33: #{tpu_custom_call.1} parent=1 // pred_fallthru
      _
    // Predicated region
    $region34: #{tpu_custom_call.1} parent=1 // pred_check
      _
    $region35: #{tpu_custom_call.1} parent=1 // pred_check_branch
      %120 = sbr.rel (0) target = $region37
    $region36: #{tpu_custom_call.1} parent=1 // pred_region
      %122 = vsyncadd [#allocation15], 0
      %s124 = sshll.u32 %s8, 4
      %s125 = int_to_ptr.hbm [resolvable:$true] %s124
      %s126 = sshll.u32 [#allocation16], 4
      %s127 = int_to_ptr.vmem [resolvable:$true] %s126
      %129 = dma.hbm_to_vmem [thread:$0]  %s125, 16, %s127, [#allocation15]
    $region37: #{tpu_custom_call.1} parent=1 // pred_fallthru
      _
    // Predicated region
    $region38: #{tpu_custom_call.1} parent=1 // pred_check
      _
    $region39: #{tpu_custom_call.1} parent=1 // pred_check_branch
      %131 = sbr.rel (0) target = $region41
    $region40: #{tpu_custom_call.1} parent=1 // pred_region
      %133 = vsyncadd [#allocation18], 0
      %s134 = sshll.u32 %s9, 4
      %s135 = int_to_ptr.hbm [resolvable:$true] %s134
      %s136 = sshll.u32 [#allocation17], 4
      %s137 = int_to_ptr.vmem [resolvable:$true] %s136
      %142 = dma.hbm_to_vmem [thread:$0]  %s135, 1024, %s137, [#allocation18], 64, 64, 4
    $region41: #{tpu_custom_call.1} parent=1 // pred_fallthru
      _
    // Predicated region
    $region42: #{tpu_custom_call.1} parent=1 // pred_check
      _
    $region43: #{tpu_custom_call.1} parent=1 // pred_check_branch
      %144 = sbr.rel (0) target = $region45
    $region44: #{tpu_custom_call.1} parent=1 // pred_region
      %146 = vsyncadd [#allocation18], 0
      %s148 = sshll.u32 %s10, 4
      %s149 = int_to_ptr.hbm [resolvable:$true] %s148
      %s150 = sshll.u32 [#allocation19], 4
      %s151 = int_to_ptr.vmem [resolvable:$true] %s150
      %153 = dma.hbm_to_vmem [thread:$0]  %s149, 16, %s151, [#allocation18]
    $region45: #{tpu_custom_call.1} parent=1 // pred_fallthru
      _
    // Predicated region
    $region46: #{tpu_custom_call.1} parent=1 // pred_check
      _
    $region47: #{tpu_custom_call.1} parent=1 // pred_check_branch
      %155 = sbr.rel (0) target = $region49
    $region48: #{tpu_custom_call.1} parent=1 // pred_region
      %157 = dma.done [#allocation3], 448
    $region49: #{tpu_custom_call.1} parent=1 // pred_fallthru
      _
    // Predicated region
    $region50: #{tpu_custom_call.1} parent=1 // pred_check
      _
    $region51: #{tpu_custom_call.1} parent=1 // pred_check_branch
      %159 = sbr.rel (0) target = $region53
    $region52: #{tpu_custom_call.1} parent=1 // pred_region
      %161 = dma.done [#allocation6], 71680
    $region53: #{tpu_custom_call.1} parent=1 // pred_fallthru
      _
    // Predicated region
    $region54: #{tpu_custom_call.1} parent=1 // pred_check
      _
    $region55: #{tpu_custom_call.1} parent=1 // pred_check_branch
      %163 = sbr.rel (0) target = $region57
    $region56: #{tpu_custom_call.1} parent=1 // pred_region
      %165 = dma.done [#allocation6], 160
    $region57: #{tpu_custom_call.1} parent=1 // pred_fallthru
      _
    // Predicated region
    $region58: #{tpu_custom_call.1} parent=1 // pred_check
      _
    $region59: #{tpu_custom_call.1} parent=1 // pred_check_branch
      %167 = sbr.rel (0) target = $region61
    $region60: #{tpu_custom_call.1} parent=1 // pred_region
      %169 = dma.done [#allocation9], 40960
    $region61: #{tpu_custom_call.1} parent=1 // pred_fallthru
      _
    // Predicated region
    $region62: #{tpu_custom_call.1} parent=1 // pred_check
      _
    $region63: #{tpu_custom_call.1} parent=1 // pred_check_branch
      %171 = sbr.rel (0) target = $region65
    $region64: #{tpu_custom_call.1} parent=1 // pred_region
      %173 = dma.done [#allocation9], 64
    $region65: #{tpu_custom_call.1} parent=1 // pred_fallthru
      _
    // Predicated region
    $region66: #{tpu_custom_call.1} parent=1 // pred_check
      _
    $region67: #{tpu_custom_call.1} parent=1 // pred_check_branch
      %175 = sbr.rel (0) target = $region69
    $region68: #{tpu_custom_call.1} parent=1 // pred_region
      %177 = dma.done [#allocation12], 4096
    $region69: #{tpu_custom_call.1} parent=1 // pred_fallthru
      _
    // Predicated region
    $region70: #{tpu_custom_call.1} parent=1 // pred_check
      _
    $region71: #{tpu_custom_call.1} parent=1 // pred_check_branch
      %179 = sbr.rel (0) target = $region73
    $region72: #{tpu_custom_call.1} parent=1 // pred_region
      %181 = dma.done [#allocation12], 16
    $region73: #{tpu_custom_call.1} parent=1 // pred_fallthru
      _
    // Predicated region
    $region74: #{tpu_custom_call.1} parent=1 // pred_check
      _
    $region75: #{tpu_custom_call.1} parent=1 // pred_check_branch
      %183 = sbr.rel (0) target = $region77
    $region76: #{tpu_custom_call.1} parent=1 // pred_region
      %185 = dma.done [#allocation15], 1024
    $region77: #{tpu_custom_call.1} parent=1 // pred_fallthru
      _
    // Predicated region
    $region78: #{tpu_custom_call.1} parent=1 // pred_check
      _
    $region79: #{tpu_custom_call.1} parent=1 // pred_check_branch
      %187 = sbr.rel (0) target = $region81
    $region80: #{tpu_custom_call.1} parent=1 // pred_region
      %189 = dma.done [#allocation15], 16
    $region81: #{tpu_custom_call.1} parent=1 // pred_fallthru
      _
    // Predicated region
    $region82: #{tpu_custom_call.1} parent=1 // pred_check
      _
    $region83: #{tpu_custom_call.1} parent=1 // pred_check_branch
      %191 = sbr.rel (0) target = $region85
    $region84: #{tpu_custom_call.1} parent=1 // pred_region
      %193 = dma.done [#allocation18], 1024
    $region85: #{tpu_custom_call.1} parent=1 // pred_fallthru
      _
    // Predicated region
    $region86: #{tpu_custom_call.1} parent=1 // pred_check
      _
    $region87: #{tpu_custom_call.1} parent=1 // pred_check_branch
      %195 = sbr.rel (0) target = $region89
    $region88: #{tpu_custom_call.1} parent=1 // pred_region
      %197 = dma.done [#allocation18], 16
    $region89: #{tpu_custom_call.1} parent=1 // pred_fallthru
      _
    %v198 = vld [vmem:[#allocation2] sm:$0xff]
    %v199 = vld [vmem:[#allocation2 + $0x8] sm:$0xff]
    %v200 = vld [vmem:[#allocation2 + $0x10] sm:$0xff]
    %v201 = vld [vmem:[#allocation2 + $0x18] sm:$0xf]
    %v202 = vld [vmem:[#allocation5] sm:$0xff]
    %v203 = vld [vmem:[#allocation5 + $0x8] sm:$0xff]
    %v204 = vld [vmem:[#allocation5 + $0x10] sm:$0xff]
    %v205 = vld [vmem:[#allocation5 + $0x18] sm:$0xff]
    %v206 = vld [vmem:[#allocation5 + $0x20] sm:$0xff]
    %v207 = vld [vmem:[#allocation5 + $0x28] sm:$0xff]
    %v208 = vld [vmem:[#allocation5 + $0x30] sm:$0xff]
    %v209 = vld [vmem:[#allocation5 + $0x38] sm:$0xff]
    %v210 = vld [vmem:[#allocation5 + $0x40] sm:$0xff]
    %v211 = vld [vmem:[#allocation5 + $0x48] sm:$0xff]
    %v212 = vld [vmem:[#allocation5 + $0x50] sm:$0xff]
    %v213 = vld [vmem:[#allocation5 + $0x58] sm:$0xff]
    %v214 = vld [vmem:[#allocation5 + $0x60] sm:$0xff]
    %v215 = vld [vmem:[#allocation5 + $0x68] sm:$0xff]
    %v216 = vld [vmem:[#allocation5 + $0x70] sm:$0xff]
    %v217 = vld [vmem:[#allocation5 + $0x78] sm:$0xff]
    %v218 = vld [vmem:[#allocation5 + $0x80] sm:$0xff]
    %v219 = vld [vmem:[#allocation5 + $0x88] sm:$0xff]
    %v220 = vld [vmem:[#allocation5 + $0x90] sm:$0xff]
    %v221 = vld [vmem:[#allocation5 + $0x98] sm:$0xff]
    %v222 = vld [vmem:[#allocation5 + $0xa0] sm:$0xff]
    %v223 = vld [vmem:[#allocation5 + $0xa8] sm:$0xff]
    %v224 = vld [vmem:[#allocation5 + $0xb0] sm:$0xff]
    %v225 = vld [vmem:[#allocation5 + $0xb8] sm:$0xff]
    %v226 = vld [vmem:[#allocation5 + $0xc0] sm:$0xff]
    %v227 = vld [vmem:[#allocation5 + $0xc8] sm:$0xff]
    %v228 = vld [vmem:[#allocation5 + $0xd0] sm:$0xff]
    %v229 = vld [vmem:[#allocation5 + $0xd8] sm:$0xff]
    %v230 = vld [vmem:[#allocation5 + $0xe0] sm:$0xff]
    %v231 = vld [vmem:[#allocation5 + $0xe8] sm:$0xff]
    %v232 = vld [vmem:[#allocation5 + $0xf0] sm:$0xff]
    %v233 = vld [vmem:[#allocation5 + $0xf8] sm:$0xff]
    %v234 = vld [vmem:[#allocation5 + $0x100] sm:$0xff]
    %v235 = vld [vmem:[#allocation5 + $0x108] sm:$0xff]
    %v236 = vld [vmem:[#allocation5 + $0x110] sm:$0xff]
    %v237 = vld [vmem:[#allocation5 + $0x118] sm:$0xff]
    %v238 = vld [vmem:[#allocation5 + $0x120] sm:$0xff]
    %v239 = vld [vmem:[#allocation5 + $0x128] sm:$0xff]
    %v240 = vld [vmem:[#allocation5 + $0x130] sm:$0xff]
    %v241 = vld [vmem:[#allocation5 + $0x138] sm:$0xff]
    %v242 = vld [vmem:[#allocation5 + $0x140] sm:$0xff]
    %v243 = vld [vmem:[#allocation5 + $0x148] sm:$0xff]
    %v244 = vld [vmem:[#allocation5 + $0x150] sm:$0xff]
    %v245 = vld [vmem:[#allocation5 + $0x158] sm:$0xff]
    %v246 = vld [vmem:[#allocation5 + $0x160] sm:$0xff]
    %v247 = vld [vmem:[#allocation5 + $0x168] sm:$0xff]
    %v248 = vld [vmem:[#allocation5 + $0x170] sm:$0xff]
    %v249 = vld [vmem:[#allocation5 + $0x178] sm:$0xff]
    %v250 = vld [vmem:[#allocation5 + $0x180] sm:$0xff]
    %v251 = vld [vmem:[#allocation5 + $0x188] sm:$0xff]
    %v252 = vld [vmem:[#allocation5 + $0x190] sm:$0xff]
    %v253 = vld [vmem:[#allocation5 + $0x198] sm:$0xff]
    %v254 = vld [vmem:[#allocation5 + $0x1a0] sm:$0xff]
    %v255 = vld [vmem:[#allocation5 + $0x1a8] sm:$0xff]
    %v256 = vld [vmem:[#allocation5 + $0x1b0] sm:$0xff]
    %v257 = vld [vmem:[#allocation5 + $0x1b8] sm:$0xff]
    %v258 = vld [vmem:[#allocation5 + $0x1c0] sm:$0xff]
    %v259 = vld [vmem:[#allocation5 + $0x1c8] sm:$0xff]
    %v260 = vld [vmem:[#allocation5 + $0x1d0] sm:$0xff]
    %v261 = vld [vmem:[#allocation5 + $0x1d8] sm:$0xff]
    %v262 = vld [vmem:[#allocation5 + $0x1e0] sm:$0xff]
    %v263 = vld [vmem:[#allocation5 + $0x1e8] sm:$0xff]
    %v264 = vld [vmem:[#allocation5 + $0x1f0] sm:$0xff]
    %v265 = vld [vmem:[#allocation5 + $0x1f8] sm:$0xff]
    %v266 = vld [vmem:[#allocation5 + $0x200] sm:$0xff]
    %v267 = vld [vmem:[#allocation5 + $0x208] sm:$0xff]
    %v268 = vld [vmem:[#allocation5 + $0x210] sm:$0xff]
    %v269 = vld [vmem:[#allocation5 + $0x218] sm:$0xff]
    %v270 = vld [vmem:[#allocation5 + $0x220] sm:$0xff]
    %v271 = vld [vmem:[#allocation5 + $0x228] sm:$0xff]
    %v272 = vld [vmem:[#allocation5 + $0x230] sm:$0xff]
    %v273 = vld [vmem:[#allocation5 + $0x238] sm:$0xff]
    %v274 = vld [vmem:[#allocation5 + $0x240] sm:$0xff]
    %v275 = vld [vmem:[#allocation5 + $0x248] sm:$0xff]
    %v276 = vld [vmem:[#allocation5 + $0x250] sm:$0xff]
    %v277 = vld [vmem:[#allocation5 + $0x258] sm:$0xff]
    %v278 = vld [vmem:[#allocation5 + $0x260] sm:$0xff]
    %v279 = vld [vmem:[#allocation5 + $0x268] sm:$0xff]
    %v280 = vld [vmem:[#allocation5 + $0x270] sm:$0xff]
    %v281 = vld [vmem:[#allocation5 + $0x278] sm:$0xff]
    %v282 = vld [vmem:[#allocation5 + $0x280] sm:$0xff]
    %v283 = vld [vmem:[#allocation5 + $0x288] sm:$0xff]
    %v284 = vld [vmem:[#allocation5 + $0x290] sm:$0xff]
    %v285 = vld [vmem:[#allocation5 + $0x298] sm:$0xff]
    %v286 = vld [vmem:[#allocation5 + $0x2a0] sm:$0xff]
    %v287 = vld [vmem:[#allocation5 + $0x2a8] sm:$0xff]
    %v288 = vld [vmem:[#allocation5 + $0x2b0] sm:$0xff]
    %v289 = vld [vmem:[#allocation5 + $0x2b8] sm:$0xff]
    %v290 = vld [vmem:[#allocation5 + $0x2c0] sm:$0xff]
    %v291 = vld [vmem:[#allocation5 + $0x2c8] sm:$0xff]
    %v292 = vld [vmem:[#allocation5 + $0x2d0] sm:$0xff]
    %v293 = vld [vmem:[#allocation5 + $0x2d8] sm:$0xff]
    %v294 = vld [vmem:[#allocation5 + $0x2e0] sm:$0xff]
    %v295 = vld [vmem:[#allocation5 + $0x2e8] sm:$0xff]
    %v296 = vld [vmem:[#allocation5 + $0x2f0] sm:$0xff]
    %v297 = vld [vmem:[#allocation5 + $0x2f8] sm:$0xff]
    %v298 = vld [vmem:[#allocation5 + $0x300] sm:$0xff]
    %v299 = vld [vmem:[#allocation5 + $0x308] sm:$0xff]
    %v300 = vld [vmem:[#allocation5 + $0x310] sm:$0xff]
    %v301 = vld [vmem:[#allocation5 + $0x318] sm:$0xff]
    %v302 = vld [vmem:[#allocation5 + $0x320] sm:$0xff]
    %v303 = vld [vmem:[#allocation5 + $0x328] sm:$0xff]
    %v304 = vld [vmem:[#allocation5 + $0x330] sm:$0xff]
    %v305 = vld [vmem:[#allocation5 + $0x338] sm:$0xff]
    %v306 = vld [vmem:[#allocation5 + $0x340] sm:$0xff]
    %v307 = vld [vmem:[#allocation5 + $0x348] sm:$0xff]
    %v308 = vld [vmem:[#allocation5 + $0x350] sm:$0xff]
    %v309 = vld [vmem:[#allocation5 + $0x358] sm:$0xff]
    %v310 = vld [vmem:[#allocation5 + $0x360] sm:$0xff]
    %v311 = vld [vmem:[#allocation5 + $0x368] sm:$0xff]
    %v312 = vld [vmem:[#allocation5 + $0x370] sm:$0xff]
    %v313 = vld [vmem:[#allocation5 + $0x378] sm:$0xff]
    %v314 = vld [vmem:[#allocation5 + $0x380] sm:$0xff]
    %v315 = vld [vmem:[#allocation5 + $0x388] sm:$0xff]
    %v316 = vld [vmem:[#allocation5 + $0x390] sm:$0xff]
    %v317 = vld [vmem:[#allocation5 + $0x398] sm:$0xff]
    %v318 = vld [vmem:[#allocation5 + $0x3a0] sm:$0xff]
    %v319 = vld [vmem:[#allocation5 + $0x3a8] sm:$0xff]
    %v320 = vld [vmem:[#allocation5 + $0x3b0] sm:$0xff]
    %v321 = vld [vmem:[#allocation5 + $0x3b8] sm:$0xff]
    %v322 = vld [vmem:[#allocation5 + $0x3c0] sm:$0xff]
    %v323 = vld [vmem:[#allocation5 + $0x3c8] sm:$0xff]
    %v324 = vld [vmem:[#allocation5 + $0x3d0] sm:$0xff]
    %v325 = vld [vmem:[#allocation5 + $0x3d8] sm:$0xff]
    %v326 = vld [vmem:[#allocation5 + $0x3e0] sm:$0xff]
    %v327 = vld [vmem:[#allocation5 + $0x3e8] sm:$0xff]
    %v328 = vld [vmem:[#allocation5 + $0x3f0] sm:$0xff]
    %v329 = vld [vmem:[#allocation5 + $0x3f8] sm:$0xff]
    %v330 = vld [vmem:[#allocation5 + $0x400] sm:$0xff]
    %v331 = vld [vmem:[#allocation5 + $0x408] sm:$0xff]
    %v332 = vld [vmem:[#allocation5 + $0x410] sm:$0xff]
    %v333 = vld [vmem:[#allocation5 + $0x418] sm:$0xff]
    %v334 = vld [vmem:[#allocation5 + $0x420] sm:$0xff]
    %v335 = vld [vmem:[#allocation5 + $0x428] sm:$0xff]
    %v336 = vld [vmem:[#allocation5 + $0x430] sm:$0xff]
    %v337 = vld [vmem:[#allocation5 + $0x438] sm:$0xff]
    %v338 = vld [vmem:[#allocation5 + $0x440] sm:$0xff]
    %v339 = vld [vmem:[#allocation5 + $0x448] sm:$0xff]
    %v340 = vld [vmem:[#allocation5 + $0x450] sm:$0xff]
    %v341 = vld [vmem:[#allocation5 + $0x458] sm:$0xff]
    %v342 = vld [vmem:[#allocation5 + $0x460] sm:$0xff]
    %v343 = vld [vmem:[#allocation5 + $0x468] sm:$0xff]
    %v344 = vld [vmem:[#allocation5 + $0x470] sm:$0xff]
    %v345 = vld [vmem:[#allocation5 + $0x478] sm:$0xff]
    %v346 = vld [vmem:[#allocation5 + $0x480] sm:$0xff]
    %v347 = vld [vmem:[#allocation5 + $0x488] sm:$0xff]
    %v348 = vld [vmem:[#allocation5 + $0x490] sm:$0xff]
    %v349 = vld [vmem:[#allocation5 + $0x498] sm:$0xff]
    %v350 = vld [vmem:[#allocation5 + $0x4a0] sm:$0xff]
    %v351 = vld [vmem:[#allocation5 + $0x4a8] sm:$0xff]
    %v352 = vld [vmem:[#allocation5 + $0x4b0] sm:$0xff]
    %v353 = vld [vmem:[#allocation5 + $0x4b8] sm:$0xff]
    %v354 = vld [vmem:[#allocation5 + $0x4c0] sm:$0xff]
    %v355 = vld [vmem:[#allocation5 + $0x4c8] sm:$0xff]
    %v356 = vld [vmem:[#allocation5 + $0x4d0] sm:$0xff]
    %v357 = vld [vmem:[#allocation5 + $0x4d8] sm:$0xff]
    %v358 = vld [vmem:[#allocation5 + $0x4e0] sm:$0xff]
    %v359 = vld [vmem:[#allocation5 + $0x4e8] sm:$0xff]
    %v360 = vld [vmem:[#allocation5 + $0x4f0] sm:$0xff]
    %v361 = vld [vmem:[#allocation5 + $0x4f8] sm:$0xff]
    %v362 = vld [vmem:[#allocation5 + $0x500] sm:$0xff]
    %v363 = vld [vmem:[#allocation5 + $0x508] sm:$0xff]
    %v364 = vld [vmem:[#allocation5 + $0x510] sm:$0xff]
    %v365 = vld [vmem:[#allocation5 + $0x518] sm:$0xff]
    %v366 = vld [vmem:[#allocation5 + $0x520] sm:$0xff]
    %v367 = vld [vmem:[#allocation5 + $0x528] sm:$0xff]
    %v368 = vld [vmem:[#allocation5 + $0x530] sm:$0xff]
    %v369 = vld [vmem:[#allocation5 + $0x538] sm:$0xff]
    %v370 = vld [vmem:[#allocation5 + $0x540] sm:$0xff]
    %v371 = vld [vmem:[#allocation5 + $0x548] sm:$0xff]
    %v372 = vld [vmem:[#allocation5 + $0x550] sm:$0xff]
    %v373 = vld [vmem:[#allocation5 + $0x558] sm:$0xff]
    %v374 = vld [vmem:[#allocation5 + $0x560] sm:$0xff]
    %v375 = vld [vmem:[#allocation5 + $0x568] sm:$0xff]
    %v376 = vld [vmem:[#allocation5 + $0x570] sm:$0xff]
    %v377 = vld [vmem:[#allocation5 + $0x578] sm:$0xff]
    %v378 = vld [vmem:[#allocation5 + $0x580] sm:$0xff]
    %v379 = vld [vmem:[#allocation5 + $0x588] sm:$0xff]
    %v380 = vld [vmem:[#allocation5 + $0x590] sm:$0xff]
    %v381 = vld [vmem:[#allocation5 + $0x598] sm:$0xff]
    %v382 = vld [vmem:[#allocation5 + $0x5a0] sm:$0xff]
    %v383 = vld [vmem:[#allocation5 + $0x5a8] sm:$0xff]
    %v384 = vld [vmem:[#allocation5 + $0x5b0] sm:$0xff]
    %v385 = vld [vmem:[#allocation5 + $0x5b8] sm:$0xff]
    %v386 = vld [vmem:[#allocation5 + $0x5c0] sm:$0xff]
    %v387 = vld [vmem:[#allocation5 + $0x5c8] sm:$0xff]
    %v388 = vld [vmem:[#allocation5 + $0x5d0] sm:$0xff]
    %v389 = vld [vmem:[#allocation5 + $0x5d8] sm:$0xff]
    %v390 = vld [vmem:[#allocation5 + $0x5e0] sm:$0xff]
    %v391 = vld [vmem:[#allocation5 + $0x5e8] sm:$0xff]
    %v392 = vld [vmem:[#allocation5 + $0x5f0] sm:$0xff]
    %v393 = vld [vmem:[#allocation5 + $0x5f8] sm:$0xff]
    %v394 = vld [vmem:[#allocation5 + $0x600] sm:$0xff]
    %v395 = vld [vmem:[#allocation5 + $0x608] sm:$0xff]
    %v396 = vld [vmem:[#allocation5 + $0x610] sm:$0xff]
    %v397 = vld [vmem:[#allocation5 + $0x618] sm:$0xff]
    %v398 = vld [vmem:[#allocation5 + $0x620] sm:$0xff]
    %v399 = vld [vmem:[#allocation5 + $0x628] sm:$0xff]
    %v400 = vld [vmem:[#allocation5 + $0x630] sm:$0xff]
    %v401 = vld [vmem:[#allocation5 + $0x638] sm:$0xff]
    %v402 = vld [vmem:[#allocation5 + $0x640] sm:$0xff]
    %v403 = vld [vmem:[#allocation5 + $0x648] sm:$0xff]
    %v404 = vld [vmem:[#allocation5 + $0x650] sm:$0xff]
    %v405 = vld [vmem:[#allocation5 + $0x658] sm:$0xff]
    %v406 = vld [vmem:[#allocation5 + $0x660] sm:$0xff]
    %v407 = vld [vmem:[#allocation5 + $0x668] sm:$0xff]
    %v408 = vld [vmem:[#allocation5 + $0x670] sm:$0xff]
    %v409 = vld [vmem:[#allocation5 + $0x678] sm:$0xff]
    %v410 = vld [vmem:[#allocation5 + $0x680] sm:$0xff]
    %v411 = vld [vmem:[#allocation5 + $0x688] sm:$0xff]
    %v412 = vld [vmem:[#allocation5 + $0x690] sm:$0xff]
    %v413 = vld [vmem:[#allocation5 + $0x698] sm:$0xff]
    %v414 = vld [vmem:[#allocation5 + $0x6a0] sm:$0xff]
    %v415 = vld [vmem:[#allocation5 + $0x6a8] sm:$0xff]
    %v416 = vld [vmem:[#allocation5 + $0x6b0] sm:$0xff]
    %v417 = vld [vmem:[#allocation5 + $0x6b8] sm:$0xff]
    %v418 = vld [vmem:[#allocation5 + $0x6c0] sm:$0xff]
    %v419 = vld [vmem:[#allocation5 + $0x6c8] sm:$0xff]
    %v420 = vld [vmem:[#allocation5 + $0x6d0] sm:$0xff]
    %v421 = vld [vmem:[#allocation5 + $0x6d8] sm:$0xff]
    %v422 = vld [vmem:[#allocation5 + $0x6e0] sm:$0xff]
    %v423 = vld [vmem:[#allocation5 + $0x6e8] sm:$0xff]
    %v424 = vld [vmem:[#allocation5 + $0x6f0] sm:$0xff]
    %v425 = vld [vmem:[#allocation5 + $0x6f8] sm:$0xff]
    %v426 = vld [vmem:[#allocation5 + $0x700] sm:$0xff]
    %v427 = vld [vmem:[#allocation5 + $0x708] sm:$0xff]
    %v428 = vld [vmem:[#allocation5 + $0x710] sm:$0xff]
    %v429 = vld [vmem:[#allocation5 + $0x718] sm:$0xff]
    %v430 = vld [vmem:[#allocation5 + $0x720] sm:$0xff]
    %v431 = vld [vmem:[#allocation5 + $0x728] sm:$0xff]
    %v432 = vld [vmem:[#allocation5 + $0x730] sm:$0xff]
    %v433 = vld [vmem:[#allocation5 + $0x738] sm:$0xff]
    %v434 = vld [vmem:[#allocation5 + $0x740] sm:$0xff]
    %v435 = vld [vmem:[#allocation5 + $0x748] sm:$0xff]
    %v436 = vld [vmem:[#allocation5 + $0x750] sm:$0xff]
    %v437 = vld [vmem:[#allocation5 + $0x758] sm:$0xff]
    %v438 = vld [vmem:[#allocation5 + $0x760] sm:$0xff]
    %v439 = vld [vmem:[#allocation5 + $0x768] sm:$0xff]
    %v440 = vld [vmem:[#allocation5 + $0x770] sm:$0xff]
    %v441 = vld [vmem:[#allocation5 + $0x778] sm:$0xff]
    %v442 = vld [vmem:[#allocation5 + $0x780] sm:$0xff]
    %v443 = vld [vmem:[#allocation5 + $0x788] sm:$0xff]
    %v444 = vld [vmem:[#allocation5 + $0x790] sm:$0xff]
    %v445 = vld [vmem:[#allocation5 + $0x798] sm:$0xff]
    %v446 = vld [vmem:[#allocation5 + $0x7a0] sm:$0xff]
    %v447 = vld [vmem:[#allocation5 + $0x7a8] sm:$0xff]
    %v448 = vld [vmem:[#allocation5 + $0x7b0] sm:$0xff]
    %v449 = vld [vmem:[#allocation5 + $0x7b8] sm:$0xff]
    %v450 = vld [vmem:[#allocation5 + $0x7c0] sm:$0xff]
    %v451 = vld [vmem:[#allocation5 + $0x7c8] sm:$0xff]
    %v452 = vld [vmem:[#allocation5 + $0x7d0] sm:$0xff]
    %v453 = vld [vmem:[#allocation5 + $0x7d8] sm:$0xff]
    %v454 = vld [vmem:[#allocation5 + $0x7e0] sm:$0xff]
    %v455 = vld [vmem:[#allocation5 + $0x7e8] sm:$0xff]
    %v456 = vld [vmem:[#allocation5 + $0x7f0] sm:$0xff]
    %v457 = vld [vmem:[#allocation5 + $0x7f8] sm:$0xff]
    %v458 = vld [vmem:[#allocation5 + $0x800] sm:$0xff]
    %v459 = vld [vmem:[#allocation5 + $0x808] sm:$0xff]
    %v460 = vld [vmem:[#allocation5 + $0x810] sm:$0xff]
    %v461 = vld [vmem:[#allocation5 + $0x818] sm:$0xff]
    %v462 = vld [vmem:[#allocation5 + $0x820] sm:$0xff]
    %v463 = vld [vmem:[#allocation5 + $0x828] sm:$0xff]
    %v464 = vld [vmem:[#allocation5 + $0x830] sm:$0xff]
    %v465 = vld [vmem:[#allocation5 + $0x838] sm:$0xff]
    %v466 = vld [vmem:[#allocation5 + $0x840] sm:$0xff]
    %v467 = vld [vmem:[#allocation5 + $0x848] sm:$0xff]
    %v468 = vld [vmem:[#allocation5 + $0x850] sm:$0xff]
    %v469 = vld [vmem:[#allocation5 + $0x858] sm:$0xff]
    %v470 = vld [vmem:[#allocation5 + $0x860] sm:$0xff]
    %v471 = vld [vmem:[#allocation5 + $0x868] sm:$0xff]
    %v472 = vld [vmem:[#allocation5 + $0x870] sm:$0xff]
    %v473 = vld [vmem:[#allocation5 + $0x878] sm:$0xff]
    %v474 = vld [vmem:[#allocation5 + $0x880] sm:$0xff]
    %v475 = vld [vmem:[#allocation5 + $0x888] sm:$0xff]
    %v476 = vld [vmem:[#allocation5 + $0x890] sm:$0xff]
    %v477 = vld [vmem:[#allocation5 + $0x898] sm:$0xff]
    %v478 = vld [vmem:[#allocation5 + $0x8a0] sm:$0xff]
    %v479 = vld [vmem:[#allocation5 + $0x8a8] sm:$0xff]
    %v480 = vld [vmem:[#allocation5 + $0x8b0] sm:$0xff]
    %v481 = vld [vmem:[#allocation5 + $0x8b8] sm:$0xff]
    %v482 = vld [vmem:[#allocation5 + $0x8c0] sm:$0xff]
    %v483 = vld [vmem:[#allocation5 + $0x8c8] sm:$0xff]
    %v484 = vld [vmem:[#allocation5 + $0x8d0] sm:$0xff]
    %v485 = vld [vmem:[#allocation5 + $0x8d8] sm:$0xff]
    %v486 = vld [vmem:[#allocation5 + $0x8e0] sm:$0xff]
    %v487 = vld [vmem:[#allocation5 + $0x8e8] sm:$0xff]
    %v488 = vld [vmem:[#allocation5 + $0x8f0] sm:$0xff]
    %v489 = vld [vmem:[#allocation5 + $0x8f8] sm:$0xff]
    %v490 = vld [vmem:[#allocation5 + $0x900] sm:$0xff]
    %v491 = vld [vmem:[#allocation5 + $0x908] sm:$0xff]
    %v492 = vld [vmem:[#allocation5 + $0x910] sm:$0xff]
    %v493 = vld [vmem:[#allocation5 + $0x918] sm:$0xff]
    %v494 = vld [vmem:[#allocation5 + $0x920] sm:$0xff]
    %v495 = vld [vmem:[#allocation5 + $0x928] sm:$0xff]
    %v496 = vld [vmem:[#allocation5 + $0x930] sm:$0xff]
    %v497 = vld [vmem:[#allocation5 + $0x938] sm:$0xff]
    %v498 = vld [vmem:[#allocation5 + $0x940] sm:$0xff]
    %v499 = vld [vmem:[#allocation5 + $0x948] sm:$0xff]
    %v500 = vld [vmem:[#allocation5 + $0x950] sm:$0xff]
    %v501 = vld [vmem:[#allocation5 + $0x958] sm:$0xff]
    %v502 = vld [vmem:[#allocation5 + $0x960] sm:$0xff]
    %v503 = vld [vmem:[#allocation5 + $0x968] sm:$0xff]
    %v504 = vld [vmem:[#allocation5 + $0x970] sm:$0xff]
    %v505 = vld [vmem:[#allocation5 + $0x978] sm:$0xff]
    %v506 = vld [vmem:[#allocation5 + $0x980] sm:$0xff]
    %v507 = vld [vmem:[#allocation5 + $0x988] sm:$0xff]
    %v508 = vld [vmem:[#allocation5 + $0x990] sm:$0xff]
    %v509 = vld [vmem:[#allocation5 + $0x998] sm:$0xff]
    %v510 = vld [vmem:[#allocation5 + $0x9a0] sm:$0xff]
    %v511 = vld [vmem:[#allocation5 + $0x9a8] sm:$0xff]
    %v512 = vld [vmem:[#allocation5 + $0x9b0] sm:$0xff]
    %v513 = vld [vmem:[#allocation5 + $0x9b8] sm:$0xff]
    %v514 = vld [vmem:[#allocation5 + $0x9c0] sm:$0xff]
    %v515 = vld [vmem:[#allocation5 + $0x9c8] sm:$0xff]
    %v516 = vld [vmem:[#allocation5 + $0x9d0] sm:$0xff]
    %v517 = vld [vmem:[#allocation5 + $0x9d8] sm:$0xff]
    %v518 = vld [vmem:[#allocation5 + $0x9e0] sm:$0xff]
    %v519 = vld [vmem:[#allocation5 + $0x9e8] sm:$0xff]
    %v520 = vld [vmem:[#allocation5 + $0x9f0] sm:$0xff]
    %v521 = vld [vmem:[#allocation5 + $0x9f8] sm:$0xff]
    %v522 = vld [vmem:[#allocation5 + $0xa00] sm:$0xff]
    %v523 = vld [vmem:[#allocation5 + $0xa08] sm:$0xff]
    %v524 = vld [vmem:[#allocation5 + $0xa10] sm:$0xff]
    %v525 = vld [vmem:[#allocation5 + $0xa18] sm:$0xff]
    %v526 = vld [vmem:[#allocation5 + $0xa20] sm:$0xff]
    %v527 = vld [vmem:[#allocation5 + $0xa28] sm:$0xff]
    %v528 = vld [vmem:[#allocation5 + $0xa30] sm:$0xff]
    %v529 = vld [vmem:[#allocation5 + $0xa38] sm:$0xff]
    %v530 = vld [vmem:[#allocation5 + $0xa40] sm:$0xff]
    %v531 = vld [vmem:[#allocation5 + $0xa48] sm:$0xff]
    %v532 = vld [vmem:[#allocation5 + $0xa50] sm:$0xff]
    %v533 = vld [vmem:[#allocation5 + $0xa58] sm:$0xff]
    %v534 = vld [vmem:[#allocation5 + $0xa60] sm:$0xff]
    %v535 = vld [vmem:[#allocation5 + $0xa68] sm:$0xff]
    %v536 = vld [vmem:[#allocation5 + $0xa70] sm:$0xff]
    %v537 = vld [vmem:[#allocation5 + $0xa78] sm:$0xff]
    %v538 = vld [vmem:[#allocation5 + $0xa80] sm:$0xff]
    %v539 = vld [vmem:[#allocation5 + $0xa88] sm:$0xff]
    %v540 = vld [vmem:[#allocation5 + $0xa90] sm:$0xff]
    %v541 = vld [vmem:[#allocation5 + $0xa98] sm:$0xff]
    %v542 = vld [vmem:[#allocation5 + $0xaa0] sm:$0xff]
    %v543 = vld [vmem:[#allocation5 + $0xaa8] sm:$0xff]
    %v544 = vld [vmem:[#allocation5 + $0xab0] sm:$0xff]
    %v545 = vld [vmem:[#allocation5 + $0xab8] sm:$0xff]
    %v546 = vld [vmem:[#allocation5 + $0xac0] sm:$0xff]
    %v547 = vld [vmem:[#allocation5 + $0xac8] sm:$0xff]
    %v548 = vld [vmem:[#allocation5 + $0xad0] sm:$0xff]
    %v549 = vld [vmem:[#allocation5 + $0xad8] sm:$0xff]
    %v550 = vld [vmem:[#allocation5 + $0xae0] sm:$0xff]
    %v551 = vld [vmem:[#allocation5 + $0xae8] sm:$0xff]
    %v552 = vld [vmem:[#allocation5 + $0xaf0] sm:$0xff]
    %v553 = vld [vmem:[#allocation5 + $0xaf8] sm:$0xff]
    %v554 = vld [vmem:[#allocation5 + $0xb00] sm:$0xff]
    %v555 = vld [vmem:[#allocation5 + $0xb08] sm:$0xff]
    %v556 = vld [vmem:[#allocation5 + $0xb10] sm:$0xff]
    %v557 = vld [vmem:[#allocation5 + $0xb18] sm:$0xff]
    %v558 = vld [vmem:[#allocation5 + $0xb20] sm:$0xff]
    %v559 = vld [vmem:[#allocation5 + $0xb28] sm:$0xff]
    %v560 = vld [vmem:[#allocation5 + $0xb30] sm:$0xff]
    %v561 = vld [vmem:[#allocation5 + $0xb38] sm:$0xff]
    %v562 = vld [vmem:[#allocation5 + $0xb40] sm:$0xff]
    %v563 = vld [vmem:[#allocation5 + $0xb48] sm:$0xff]
    %v564 = vld [vmem:[#allocation5 + $0xb50] sm:$0xff]
    %v565 = vld [vmem:[#allocation5 + $0xb58] sm:$0xff]
    %v566 = vld [vmem:[#allocation5 + $0xb60] sm:$0xff]
    %v567 = vld [vmem:[#allocation5 + $0xb68] sm:$0xff]
    %v568 = vld [vmem:[#allocation5 + $0xb70] sm:$0xff]
    %v569 = vld [vmem:[#allocation5 + $0xb78] sm:$0xff]
    %v570 = vld [vmem:[#allocation5 + $0xb80] sm:$0xff]
    %v571 = vld [vmem:[#allocation5 + $0xb88] sm:$0xff]
    %v572 = vld [vmem:[#allocation5 + $0xb90] sm:$0xff]
    %v573 = vld [vmem:[#allocation5 + $0xb98] sm:$0xff]
    %v574 = vld [vmem:[#allocation5 + $0xba0] sm:$0xff]
    %v575 = vld [vmem:[#allocation5 + $0xba8] sm:$0xff]
    %v576 = vld [vmem:[#allocation5 + $0xbb0] sm:$0xff]
    %v577 = vld [vmem:[#allocation5 + $0xbb8] sm:$0xff]
    %v578 = vld [vmem:[#allocation5 + $0xbc0] sm:$0xff]
    %v579 = vld [vmem:[#allocation5 + $0xbc8] sm:$0xff]
    %v580 = vld [vmem:[#allocation5 + $0xbd0] sm:$0xff]
    %v581 = vld [vmem:[#allocation5 + $0xbd8] sm:$0xff]
    %v582 = vld [vmem:[#allocation5 + $0xbe0] sm:$0xff]
    %v583 = vld [vmem:[#allocation5 + $0xbe8] sm:$0xff]
    %v584 = vld [vmem:[#allocation5 + $0xbf0] sm:$0xff]
    %v585 = vld [vmem:[#allocation5 + $0xbf8] sm:$0xff]
    %v586 = vld [vmem:[#allocation5 + $0xc00] sm:$0xff]
    %v587 = vld [vmem:[#allocation5 + $0xc08] sm:$0xff]
    %v588 = vld [vmem:[#allocation5 + $0xc10] sm:$0xff]
    %v589 = vld [vmem:[#allocation5 + $0xc18] sm:$0xff]
    %v590 = vld [vmem:[#allocation5 + $0xc20] sm:$0xff]
    %v591 = vld [vmem:[#allocation5 + $0xc28] sm:$0xff]
    %v592 = vld [vmem:[#allocation5 + $0xc30] sm:$0xff]
    %v593 = vld [vmem:[#allocation5 + $0xc38] sm:$0xff]
    %v594 = vld [vmem:[#allocation5 + $0xc40] sm:$0xff]
    %v595 = vld [vmem:[#allocation5 + $0xc48] sm:$0xff]
    %v596 = vld [vmem:[#allocation5 + $0xc50] sm:$0xff]
    %v597 = vld [vmem:[#allocation5 + $0xc58] sm:$0xff]
    %v598 = vld [vmem:[#allocation5 + $0xc60] sm:$0xff]
    %v599 = vld [vmem:[#allocation5 + $0xc68] sm:$0xff]
    %v600 = vld [vmem:[#allocation5 + $0xc70] sm:$0xff]
    %v601 = vld [vmem:[#allocation5 + $0xc78] sm:$0xff]
    %v602 = vld [vmem:[#allocation5 + $0xc80] sm:$0xff]
    %v603 = vld [vmem:[#allocation5 + $0xc88] sm:$0xff]
    %v604 = vld [vmem:[#allocation5 + $0xc90] sm:$0xff]
    %v605 = vld [vmem:[#allocation5 + $0xc98] sm:$0xff]
    %v606 = vld [vmem:[#allocation5 + $0xca0] sm:$0xff]
    %v607 = vld [vmem:[#allocation5 + $0xca8] sm:$0xff]
    %v608 = vld [vmem:[#allocation5 + $0xcb0] sm:$0xff]
    %v609 = vld [vmem:[#allocation5 + $0xcb8] sm:$0xff]
    %v610 = vld [vmem:[#allocation5 + $0xcc0] sm:$0xff]
    %v611 = vld [vmem:[#allocation5 + $0xcc8] sm:$0xff]
    %v612 = vld [vmem:[#allocation5 + $0xcd0] sm:$0xff]
    %v613 = vld [vmem:[#allocation5 + $0xcd8] sm:$0xff]
    %v614 = vld [vmem:[#allocation5 + $0xce0] sm:$0xff]
    %v615 = vld [vmem:[#allocation5 + $0xce8] sm:$0xff]
    %v616 = vld [vmem:[#allocation5 + $0xcf0] sm:$0xff]
    %v617 = vld [vmem:[#allocation5 + $0xcf8] sm:$0xff]
    %v618 = vld [vmem:[#allocation5 + $0xd00] sm:$0xff]
    %v619 = vld [vmem:[#allocation5 + $0xd08] sm:$0xff]
    %v620 = vld [vmem:[#allocation5 + $0xd10] sm:$0xff]
    %v621 = vld [vmem:[#allocation5 + $0xd18] sm:$0xff]
    %v622 = vld [vmem:[#allocation5 + $0xd20] sm:$0xff]
    %v623 = vld [vmem:[#allocation5 + $0xd28] sm:$0xff]
    %v624 = vld [vmem:[#allocation5 + $0xd30] sm:$0xff]
    %v625 = vld [vmem:[#allocation5 + $0xd38] sm:$0xff]
    %v626 = vld [vmem:[#allocation5 + $0xd40] sm:$0xff]
    %v627 = vld [vmem:[#allocation5 + $0xd48] sm:$0xff]
    %v628 = vld [vmem:[#allocation5 + $0xd50] sm:$0xff]
    %v629 = vld [vmem:[#allocation5 + $0xd58] sm:$0xff]
    %v630 = vld [vmem:[#allocation5 + $0xd60] sm:$0xff]
    %v631 = vld [vmem:[#allocation5 + $0xd68] sm:$0xff]
    %v632 = vld [vmem:[#allocation5 + $0xd70] sm:$0xff]
    %v633 = vld [vmem:[#allocation5 + $0xd78] sm:$0xff]
    %v634 = vld [vmem:[#allocation5 + $0xd80] sm:$0xff]
    %v635 = vld [vmem:[#allocation5 + $0xd88] sm:$0xff]
    %v636 = vld [vmem:[#allocation5 + $0xd90] sm:$0xff]
    %v637 = vld [vmem:[#allocation5 + $0xd98] sm:$0xff]
    %v638 = vld [vmem:[#allocation5 + $0xda0] sm:$0xff]
    %v639 = vld [vmem:[#allocation5 + $0xda8] sm:$0xff]
    %v640 = vld [vmem:[#allocation5 + $0xdb0] sm:$0xff]
    %v641 = vld [vmem:[#allocation5 + $0xdb8] sm:$0xff]
    %v642 = vld [vmem:[#allocation5 + $0xdc0] sm:$0xff]
    %v643 = vld [vmem:[#allocation5 + $0xdc8] sm:$0xff]
    %v644 = vld [vmem:[#allocation5 + $0xdd0] sm:$0xff]
    %v645 = vld [vmem:[#allocation5 + $0xdd8] sm:$0xff]
    %v646 = vld [vmem:[#allocation5 + $0xde0] sm:$0xff]
    %v647 = vld [vmem:[#allocation5 + $0xde8] sm:$0xff]
    %v648 = vld [vmem:[#allocation5 + $0xdf0] sm:$0xff]
    %v649 = vld [vmem:[#allocation5 + $0xdf8] sm:$0xff]
    %v650 = vld [vmem:[#allocation5 + $0xe00] sm:$0xff]
    %v651 = vld [vmem:[#allocation5 + $0xe08] sm:$0xff]
    %v652 = vld [vmem:[#allocation5 + $0xe10] sm:$0xff]
    %v653 = vld [vmem:[#allocation5 + $0xe18] sm:$0xff]
    %v654 = vld [vmem:[#allocation5 + $0xe20] sm:$0xff]
    %v655 = vld [vmem:[#allocation5 + $0xe28] sm:$0xff]
    %v656 = vld [vmem:[#allocation5 + $0xe30] sm:$0xff]
    %v657 = vld [vmem:[#allocation5 + $0xe38] sm:$0xff]
    %v658 = vld [vmem:[#allocation5 + $0xe40] sm:$0xff]
    %v659 = vld [vmem:[#allocation5 + $0xe48] sm:$0xff]
    %v660 = vld [vmem:[#allocation5 + $0xe50] sm:$0xff]
    %v661 = vld [vmem:[#allocation5 + $0xe58] sm:$0xff]
    %v662 = vld [vmem:[#allocation5 + $0xe60] sm:$0xff]
    %v663 = vld [vmem:[#allocation5 + $0xe68] sm:$0xff]
    %v664 = vld [vmem:[#allocation5 + $0xe70] sm:$0xff]
    %v665 = vld [vmem:[#allocation5 + $0xe78] sm:$0xff]
    %v666 = vld [vmem:[#allocation5 + $0xe80] sm:$0xff]
    %v667 = vld [vmem:[#allocation5 + $0xe88] sm:$0xff]
    %v668 = vld [vmem:[#allocation5 + $0xe90] sm:$0xff]
    %v669 = vld [vmem:[#allocation5 + $0xe98] sm:$0xff]
    %v670 = vld [vmem:[#allocation5 + $0xea0] sm:$0xff]
    %v671 = vld [vmem:[#allocation5 + $0xea8] sm:$0xff]
    %v672 = vld [vmem:[#allocation5 + $0xeb0] sm:$0xff]
    %v673 = vld [vmem:[#allocation5 + $0xeb8] sm:$0xff]
    %v674 = vld [vmem:[#allocation5 + $0xec0] sm:$0xff]
    %v675 = vld [vmem:[#allocation5 + $0xec8] sm:$0xff]
    %v676 = vld [vmem:[#allocation5 + $0xed0] sm:$0xff]
    %v677 = vld [vmem:[#allocation5 + $0xed8] sm:$0xff]
    %v678 = vld [vmem:[#allocation5 + $0xee0] sm:$0xff]
    %v679 = vld [vmem:[#allocation5 + $0xee8] sm:$0xff]
    %v680 = vld [vmem:[#allocation5 + $0xef0] sm:$0xff]
    %v681 = vld [vmem:[#allocation5 + $0xef8] sm:$0xff]
    %v682 = vld [vmem:[#allocation5 + $0xf00] sm:$0xff]
    %v683 = vld [vmem:[#allocation5 + $0xf08] sm:$0xff]
    %v684 = vld [vmem:[#allocation5 + $0xf10] sm:$0xff]
    %v685 = vld [vmem:[#allocation5 + $0xf18] sm:$0xff]
    %v686 = vld [vmem:[#allocation5 + $0xf20] sm:$0xff]
    %v687 = vld [vmem:[#allocation5 + $0xf28] sm:$0xff]
    %v688 = vld [vmem:[#allocation5 + $0xf30] sm:$0xff]
    %v689 = vld [vmem:[#allocation5 + $0xf38] sm:$0xff]
    %v690 = vld [vmem:[#allocation5 + $0xf40] sm:$0xff]
    %v691 = vld [vmem:[#allocation5 + $0xf48] sm:$0xff]
    %v692 = vld [vmem:[#allocation5 + $0xf50] sm:$0xff]
    %v693 = vld [vmem:[#allocation5 + $0xf58] sm:$0xff]
    %v694 = vld [vmem:[#allocation5 + $0xf60] sm:$0xff]
    %v695 = vld [vmem:[#allocation5 + $0xf68] sm:$0xff]
    %v696 = vld [vmem:[#allocation5 + $0xf70] sm:$0xff]
    %v697 = vld [vmem:[#allocation5 + $0xf78] sm:$0xff]
    %v698 = vld [vmem:[#allocation5 + $0xf80] sm:$0xff]
    %v699 = vld [vmem:[#allocation5 + $0xf88] sm:$0xff]
    %v700 = vld [vmem:[#allocation5 + $0xf90] sm:$0xff]
    %v701 = vld [vmem:[#allocation5 + $0xf98] sm:$0xff]
    %v702 = vld [vmem:[#allocation5 + $0xfa0] sm:$0xff]
    %v703 = vld [vmem:[#allocation5 + $0xfa8] sm:$0xff]
    %v704 = vld [vmem:[#allocation5 + $0xfb0] sm:$0xff]
    %v705 = vld [vmem:[#allocation5 + $0xfb8] sm:$0xff]
    %v706 = vld [vmem:[#allocation5 + $0xfc0] sm:$0xff]
    %v707 = vld [vmem:[#allocation5 + $0xfc8] sm:$0xff]
    %v708 = vld [vmem:[#allocation5 + $0xfd0] sm:$0xff]
    %v709 = vld [vmem:[#allocation5 + $0xfd8] sm:$0xff]
    %v710 = vld [vmem:[#allocation5 + $0xfe0] sm:$0xff]
    %v711 = vld [vmem:[#allocation5 + $0xfe8] sm:$0xff]
    %v712 = vld [vmem:[#allocation5 + $0xff0] sm:$0xff]
    %v713 = vld [vmem:[#allocation5 + $0xff8] sm:$0xff]
    %v714 = vld [vmem:[#allocation5 + $0x1000] sm:$0xff]
    %v715 = vld [vmem:[#allocation5 + $0x1008] sm:$0xff]
    %v716 = vld [vmem:[#allocation5 + $0x1010] sm:$0xff]
    %v717 = vld [vmem:[#allocation5 + $0x1018] sm:$0xff]
    %v718 = vld [vmem:[#allocation5 + $0x1020] sm:$0xff]
    %v719 = vld [vmem:[#allocation5 + $0x1028] sm:$0xff]
    %v720 = vld [vmem:[#allocation5 + $0x1030] sm:$0xff]
    %v721 = vld [vmem:[#allocation5 + $0x1038] sm:$0xff]
    %v722 = vld [vmem:[#allocation5 + $0x1040] sm:$0xff]
    %v723 = vld [vmem:[#allocation5 + $0x1048] sm:$0xff]
    %v724 = vld [vmem:[#allocation5 + $0x1050] sm:$0xff]
    %v725 = vld [vmem:[#allocation5 + $0x1058] sm:$0xff]
    %v726 = vld [vmem:[#allocation5 + $0x1060] sm:$0xff]
    %v727 = vld [vmem:[#allocation5 + $0x1068] sm:$0xff]
    %v728 = vld [vmem:[#allocation5 + $0x1070] sm:$0xff]
    %v729 = vld [vmem:[#allocation5 + $0x1078] sm:$0xff]
    %v730 = vld [vmem:[#allocation5 + $0x1080] sm:$0xff]
    %v731 = vld [vmem:[#allocation5 + $0x1088] sm:$0xff]
    %v732 = vld [vmem:[#allocation5 + $0x1090] sm:$0xff]
    %v733 = vld [vmem:[#allocation5 + $0x1098] sm:$0xff]
    %v734 = vld [vmem:[#allocation5 + $0x10a0] sm:$0xff]
    %v735 = vld [vmem:[#allocation5 + $0x10a8] sm:$0xff]
    %v736 = vld [vmem:[#allocation5 + $0x10b0] sm:$0xff]
    %v737 = vld [vmem:[#allocation5 + $0x10b8] sm:$0xff]
    %v738 = vld [vmem:[#allocation5 + $0x10c0] sm:$0xff]
    %v739 = vld [vmem:[#allocation5 + $0x10c8] sm:$0xff]
    %v740 = vld [vmem:[#allocation5 + $0x10d0] sm:$0xff]
    %v741 = vld [vmem:[#allocation5 + $0x10d8] sm:$0xff]
    %v742 = vld [vmem:[#allocation5 + $0x10e0] sm:$0xff]
    %v743 = vld [vmem:[#allocation5 + $0x10e8] sm:$0xff]
    %v744 = vld [vmem:[#allocation5 + $0x10f0] sm:$0xff]
    %v745 = vld [vmem:[#allocation5 + $0x10f8] sm:$0xff]
    %v746 = vld [vmem:[#allocation5 + $0x1100] sm:$0xff]
    %v747 = vld [vmem:[#allocation5 + $0x1108] sm:$0xff]
    %v748 = vld [vmem:[#allocation5 + $0x1110] sm:$0xff]
    %v749 = vld [vmem:[#allocation5 + $0x1118] sm:$0xff]
    %v750 = vld [vmem:[#allocation5 + $0x1120] sm:$0xff]
    %v751 = vld [vmem:[#allocation5 + $0x1128] sm:$0xff]
    %v752 = vld [vmem:[#allocation5 + $0x1130] sm:$0xff]
    %v753 = vld [vmem:[#allocation5 + $0x1138] sm:$0xff]
    %v754 = vld [vmem:[#allocation5 + $0x1140] sm:$0xff]
    %v755 = vld [vmem:[#allocation5 + $0x1148] sm:$0xff]
    %v756 = vld [vmem:[#allocation5 + $0x1150] sm:$0xff]
    %v757 = vld [vmem:[#allocation5 + $0x1158] sm:$0xff]
    %v758 = vld [vmem:[#allocation5 + $0x1160] sm:$0xff]
    %v759 = vld [vmem:[#allocation5 + $0x1168] sm:$0xff]
    %v760 = vld [vmem:[#allocation5 + $0x1170] sm:$0xff]
    %v761 = vld [vmem:[#allocation5 + $0x1178] sm:$0xff]
    %v762 = vld [vmem:[#allocation7] sm:$0xff]
    %v763 = vld [vmem:[#allocation7 + $0x8] sm:$0x3]
    %v766 = vperm.slane %v762, 0
    %v767 = vperm.slane %v762, 1
    %v768 = vperm.slane %v762, 2
    %v769 = vperm.slane %v762, 3
    %v770 = vperm.slane %v762, 4
    %v771 = vperm.slane %v762, 5
    %v772 = vperm.slane %v762, 6
    %v773 = vperm.slane %v762, 7
    %v774 = vperm.slane %v763, 0
    %v775 = vperm.slane %v763, 1
    %v790 = vunpack.c.l.b16 %v198
    %v791 = vunpack.c.h.b16 %v198
    %v792 = vunpack.c.l.b16 %v199
    %v793 = vunpack.c.h.b16 %v199
    %v794 = vunpack.c.l.b16 %v200
    %v795 = vunpack.c.h.b16 %v200
    %v796 = vunpack.c.l.b16 %v201
    %v797 = vpack.c.b16 %v790, %v790
    %v798 = vpack.c.b16 %v791, %v791
    %v799 = vpack.c.b16 %v792, %v792
    %v800 = vpack.c.b16 %v793, %v793
    %v801 = vpack.c.b16 %v794, %v794
    %v802 = vpack.c.b16 %v795, %v795
    %v803 = vpack.c.b16 %v796, %v796
    %v1371 = vunpack.c.l.b16 %v202
    %v1372 = vunpack.c.h.b16 %v202
    %v1373 = vunpack.c.l.b16 %v203
    %v1374 = vunpack.c.h.b16 %v203
    %v1375 = vunpack.c.l.b16 %v204
    %v1376 = vunpack.c.h.b16 %v204
    %v1377 = vunpack.c.l.b16 %v205
    %v1378 = vunpack.c.h.b16 %v205
    %v1379 = vunpack.c.l.b16 %v206
    %v1380 = vunpack.c.h.b16 %v206
    %v1381 = vunpack.c.l.b16 %v207
    %v1382 = vunpack.c.h.b16 %v207
    %v1383 = vunpack.c.l.b16 %v208
    %v1384 = vunpack.c.h.b16 %v208
    %v1385 = vunpack.c.l.b16 %v209
    %v1386 = vunpack.c.h.b16 %v209
    %v1387 = vunpack.c.l.b16 %v210
    %v1388 = vunpack.c.h.b16 %v210
    %v1389 = vunpack.c.l.b16 %v211
    %v1390 = vunpack.c.h.b16 %v211
    %v1391 = vunpack.c.l.b16 %v212
    %v1392 = vunpack.c.h.b16 %v212
    %v1393 = vunpack.c.l.b16 %v213
    %v1394 = vunpack.c.h.b16 %v213
    %v1395 = vunpack.c.l.b16 %v214
    %v1396 = vunpack.c.h.b16 %v214
    %v1397 = vunpack.c.l.b16 %v215
    %v1398 = vunpack.c.h.b16 %v215
    %v1399 = vunpack.c.l.b16 %v216
    %v1400 = vunpack.c.h.b16 %v216
    %v1401 = vunpack.c.l.b16 %v217
    %v1402 = vunpack.c.h.b16 %v217
    %v1403 = vunpack.c.l.b16 %v218
    %v1404 = vunpack.c.h.b16 %v218
    %v1405 = vunpack.c.l.b16 %v219
    %v1406 = vunpack.c.h.b16 %v219
    %v1407 = vunpack.c.l.b16 %v220
    %v1408 = vunpack.c.h.b16 %v220
    %v1409 = vunpack.c.l.b16 %v221
    %v1410 = vunpack.c.h.b16 %v221
    %v1411 = vunpack.c.l.b16 %v222
    %v1412 = vunpack.c.h.b16 %v222
    %v1413 = vunpack.c.l.b16 %v223
    %v1414 = vunpack.c.h.b16 %v223
    %v1415 = vunpack.c.l.b16 %v224
    %v1416 = vunpack.c.h.b16 %v224
    %v1417 = vunpack.c.l.b16 %v225
    %v1418 = vunpack.c.h.b16 %v225
    %v1419 = vunpack.c.l.b16 %v226
    %v1420 = vunpack.c.h.b16 %v226
    %v1421 = vunpack.c.l.b16 %v227
    %v1422 = vunpack.c.h.b16 %v227
    %v1423 = vunpack.c.l.b16 %v228
    %v1424 = vunpack.c.h.b16 %v228
    %v1425 = vunpack.c.l.b16 %v229
    %v1426 = vunpack.c.h.b16 %v229
    %v1427 = vunpack.c.l.b16 %v230
    %v1428 = vunpack.c.h.b16 %v230
    %v1429 = vunpack.c.l.b16 %v231
    %v1430 = vunpack.c.h.b16 %v231
    %v1431 = vunpack.c.l.b16 %v232
    %v1432 = vunpack.c.h.b16 %v232
    %v1433 = vunpack.c.l.b16 %v233
    %v1434 = vunpack.c.h.b16 %v233
    %v1435 = vunpack.c.l.b16 %v234
    %v1436 = vunpack.c.h.b16 %v234
    %v1437 = vunpack.c.l.b16 %v235
    %v1438 = vunpack.c.h.b16 %v235
    %v1439 = vunpack.c.l.b16 %v236
    %v1440 = vunpack.c.h.b16 %v236
    %v1441 = vunpack.c.l.b16 %v237
    %v1442 = vunpack.c.h.b16 %v237
    %v1443 = vunpack.c.l.b16 %v238
    %v1444 = vunpack.c.h.b16 %v238
    %v1445 = vunpack.c.l.b16 %v239
    %v1446 = vunpack.c.h.b16 %v239
    %v1447 = vunpack.c.l.b16 %v240
    %v1448 = vunpack.c.h.b16 %v240
    %v1449 = vunpack.c.l.b16 %v241
    %v1450 = vunpack.c.h.b16 %v241
    %v1451 = vunpack.c.l.b16 %v242
    %v1452 = vunpack.c.h.b16 %v242
    %v1453 = vunpack.c.l.b16 %v243
    %v1454 = vunpack.c.h.b16 %v243
    %v1455 = vunpack.c.l.b16 %v244
    %v1456 = vunpack.c.h.b16 %v244
    %v1457 = vunpack.c.l.b16 %v245
    %v1458 = vunpack.c.h.b16 %v245
    %v1459 = vunpack.c.l.b16 %v246
    %v1460 = vunpack.c.h.b16 %v246
    %v1461 = vunpack.c.l.b16 %v247
    %v1462 = vunpack.c.h.b16 %v247
    %v1463 = vunpack.c.l.b16 %v248
    %v1464 = vunpack.c.h.b16 %v248
    %v1465 = vunpack.c.l.b16 %v249
    %v1466 = vunpack.c.h.b16 %v249
    %v1467 = vunpack.c.l.b16 %v250
    %v1468 = vunpack.c.h.b16 %v250
    %v1469 = vunpack.c.l.b16 %v251
    %v1470 = vunpack.c.h.b16 %v251
    %v1471 = vunpack.c.l.b16 %v252
    %v1472 = vunpack.c.h.b16 %v252
    %v1473 = vunpack.c.l.b16 %v253
    %v1474 = vunpack.c.h.b16 %v253
    %v1475 = vunpack.c.l.b16 %v254
    %v1476 = vunpack.c.h.b16 %v254
    %v1477 = vunpack.c.l.b16 %v255
    %v1478 = vunpack.c.h.b16 %v255
    %v1479 = vunpack.c.l.b16 %v256
    %v1480 = vunpack.c.h.b16 %v256
    %v1481 = vunpack.c.l.b16 %v257
    %v1482 = vunpack.c.h.b16 %v257
    %v1483 = vunpack.c.l.b16 %v258
    %v1484 = vunpack.c.h.b16 %v258
    %v1485 = vunpack.c.l.b16 %v259
    %v1486 = vunpack.c.h.b16 %v259
    %v1487 = vunpack.c.l.b16 %v260
    %v1488 = vunpack.c.h.b16 %v260
    %v1489 = vunpack.c.l.b16 %v261
    %v1490 = vunpack.c.h.b16 %v261
    %v1491 = vunpack.c.l.b16 %v262
    %v1492 = vunpack.c.h.b16 %v262
    %v1493 = vunpack.c.l.b16 %v263
    %v1494 = vunpack.c.h.b16 %v263
    %v1495 = vunpack.c.l.b16 %v264
    %v1496 = vunpack.c.h.b16 %v264
    %v1497 = vunpack.c.l.b16 %v265
    %v1498 = vunpack.c.h.b16 %v265
    %v1499 = vunpack.c.l.b16 %v266
    %v1500 = vunpack.c.h.b16 %v266
    %v1501 = vunpack.c.l.b16 %v267
    %v1502 = vunpack.c.h.b16 %v267
    %v1503 = vunpack.c.l.b16 %v268
    %v1504 = vunpack.c.h.b16 %v268
    %v1505 = vunpack.c.l.b16 %v269
    %v1506 = vunpack.c.h.b16 %v269
    %v1507 = vunpack.c.l.b16 %v270
    %v1508 = vunpack.c.h.b16 %v270
    %v1509 = vunpack.c.l.b16 %v271
    %v1510 = vunpack.c.h.b16 %v271
    %v1511 = vunpack.c.l.b16 %v272
    %v1512 = vunpack.c.h.b16 %v272
    %v1513 = vunpack.c.l.b16 %v273
    %v1514 = vunpack.c.h.b16 %v273
    %v1515 = vunpack.c.l.b16 %v274
    %v1516 = vunpack.c.h.b16 %v274
    %v1517 = vunpack.c.l.b16 %v275
    %v1518 = vunpack.c.h.b16 %v275
    %v1519 = vunpack.c.l.b16 %v276
    %v1520 = vunpack.c.h.b16 %v276
    %v1521 = vunpack.c.l.b16 %v277
    %v1522 = vunpack.c.h.b16 %v277
    %v1523 = vunpack.c.l.b16 %v278
    %v1524 = vunpack.c.h.b16 %v278
    %v1525 = vunpack.c.l.b16 %v279
    %v1526 = vunpack.c.h.b16 %v279
    %v1527 = vunpack.c.l.b16 %v280
    %v1528 = vunpack.c.h.b16 %v280
    %v1529 = vunpack.c.l.b16 %v281
    %v1530 = vunpack.c.h.b16 %v281
    %v1531 = vunpack.c.l.b16 %v282
    %v1532 = vunpack.c.h.b16 %v282
    %v1533 = vunpack.c.l.b16 %v283
    %v1534 = vunpack.c.h.b16 %v283
    %v1535 = vunpack.c.l.b16 %v284
    %v1536 = vunpack.c.h.b16 %v284
    %v1537 = vunpack.c.l.b16 %v285
    %v1538 = vunpack.c.h.b16 %v285
    %v1539 = vunpack.c.l.b16 %v286
    %v1540 = vunpack.c.h.b16 %v286
    %v1541 = vunpack.c.l.b16 %v287
    %v1542 = vunpack.c.h.b16 %v287
    %v1543 = vunpack.c.l.b16 %v288
    %v1544 = vunpack.c.h.b16 %v288
    %v1545 = vunpack.c.l.b16 %v289
    %v1546 = vunpack.c.h.b16 %v289
    %v1547 = vunpack.c.l.b16 %v290
    %v1548 = vunpack.c.h.b16 %v290
    %v1549 = vunpack.c.l.b16 %v291
    %v1550 = vunpack.c.h.b16 %v291
    %v1551 = vunpack.c.l.b16 %v292
    %v1552 = vunpack.c.h.b16 %v292
    %v1553 = vunpack.c.l.b16 %v293
    %v1554 = vunpack.c.h.b16 %v293
    %v1555 = vunpack.c.l.b16 %v294
    %v1556 = vunpack.c.h.b16 %v294
    %v1557 = vunpack.c.l.b16 %v295
    %v1558 = vunpack.c.h.b16 %v295
    %v1559 = vunpack.c.l.b16 %v296
    %v1560 = vunpack.c.h.b16 %v296
    %v1561 = vunpack.c.l.b16 %v297
    %v1562 = vunpack.c.h.b16 %v297
    %v1563 = vunpack.c.l.b16 %v298
    %v1564 = vunpack.c.h.b16 %v298
    %v1565 = vunpack.c.l.b16 %v299
    %v1566 = vunpack.c.h.b16 %v299
    %v1567 = vunpack.c.l.b16 %v300
    %v1568 = vunpack.c.h.b16 %v300
    %v1569 = vunpack.c.l.b16 %v301
    %v1570 = vunpack.c.h.b16 %v301
    %v1571 = vunpack.c.l.b16 %v302
    %v1572 = vunpack.c.h.b16 %v302
    %v1573 = vunpack.c.l.b16 %v303
    %v1574 = vunpack.c.h.b16 %v303
    %v1575 = vunpack.c.l.b16 %v304
    %v1576 = vunpack.c.h.b16 %v304
    %v1577 = vunpack.c.l.b16 %v305
    %v1578 = vunpack.c.h.b16 %v305
    %v1579 = vunpack.c.l.b16 %v306
    %v1580 = vunpack.c.h.b16 %v306
    %v1581 = vunpack.c.l.b16 %v307
    %v1582 = vunpack.c.h.b16 %v307
    %v1583 = vunpack.c.l.b16 %v308
    %v1584 = vunpack.c.h.b16 %v308
    %v1585 = vunpack.c.l.b16 %v309
    %v1586 = vunpack.c.h.b16 %v309
    %v1587 = vunpack.c.l.b16 %v310
    %v1588 = vunpack.c.h.b16 %v310
    %v1589 = vunpack.c.l.b16 %v311
    %v1590 = vunpack.c.h.b16 %v311
    %v1591 = vunpack.c.l.b16 %v312
    %v1592 = vunpack.c.h.b16 %v312
    %v1593 = vunpack.c.l.b16 %v313
    %v1594 = vunpack.c.h.b16 %v313
    %v1595 = vunpack.c.l.b16 %v314
    %v1596 = vunpack.c.h.b16 %v314
    %v1597 = vunpack.c.l.b16 %v315
    %v1598 = vunpack.c.h.b16 %v315
    %v1599 = vunpack.c.l.b16 %v316
    %v1600 = vunpack.c.h.b16 %v316
    %v1601 = vunpack.c.l.b16 %v317
    %v1602 = vunpack.c.h.b16 %v317
    %v1603 = vunpack.c.l.b16 %v318
    %v1604 = vunpack.c.h.b16 %v318
    %v1605 = vunpack.c.l.b16 %v319
    %v1606 = vunpack.c.h.b16 %v319
    %v1607 = vunpack.c.l.b16 %v320
    %v1608 = vunpack.c.h.b16 %v320
    %v1609 = vunpack.c.l.b16 %v321
    %v1610 = vunpack.c.h.b16 %v321
    %v1611 = vunpack.c.l.b16 %v322
    %v1612 = vunpack.c.h.b16 %v322
    %v1613 = vunpack.c.l.b16 %v323
    %v1614 = vunpack.c.h.b16 %v323
    %v1615 = vunpack.c.l.b16 %v324
    %v1616 = vunpack.c.h.b16 %v324
    %v1617 = vunpack.c.l.b16 %v325
    %v1618 = vunpack.c.h.b16 %v325
    %v1619 = vunpack.c.l.b16 %v326
    %v1620 = vunpack.c.h.b16 %v326
    %v1621 = vunpack.c.l.b16 %v327
    %v1622 = vunpack.c.h.b16 %v327
    %v1623 = vunpack.c.l.b16 %v328
    %v1624 = vunpack.c.h.b16 %v328
    %v1625 = vunpack.c.l.b16 %v329
    %v1626 = vunpack.c.h.b16 %v329
    %v1627 = vunpack.c.l.b16 %v330
    %v1628 = vunpack.c.h.b16 %v330
    %v1629 = vunpack.c.l.b16 %v331
    %v1630 = vunpack.c.h.b16 %v331
    %v1631 = vunpack.c.l.b16 %v332
    %v1632 = vunpack.c.h.b16 %v332
    %v1633 = vunpack.c.l.b16 %v333
    %v1634 = vunpack.c.h.b16 %v333
    %v1635 = vunpack.c.l.b16 %v334
    %v1636 = vunpack.c.h.b16 %v334
    %v1637 = vunpack.c.l.b16 %v335
    %v1638 = vunpack.c.h.b16 %v335
    %v1639 = vunpack.c.l.b16 %v336
    %v1640 = vunpack.c.h.b16 %v336
    %v1641 = vunpack.c.l.b16 %v337
    %v1642 = vunpack.c.h.b16 %v337
    %v1643 = vunpack.c.l.b16 %v338
    %v1644 = vunpack.c.h.b16 %v338
    %v1645 = vunpack.c.l.b16 %v339
    %v1646 = vunpack.c.h.b16 %v339
    %v1647 = vunpack.c.l.b16 %v340
    %v1648 = vunpack.c.h.b16 %v340
    %v1649 = vunpack.c.l.b16 %v341
    %v1650 = vunpack.c.h.b16 %v341
    %v1651 = vunpack.c.l.b16 %v342
    %v1652 = vunpack.c.h.b16 %v342
    %v1653 = vunpack.c.l.b16 %v343
    %v1654 = vunpack.c.h.b16 %v343
    %v1655 = vunpack.c.l.b16 %v344
    %v1656 = vunpack.c.h.b16 %v344
    %v1657 = vunpack.c.l.b16 %v345
    %v1658 = vunpack.c.h.b16 %v345
    %v1659 = vunpack.c.l.b16 %v346
    %v1660 = vunpack.c.h.b16 %v346
    %v1661 = vunpack.c.l.b16 %v347
    %v1662 = vunpack.c.h.b16 %v347
    %v1663 = vunpack.c.l.b16 %v348
    %v1664 = vunpack.c.h.b16 %v348
    %v1665 = vunpack.c.l.b16 %v349
    %v1666 = vunpack.c.h.b16 %v349
    %v1667 = vunpack.c.l.b16 %v350
    %v1668 = vunpack.c.h.b16 %v350
    %v1669 = vunpack.c.l.b16 %v351
    %v1670 = vunpack.c.h.b16 %v351
    %v1671 = vunpack.c.l.b16 %v352
    %v1672 = vunpack.c.h.b16 %v352
    %v1673 = vunpack.c.l.b16 %v353
    %v1674 = vunpack.c.h.b16 %v353
    %v1675 = vunpack.c.l.b16 %v354
    %v1676 = vunpack.c.h.b16 %v354
    %v1677 = vunpack.c.l.b16 %v355
    %v1678 = vunpack.c.h.b16 %v355
    %v1679 = vunpack.c.l.b16 %v356
    %v1680 = vunpack.c.h.b16 %v356
    %v1681 = vunpack.c.l.b16 %v357
    %v1682 = vunpack.c.h.b16 %v357
    %v1683 = vunpack.c.l.b16 %v358
    %v1684 = vunpack.c.h.b16 %v358
    %v1685 = vunpack.c.l.b16 %v359
    %v1686 = vunpack.c.h.b16 %v359
    %v1687 = vunpack.c.l.b16 %v360
    %v1688 = vunpack.c.h.b16 %v360
    %v1689 = vunpack.c.l.b16 %v361
    %v1690 = vunpack.c.h.b16 %v361
    %v1691 = vunpack.c.l.b16 %v362
    %v1692 = vunpack.c.h.b16 %v362
    %v1693 = vunpack.c.l.b16 %v363
    %v1694 = vunpack.c.h.b16 %v363
    %v1695 = vunpack.c.l.b16 %v364
    %v1696 = vunpack.c.h.b16 %v364
    %v1697 = vunpack.c.l.b16 %v365
    %v1698 = vunpack.c.h.b16 %v365
    %v1699 = vunpack.c.l.b16 %v366
    %v1700 = vunpack.c.h.b16 %v366
    %v1701 = vunpack.c.l.b16 %v367
    %v1702 = vunpack.c.h.b16 %v367
    %v1703 = vunpack.c.l.b16 %v368
    %v1704 = vunpack.c.h.b16 %v368
    %v1705 = vunpack.c.l.b16 %v369
    %v1706 = vunpack.c.h.b16 %v369
    %v1707 = vunpack.c.l.b16 %v370
    %v1708 = vunpack.c.h.b16 %v370
    %v1709 = vunpack.c.l.b16 %v371
    %v1710 = vunpack.c.h.b16 %v371
    %v1711 = vunpack.c.l.b16 %v372
    %v1712 = vunpack.c.h.b16 %v372
    %v1713 = vunpack.c.l.b16 %v373
    %v1714 = vunpack.c.h.b16 %v373
    %v1715 = vunpack.c.l.b16 %v374
    %v1716 = vunpack.c.h.b16 %v374
    %v1717 = vunpack.c.l.b16 %v375
    %v1718 = vunpack.c.h.b16 %v375
    %v1719 = vunpack.c.l.b16 %v376
    %v1720 = vunpack.c.h.b16 %v376
    %v1721 = vunpack.c.l.b16 %v377
    %v1722 = vunpack.c.h.b16 %v377
    %v1723 = vunpack.c.l.b16 %v378
    %v1724 = vunpack.c.h.b16 %v378
    %v1725 = vunpack.c.l.b16 %v379
    %v1726 = vunpack.c.h.b16 %v379
    %v1727 = vunpack.c.l.b16 %v380
    %v1728 = vunpack.c.h.b16 %v380
    %v1729 = vunpack.c.l.b16 %v381
    %v1730 = vunpack.c.h.b16 %v381
    %v1731 = vunpack.c.l.b16 %v382
    %v1732 = vunpack.c.h.b16 %v382
    %v1733 = vunpack.c.l.b16 %v383
    %v1734 = vunpack.c.h.b16 %v383
    %v1735 = vunpack.c.l.b16 %v384
    %v1736 = vunpack.c.h.b16 %v384
    %v1737 = vunpack.c.l.b16 %v385
    %v1738 = vunpack.c.h.b16 %v385
    %v1739 = vunpack.c.l.b16 %v386
    %v1740 = vunpack.c.h.b16 %v386
    %v1741 = vunpack.c.l.b16 %v387
    %v1742 = vunpack.c.h.b16 %v387
    %v1743 = vunpack.c.l.b16 %v388
    %v1744 = vunpack.c.h.b16 %v388
    %v1745 = vunpack.c.l.b16 %v389
    %v1746 = vunpack.c.h.b16 %v389
    %v1747 = vunpack.c.l.b16 %v390
    %v1748 = vunpack.c.h.b16 %v390
    %v1749 = vunpack.c.l.b16 %v391
    %v1750 = vunpack.c.h.b16 %v391
    %v1751 = vunpack.c.l.b16 %v392
    %v1752 = vunpack.c.h.b16 %v392
    %v1753 = vunpack.c.l.b16 %v393
    %v1754 = vunpack.c.h.b16 %v393
    %v1755 = vunpack.c.l.b16 %v394
    %v1756 = vunpack.c.h.b16 %v394
    %v1757 = vunpack.c.l.b16 %v395
    %v1758 = vunpack.c.h.b16 %v395
    %v1759 = vunpack.c.l.b16 %v396
    %v1760 = vunpack.c.h.b16 %v396
    %v1761 = vunpack.c.l.b16 %v397
    %v1762 = vunpack.c.h.b16 %v397
    %v1763 = vunpack.c.l.b16 %v398
    %v1764 = vunpack.c.h.b16 %v398
    %v1765 = vunpack.c.l.b16 %v399
    %v1766 = vunpack.c.h.b16 %v399
    %v1767 = vunpack.c.l.b16 %v400
    %v1768 = vunpack.c.h.b16 %v400
    %v1769 = vunpack.c.l.b16 %v401
    %v1770 = vunpack.c.h.b16 %v401
    %v1771 = vunpack.c.l.b16 %v402
    %v1772 = vunpack.c.h.b16 %v402
    %v1773 = vunpack.c.l.b16 %v403
    %v1774 = vunpack.c.h.b16 %v403
    %v1775 = vunpack.c.l.b16 %v404
    %v1776 = vunpack.c.h.b16 %v404
    %v1777 = vunpack.c.l.b16 %v405
    %v1778 = vunpack.c.h.b16 %v405
    %v1779 = vunpack.c.l.b16 %v406
    %v1780 = vunpack.c.h.b16 %v406
    %v1781 = vunpack.c.l.b16 %v407
    %v1782 = vunpack.c.h.b16 %v407
    %v1783 = vunpack.c.l.b16 %v408
    %v1784 = vunpack.c.h.b16 %v408
    %v1785 = vunpack.c.l.b16 %v409
    %v1786 = vunpack.c.h.b16 %v409
    %v1787 = vunpack.c.l.b16 %v410
    %v1788 = vunpack.c.h.b16 %v410
    %v1789 = vunpack.c.l.b16 %v411
    %v1790 = vunpack.c.h.b16 %v411
    %v1791 = vunpack.c.l.b16 %v412
    %v1792 = vunpack.c.h.b16 %v412
    %v1793 = vunpack.c.l.b16 %v413
    %v1794 = vunpack.c.h.b16 %v413
    %v1795 = vunpack.c.l.b16 %v414
    %v1796 = vunpack.c.h.b16 %v414
    %v1797 = vunpack.c.l.b16 %v415
    %v1798 = vunpack.c.h.b16 %v415
    %v1799 = vunpack.c.l.b16 %v416
    %v1800 = vunpack.c.h.b16 %v416
    %v1801 = vunpack.c.l.b16 %v417
    %v1802 = vunpack.c.h.b16 %v417
    %v1803 = vunpack.c.l.b16 %v418
    %v1804 = vunpack.c.h.b16 %v418
    %v1805 = vunpack.c.l.b16 %v419
    %v1806 = vunpack.c.h.b16 %v419
    %v1807 = vunpack.c.l.b16 %v420
    %v1808 = vunpack.c.h.b16 %v420
    %v1809 = vunpack.c.l.b16 %v421
    %v1810 = vunpack.c.h.b16 %v421
    %v1811 = vunpack.c.l.b16 %v422
    %v1812 = vunpack.c.h.b16 %v422
    %v1813 = vunpack.c.l.b16 %v423
    %v1814 = vunpack.c.h.b16 %v423
    %v1815 = vunpack.c.l.b16 %v424
    %v1816 = vunpack.c.h.b16 %v424
    %v1817 = vunpack.c.l.b16 %v425
    %v1818 = vunpack.c.h.b16 %v425
    %v1819 = vunpack.c.l.b16 %v426
    %v1820 = vunpack.c.h.b16 %v426
    %v1821 = vunpack.c.l.b16 %v427
    %v1822 = vunpack.c.h.b16 %v427
    %v1823 = vunpack.c.l.b16 %v428
    %v1824 = vunpack.c.h.b16 %v428
    %v1825 = vunpack.c.l.b16 %v429
    %v1826 = vunpack.c.h.b16 %v429
    %v1827 = vunpack.c.l.b16 %v430
    %v1828 = vunpack.c.h.b16 %v430
    %v1829 = vunpack.c.l.b16 %v431
    %v1830 = vunpack.c.h.b16 %v431
    %v1831 = vunpack.c.l.b16 %v432
    %v1832 = vunpack.c.h.b16 %v432
    %v1833 = vunpack.c.l.b16 %v433
    %v1834 = vunpack.c.h.b16 %v433
    %v1835 = vunpack.c.l.b16 %v434
    %v1836 = vunpack.c.h.b16 %v434
    %v1837 = vunpack.c.l.b16 %v435
    %v1838 = vunpack.c.h.b16 %v435
    %v1839 = vunpack.c.l.b16 %v436
    %v1840 = vunpack.c.h.b16 %v436
    %v1841 = vunpack.c.l.b16 %v437
    %v1842 = vunpack.c.h.b16 %v437
    %v1843 = vunpack.c.l.b16 %v438
    %v1844 = vunpack.c.h.b16 %v438
    %v1845 = vunpack.c.l.b16 %v439
    %v1846 = vunpack.c.h.b16 %v439
    %v1847 = vunpack.c.l.b16 %v440
    %v1848 = vunpack.c.h.b16 %v440
    %v1849 = vunpack.c.l.b16 %v441
    %v1850 = vunpack.c.h.b16 %v441
    %v1851 = vunpack.c.l.b16 %v442
    %v1852 = vunpack.c.h.b16 %v442
    %v1853 = vunpack.c.l.b16 %v443
    %v1854 = vunpack.c.h.b16 %v443
    %v1855 = vunpack.c.l.b16 %v444
    %v1856 = vunpack.c.h.b16 %v444
    %v1857 = vunpack.c.l.b16 %v445
    %v1858 = vunpack.c.h.b16 %v445
    %v1859 = vunpack.c.l.b16 %v446
    %v1860 = vunpack.c.h.b16 %v446
    %v1861 = vunpack.c.l.b16 %v447
    %v1862 = vunpack.c.h.b16 %v447
    %v1863 = vunpack.c.l.b16 %v448
    %v1864 = vunpack.c.h.b16 %v448
    %v1865 = vunpack.c.l.b16 %v449
    %v1866 = vunpack.c.h.b16 %v449
    %v1867 = vunpack.c.l.b16 %v450
    %v1868 = vunpack.c.h.b16 %v450
    %v1869 = vunpack.c.l.b16 %v451
    %v1870 = vunpack.c.h.b16 %v451
    %v1871 = vunpack.c.l.b16 %v452
    %v1872 = vunpack.c.h.b16 %v452
    %v1873 = vunpack.c.l.b16 %v453
    %v1874 = vunpack.c.h.b16 %v453
    %v1875 = vunpack.c.l.b16 %v454
    %v1876 = vunpack.c.h.b16 %v454
    %v1877 = vunpack.c.l.b16 %v455
    %v1878 = vunpack.c.h.b16 %v455
    %v1879 = vunpack.c.l.b16 %v456
    %v1880 = vunpack.c.h.b16 %v456
    %v1881 = vunpack.c.l.b16 %v457
    %v1882 = vunpack.c.h.b16 %v457
    %v1883 = vunpack.c.l.b16 %v458
    %v1884 = vunpack.c.h.b16 %v458
    %v1885 = vunpack.c.l.b16 %v459
    %v1886 = vunpack.c.h.b16 %v459
    %v1887 = vunpack.c.l.b16 %v460
    %v1888 = vunpack.c.h.b16 %v460
    %v1889 = vunpack.c.l.b16 %v461
    %v1890 = vunpack.c.h.b16 %v461
    %v1891 = vunpack.c.l.b16 %v462
    %v1892 = vunpack.c.h.b16 %v462
    %v1893 = vunpack.c.l.b16 %v463
    %v1894 = vunpack.c.h.b16 %v463
    %v1895 = vunpack.c.l.b16 %v464
    %v1896 = vunpack.c.h.b16 %v464
    %v1897 = vunpack.c.l.b16 %v465
    %v1898 = vunpack.c.h.b16 %v465
    %v1899 = vunpack.c.l.b16 %v466
    %v1900 = vunpack.c.h.b16 %v466
    %v1901 = vunpack.c.l.b16 %v467
    %v1902 = vunpack.c.h.b16 %v467
    %v1903 = vunpack.c.l.b16 %v468
    %v1904 = vunpack.c.h.b16 %v468
    %v1905 = vunpack.c.l.b16 %v469
    %v1906 = vunpack.c.h.b16 %v469
    %v1907 = vunpack.c.l.b16 %v470
    %v1908 = vunpack.c.h.b16 %v470
    %v1909 = vunpack.c.l.b16 %v471
    %v1910 = vunpack.c.h.b16 %v471
    %v1911 = vunpack.c.l.b16 %v472
    %v1912 = vunpack.c.h.b16 %v472
    %v1913 = vunpack.c.l.b16 %v473
    %v1914 = vunpack.c.h.b16 %v473
    %v1915 = vunpack.c.l.b16 %v474
    %v1916 = vunpack.c.h.b16 %v474
    %v1917 = vunpack.c.l.b16 %v475
    %v1918 = vunpack.c.h.b16 %v475
    %v1919 = vunpack.c.l.b16 %v476
    %v1920 = vunpack.c.h.b16 %v476
    %v1921 = vunpack.c.l.b16 %v477
    %v1922 = vunpack.c.h.b16 %v477
    %v1923 = vunpack.c.l.b16 %v478
    %v1924 = vunpack.c.h.b16 %v478
    %v1925 = vunpack.c.l.b16 %v479
    %v1926 = vunpack.c.h.b16 %v479
    %v1927 = vunpack.c.l.b16 %v480
    %v1928 = vunpack.c.h.b16 %v480
    %v1929 = vunpack.c.l.b16 %v481
    %v1930 = vunpack.c.h.b16 %v481
    %v1931 = vunpack.c.l.b16 %v482
    %v1932 = vunpack.c.h.b16 %v482
    %v1933 = vunpack.c.l.b16 %v483
    %v1934 = vunpack.c.h.b16 %v483
    %v1935 = vunpack.c.l.b16 %v484
    %v1936 = vunpack.c.h.b16 %v484
    %v1937 = vunpack.c.l.b16 %v485
    %v1938 = vunpack.c.h.b16 %v485
    %v1939 = vunpack.c.l.b16 %v486
    %v1940 = vunpack.c.h.b16 %v486
    %v1941 = vunpack.c.l.b16 %v487
    %v1942 = vunpack.c.h.b16 %v487
    %v1943 = vunpack.c.l.b16 %v488
    %v1944 = vunpack.c.h.b16 %v488
    %v1945 = vunpack.c.l.b16 %v489
    %v1946 = vunpack.c.h.b16 %v489
    %v1947 = vunpack.c.l.b16 %v490
    %v1948 = vunpack.c.h.b16 %v490
    %v1949 = vunpack.c.l.b16 %v491
    %v1950 = vunpack.c.h.b16 %v491
    %v1951 = vunpack.c.l.b16 %v492
    %v1952 = vunpack.c.h.b16 %v492
    %v1953 = vunpack.c.l.b16 %v493
    %v1954 = vunpack.c.h.b16 %v493
    %v1955 = vunpack.c.l.b16 %v494
    %v1956 = vunpack.c.h.b16 %v494
    %v1957 = vunpack.c.l.b16 %v495
    %v1958 = vunpack.c.h.b16 %v495
    %v1959 = vunpack.c.l.b16 %v496
    %v1960 = vunpack.c.h.b16 %v496
    %v1961 = vunpack.c.l.b16 %v497
    %v1962 = vunpack.c.h.b16 %v497
    %v1963 = vunpack.c.l.b16 %v498
    %v1964 = vunpack.c.h.b16 %v498
    %v1965 = vunpack.c.l.b16 %v499
    %v1966 = vunpack.c.h.b16 %v499
    %v1967 = vunpack.c.l.b16 %v500
    %v1968 = vunpack.c.h.b16 %v500
    %v1969 = vunpack.c.l.b16 %v501
    %v1970 = vunpack.c.h.b16 %v501
    %v1971 = vunpack.c.l.b16 %v502
    %v1972 = vunpack.c.h.b16 %v502
    %v1973 = vunpack.c.l.b16 %v503
    %v1974 = vunpack.c.h.b16 %v503
    %v1975 = vunpack.c.l.b16 %v504
    %v1976 = vunpack.c.h.b16 %v504
    %v1977 = vunpack.c.l.b16 %v505
    %v1978 = vunpack.c.h.b16 %v505
    %v1979 = vunpack.c.l.b16 %v506
    %v1980 = vunpack.c.h.b16 %v506
    %v1981 = vunpack.c.l.b16 %v507
    %v1982 = vunpack.c.h.b16 %v507
    %v1983 = vunpack.c.l.b16 %v508
    %v1984 = vunpack.c.h.b16 %v508
    %v1985 = vunpack.c.l.b16 %v509
    %v1986 = vunpack.c.h.b16 %v509
    %v1987 = vunpack.c.l.b16 %v510
    %v1988 = vunpack.c.h.b16 %v510
    %v1989 = vunpack.c.l.b16 %v511
    %v1990 = vunpack.c.h.b16 %v511
    %v1991 = vunpack.c.l.b16 %v512
    %v1992 = vunpack.c.h.b16 %v512
    %v1993 = vunpack.c.l.b16 %v513
    %v1994 = vunpack.c.h.b16 %v513
    %v1995 = vunpack.c.l.b16 %v514
    %v1996 = vunpack.c.h.b16 %v514
    %v1997 = vunpack.c.l.b16 %v515
    %v1998 = vunpack.c.h.b16 %v515
    %v1999 = vunpack.c.l.b16 %v516
    %v2000 = vunpack.c.h.b16 %v516
    %v2001 = vunpack.c.l.b16 %v517
    %v2002 = vunpack.c.h.b16 %v517
    %v2003 = vunpack.c.l.b16 %v518
    %v2004 = vunpack.c.h.b16 %v518
    %v2005 = vunpack.c.l.b16 %v519
    %v2006 = vunpack.c.h.b16 %v519
    %v2007 = vunpack.c.l.b16 %v520
    %v2008 = vunpack.c.h.b16 %v520
    %v2009 = vunpack.c.l.b16 %v521
    %v2010 = vunpack.c.h.b16 %v521
    %v2011 = vunpack.c.l.b16 %v522
    %v2012 = vunpack.c.h.b16 %v522
    %v2013 = vunpack.c.l.b16 %v523
    %v2014 = vunpack.c.h.b16 %v523
    %v2015 = vunpack.c.l.b16 %v524
    %v2016 = vunpack.c.h.b16 %v524
    %v2017 = vunpack.c.l.b16 %v525
    %v2018 = vunpack.c.h.b16 %v525
    %v2019 = vunpack.c.l.b16 %v526
    %v2020 = vunpack.c.h.b16 %v526
    %v2021 = vunpack.c.l.b16 %v527
    %v2022 = vunpack.c.h.b16 %v527
    %v2023 = vunpack.c.l.b16 %v528
    %v2024 = vunpack.c.h.b16 %v528
    %v2025 = vunpack.c.l.b16 %v529
    %v2026 = vunpack.c.h.b16 %v529
    %v2027 = vunpack.c.l.b16 %v530
    %v2028 = vunpack.c.h.b16 %v530
    %v2029 = vunpack.c.l.b16 %v531
    %v2030 = vunpack.c.h.b16 %v531
    %v2031 = vunpack.c.l.b16 %v532
    %v2032 = vunpack.c.h.b16 %v532
    %v2033 = vunpack.c.l.b16 %v533
    %v2034 = vunpack.c.h.b16 %v533
    %v2035 = vunpack.c.l.b16 %v534
    %v2036 = vunpack.c.h.b16 %v534
    %v2037 = vunpack.c.l.b16 %v535
    %v2038 = vunpack.c.h.b16 %v535
    %v2039 = vunpack.c.l.b16 %v536
    %v2040 = vunpack.c.h.b16 %v536
    %v2041 = vunpack.c.l.b16 %v537
    %v2042 = vunpack.c.h.b16 %v537
    %v2043 = vunpack.c.l.b16 %v538
    %v2044 = vunpack.c.h.b16 %v538
    %v2045 = vunpack.c.l.b16 %v539
    %v2046 = vunpack.c.h.b16 %v539
    %v2047 = vunpack.c.l.b16 %v540
    %v2048 = vunpack.c.h.b16 %v540
    %v2049 = vunpack.c.l.b16 %v541
    %v2050 = vunpack.c.h.b16 %v541
    %v2051 = vunpack.c.l.b16 %v542
    %v2052 = vunpack.c.h.b16 %v542
    %v2053 = vunpack.c.l.b16 %v543
    %v2054 = vunpack.c.h.b16 %v543
    %v2055 = vunpack.c.l.b16 %v544
    %v2056 = vunpack.c.h.b16 %v544
    %v2057 = vunpack.c.l.b16 %v545
    %v2058 = vunpack.c.h.b16 %v545
    %v2059 = vunpack.c.l.b16 %v546
    %v2060 = vunpack.c.h.b16 %v546
    %v2061 = vunpack.c.l.b16 %v547
    %v2062 = vunpack.c.h.b16 %v547
    %v2063 = vunpack.c.l.b16 %v548
    %v2064 = vunpack.c.h.b16 %v548
    %v2065 = vunpack.c.l.b16 %v549
    %v2066 = vunpack.c.h.b16 %v549
    %v2067 = vunpack.c.l.b16 %v550
    %v2068 = vunpack.c.h.b16 %v550
    %v2069 = vunpack.c.l.b16 %v551
    %v2070 = vunpack.c.h.b16 %v551
    %v2071 = vunpack.c.l.b16 %v552
    %v2072 = vunpack.c.h.b16 %v552
    %v2073 = vunpack.c.l.b16 %v553
    %v2074 = vunpack.c.h.b16 %v553
    %v2075 = vunpack.c.l.b16 %v554
    %v2076 = vunpack.c.h.b16 %v554
    %v2077 = vunpack.c.l.b16 %v555
    %v2078 = vunpack.c.h.b16 %v555
    %v2079 = vunpack.c.l.b16 %v556
    %v2080 = vunpack.c.h.b16 %v556
    %v2081 = vunpack.c.l.b16 %v557
    %v2082 = vunpack.c.h.b16 %v557
    %v2083 = vunpack.c.l.b16 %v558
    %v2084 = vunpack.c.h.b16 %v558
    %v2085 = vunpack.c.l.b16 %v559
    %v2086 = vunpack.c.h.b16 %v559
    %v2087 = vunpack.c.l.b16 %v560
    %v2088 = vunpack.c.h.b16 %v560
    %v2089 = vunpack.c.l.b16 %v561
    %v2090 = vunpack.c.h.b16 %v561
    %v2091 = vunpack.c.l.b16 %v562
    %v2092 = vunpack.c.h.b16 %v562
    %v2093 = vunpack.c.l.b16 %v563
    %v2094 = vunpack.c.h.b16 %v563
    %v2095 = vunpack.c.l.b16 %v564
    %v2096 = vunpack.c.h.b16 %v564
    %v2097 = vunpack.c.l.b16 %v565
    %v2098 = vunpack.c.h.b16 %v565
    %v2099 = vunpack.c.l.b16 %v566
    %v2100 = vunpack.c.h.b16 %v566
    %v2101 = vunpack.c.l.b16 %v567
    %v2102 = vunpack.c.h.b16 %v567
    %v2103 = vunpack.c.l.b16 %v568
    %v2104 = vunpack.c.h.b16 %v568
    %v2105 = vunpack.c.l.b16 %v569
    %v2106 = vunpack.c.h.b16 %v569
    %v2107 = vunpack.c.l.b16 %v570
    %v2108 = vunpack.c.h.b16 %v570
    %v2109 = vunpack.c.l.b16 %v571
    %v2110 = vunpack.c.h.b16 %v571
    %v2111 = vunpack.c.l.b16 %v572
    %v2112 = vunpack.c.h.b16 %v572
    %v2113 = vunpack.c.l.b16 %v573
    %v2114 = vunpack.c.h.b16 %v573
    %v2115 = vunpack.c.l.b16 %v574
    %v2116 = vunpack.c.h.b16 %v574
    %v2117 = vunpack.c.l.b16 %v575
    %v2118 = vunpack.c.h.b16 %v575
    %v2119 = vunpack.c.l.b16 %v576
    %v2120 = vunpack.c.h.b16 %v576
    %v2121 = vunpack.c.l.b16 %v577
    %v2122 = vunpack.c.h.b16 %v577
    %v2123 = vunpack.c.l.b16 %v578
    %v2124 = vunpack.c.h.b16 %v578
    %v2125 = vunpack.c.l.b16 %v579
    %v2126 = vunpack.c.h.b16 %v579
    %v2127 = vunpack.c.l.b16 %v580
    %v2128 = vunpack.c.h.b16 %v580
    %v2129 = vunpack.c.l.b16 %v581
    %v2130 = vunpack.c.h.b16 %v581
    %v2131 = vunpack.c.l.b16 %v582
    %v2132 = vunpack.c.h.b16 %v582
    %v2133 = vunpack.c.l.b16 %v583
    %v2134 = vunpack.c.h.b16 %v583
    %v2135 = vunpack.c.l.b16 %v584
    %v2136 = vunpack.c.h.b16 %v584
    %v2137 = vunpack.c.l.b16 %v585
    %v2138 = vunpack.c.h.b16 %v585
    %v2139 = vunpack.c.l.b16 %v586
    %v2140 = vunpack.c.h.b16 %v586
    %v2141 = vunpack.c.l.b16 %v587
    %v2142 = vunpack.c.h.b16 %v587
    %v2143 = vunpack.c.l.b16 %v588
    %v2144 = vunpack.c.h.b16 %v588
    %v2145 = vunpack.c.l.b16 %v589
    %v2146 = vunpack.c.h.b16 %v589
    %v2147 = vunpack.c.l.b16 %v590
    %v2148 = vunpack.c.h.b16 %v590
    %v2149 = vunpack.c.l.b16 %v591
    %v2150 = vunpack.c.h.b16 %v591
    %v2151 = vunpack.c.l.b16 %v592
    %v2152 = vunpack.c.h.b16 %v592
    %v2153 = vunpack.c.l.b16 %v593
    %v2154 = vunpack.c.h.b16 %v593
    %v2155 = vunpack.c.l.b16 %v594
    %v2156 = vunpack.c.h.b16 %v594
    %v2157 = vunpack.c.l.b16 %v595
    %v2158 = vunpack.c.h.b16 %v595
    %v2159 = vunpack.c.l.b16 %v596
    %v2160 = vunpack.c.h.b16 %v596
    %v2161 = vunpack.c.l.b16 %v597
    %v2162 = vunpack.c.h.b16 %v597
    %v2163 = vunpack.c.l.b16 %v598
    %v2164 = vunpack.c.h.b16 %v598
    %v2165 = vunpack.c.l.b16 %v599
    %v2166 = vunpack.c.h.b16 %v599
    %v2167 = vunpack.c.l.b16 %v600
    %v2168 = vunpack.c.h.b16 %v600
    %v2169 = vunpack.c.l.b16 %v601
    %v2170 = vunpack.c.h.b16 %v601
    %v2171 = vunpack.c.l.b16 %v602
    %v2172 = vunpack.c.h.b16 %v602
    %v2173 = vunpack.c.l.b16 %v603
    %v2174 = vunpack.c.h.b16 %v603
    %v2175 = vunpack.c.l.b16 %v604
    %v2176 = vunpack.c.h.b16 %v604
    %v2177 = vunpack.c.l.b16 %v605
    %v2178 = vunpack.c.h.b16 %v605
    %v2179 = vunpack.c.l.b16 %v606
    %v2180 = vunpack.c.h.b16 %v606
    %v2181 = vunpack.c.l.b16 %v607
    %v2182 = vunpack.c.h.b16 %v607
    %v2183 = vunpack.c.l.b16 %v608
    %v2184 = vunpack.c.h.b16 %v608
    %v2185 = vunpack.c.l.b16 %v609
    %v2186 = vunpack.c.h.b16 %v609
    %v2187 = vunpack.c.l.b16 %v610
    %v2188 = vunpack.c.h.b16 %v610
    %v2189 = vunpack.c.l.b16 %v611
    %v2190 = vunpack.c.h.b16 %v611
    %v2191 = vunpack.c.l.b16 %v612
    %v2192 = vunpack.c.h.b16 %v612
    %v2193 = vunpack.c.l.b16 %v613
    %v2194 = vunpack.c.h.b16 %v613
    %v2195 = vunpack.c.l.b16 %v614
    %v2196 = vunpack.c.h.b16 %v614
    %v2197 = vunpack.c.l.b16 %v615
    %v2198 = vunpack.c.h.b16 %v615
    %v2199 = vunpack.c.l.b16 %v616
    %v2200 = vunpack.c.h.b16 %v616
    %v2201 = vunpack.c.l.b16 %v617
    %v2202 = vunpack.c.h.b16 %v617
    %v2203 = vunpack.c.l.b16 %v618
    %v2204 = vunpack.c.h.b16 %v618
    %v2205 = vunpack.c.l.b16 %v619
    %v2206 = vunpack.c.h.b16 %v619
    %v2207 = vunpack.c.l.b16 %v620
    %v2208 = vunpack.c.h.b16 %v620
    %v2209 = vunpack.c.l.b16 %v621
    %v2210 = vunpack.c.h.b16 %v621
    %v2211 = vunpack.c.l.b16 %v622
    %v2212 = vunpack.c.h.b16 %v622
    %v2213 = vunpack.c.l.b16 %v623
    %v2214 = vunpack.c.h.b16 %v623
    %v2215 = vunpack.c.l.b16 %v624
    %v2216 = vunpack.c.h.b16 %v624
    %v2217 = vunpack.c.l.b16 %v625
    %v2218 = vunpack.c.h.b16 %v625
    %v2219 = vunpack.c.l.b16 %v626
    %v2220 = vunpack.c.h.b16 %v626
    %v2221 = vunpack.c.l.b16 %v627
    %v2222 = vunpack.c.h.b16 %v627
    %v2223 = vunpack.c.l.b16 %v628
    %v2224 = vunpack.c.h.b16 %v628
    %v2225 = vunpack.c.l.b16 %v629
    %v2226 = vunpack.c.h.b16 %v629
    %v2227 = vunpack.c.l.b16 %v630
    %v2228 = vunpack.c.h.b16 %v630
    %v2229 = vunpack.c.l.b16 %v631
    %v2230 = vunpack.c.h.b16 %v631
    %v2231 = vunpack.c.l.b16 %v632
    %v2232 = vunpack.c.h.b16 %v632
    %v2233 = vunpack.c.l.b16 %v633
    %v2234 = vunpack.c.h.b16 %v633
    %v2235 = vunpack.c.l.b16 %v634
    %v2236 = vunpack.c.h.b16 %v634
    %v2237 = vunpack.c.l.b16 %v635
    %v2238 = vunpack.c.h.b16 %v635
    %v2239 = vunpack.c.l.b16 %v636
    %v2240 = vunpack.c.h.b16 %v636
    %v2241 = vunpack.c.l.b16 %v637
    %v2242 = vunpack.c.h.b16 %v637
    %v2243 = vunpack.c.l.b16 %v638
    %v2244 = vunpack.c.h.b16 %v638
    %v2245 = vunpack.c.l.b16 %v639
    %v2246 = vunpack.c.h.b16 %v639
    %v2247 = vunpack.c.l.b16 %v640
    %v2248 = vunpack.c.h.b16 %v640
    %v2249 = vunpack.c.l.b16 %v641
    %v2250 = vunpack.c.h.b16 %v641
    %v2251 = vunpack.c.l.b16 %v642
    %v2252 = vunpack.c.h.b16 %v642
    %v2253 = vunpack.c.l.b16 %v643
    %v2254 = vunpack.c.h.b16 %v643
    %v2255 = vunpack.c.l.b16 %v644
    %v2256 = vunpack.c.h.b16 %v644
    %v2257 = vunpack.c.l.b16 %v645
    %v2258 = vunpack.c.h.b16 %v645
    %v2259 = vunpack.c.l.b16 %v646
    %v2260 = vunpack.c.h.b16 %v646
    %v2261 = vunpack.c.l.b16 %v647
    %v2262 = vunpack.c.h.b16 %v647
    %v2263 = vunpack.c.l.b16 %v648
    %v2264 = vunpack.c.h.b16 %v648
    %v2265 = vunpack.c.l.b16 %v649
    %v2266 = vunpack.c.h.b16 %v649
    %v2267 = vunpack.c.l.b16 %v650
    %v2268 = vunpack.c.h.b16 %v650
    %v2269 = vunpack.c.l.b16 %v651
    %v2270 = vunpack.c.h.b16 %v651
    %v2271 = vunpack.c.l.b16 %v652
    %v2272 = vunpack.c.h.b16 %v652
    %v2273 = vunpack.c.l.b16 %v653
    %v2274 = vunpack.c.h.b16 %v653
    %v2275 = vunpack.c.l.b16 %v654
    %v2276 = vunpack.c.h.b16 %v654
    %v2277 = vunpack.c.l.b16 %v655
    %v2278 = vunpack.c.h.b16 %v655
    %v2279 = vunpack.c.l.b16 %v656
    %v2280 = vunpack.c.h.b16 %v656
    %v2281 = vunpack.c.l.b16 %v657
    %v2282 = vunpack.c.h.b16 %v657
    %v2283 = vunpack.c.l.b16 %v658
    %v2284 = vunpack.c.h.b16 %v658
    %v2285 = vunpack.c.l.b16 %v659
    %v2286 = vunpack.c.h.b16 %v659
    %v2287 = vunpack.c.l.b16 %v660
    %v2288 = vunpack.c.h.b16 %v660
    %v2289 = vunpack.c.l.b16 %v661
    %v2290 = vunpack.c.h.b16 %v661
    %v2291 = vunpack.c.l.b16 %v662
    %v2292 = vunpack.c.h.b16 %v662
    %v2293 = vunpack.c.l.b16 %v663
    %v2294 = vunpack.c.h.b16 %v663
    %v2295 = vunpack.c.l.b16 %v664
    %v2296 = vunpack.c.h.b16 %v664
    %v2297 = vunpack.c.l.b16 %v665
    %v2298 = vunpack.c.h.b16 %v665
    %v2299 = vunpack.c.l.b16 %v666
    %v2300 = vunpack.c.h.b16 %v666
    %v2301 = vunpack.c.l.b16 %v667
    %v2302 = vunpack.c.h.b16 %v667
    %v2303 = vunpack.c.l.b16 %v668
    %v2304 = vunpack.c.h.b16 %v668
    %v2305 = vunpack.c.l.b16 %v669
    %v2306 = vunpack.c.h.b16 %v669
    %v2307 = vunpack.c.l.b16 %v670
    %v2308 = vunpack.c.h.b16 %v670
    %v2309 = vunpack.c.l.b16 %v671
    %v2310 = vunpack.c.h.b16 %v671
    %v2311 = vunpack.c.l.b16 %v672
    %v2312 = vunpack.c.h.b16 %v672
    %v2313 = vunpack.c.l.b16 %v673
    %v2314 = vunpack.c.h.b16 %v673
    %v2315 = vunpack.c.l.b16 %v674
    %v2316 = vunpack.c.h.b16 %v674
    %v2317 = vunpack.c.l.b16 %v675
    %v2318 = vunpack.c.h.b16 %v675
    %v2319 = vunpack.c.l.b16 %v676
    %v2320 = vunpack.c.h.b16 %v676
    %v2321 = vunpack.c.l.b16 %v677
    %v2322 = vunpack.c.h.b16 %v677
    %v2323 = vunpack.c.l.b16 %v678
    %v2324 = vunpack.c.h.b16 %v678
    %v2325 = vunpack.c.l.b16 %v679
    %v2326 = vunpack.c.h.b16 %v679
    %v2327 = vunpack.c.l.b16 %v680
    %v2328 = vunpack.c.h.b16 %v680
    %v2329 = vunpack.c.l.b16 %v681
    %v2330 = vunpack.c.h.b16 %v681
    %v2331 = vunpack.c.l.b16 %v682
    %v2332 = vunpack.c.h.b16 %v682
    %v2333 = vunpack.c.l.b16 %v683
    %v2334 = vunpack.c.h.b16 %v683
    %v2335 = vunpack.c.l.b16 %v684
    %v2336 = vunpack.c.h.b16 %v684
    %v2337 = vunpack.c.l.b16 %v685
    %v2338 = vunpack.c.h.b16 %v685
    %v2339 = vunpack.c.l.b16 %v686
    %v2340 = vunpack.c.h.b16 %v686
    %v2341 = vunpack.c.l.b16 %v687
    %v2342 = vunpack.c.h.b16 %v687
    %v2343 = vunpack.c.l.b16 %v688
    %v2344 = vunpack.c.h.b16 %v688
    %v2345 = vunpack.c.l.b16 %v689
    %v2346 = vunpack.c.h.b16 %v689
    %v2347 = vunpack.c.l.b16 %v690
    %v2348 = vunpack.c.h.b16 %v690
    %v2349 = vunpack.c.l.b16 %v691
    %v2350 = vunpack.c.h.b16 %v691
    %v2351 = vunpack.c.l.b16 %v692
    %v2352 = vunpack.c.h.b16 %v692
    %v2353 = vunpack.c.l.b16 %v693
    %v2354 = vunpack.c.h.b16 %v693
    %v2355 = vunpack.c.l.b16 %v694
    %v2356 = vunpack.c.h.b16 %v694
    %v2357 = vunpack.c.l.b16 %v695
    %v2358 = vunpack.c.h.b16 %v695
    %v2359 = vunpack.c.l.b16 %v696
    %v2360 = vunpack.c.h.b16 %v696
    %v2361 = vunpack.c.l.b16 %v697
    %v2362 = vunpack.c.h.b16 %v697
    %v2363 = vunpack.c.l.b16 %v698
    %v2364 = vunpack.c.h.b16 %v698
    %v2365 = vunpack.c.l.b16 %v699
    %v2366 = vunpack.c.h.b16 %v699
    %v2367 = vunpack.c.l.b16 %v700
    %v2368 = vunpack.c.h.b16 %v700
    %v2369 = vunpack.c.l.b16 %v701
    %v2370 = vunpack.c.h.b16 %v701
    %v2371 = vunpack.c.l.b16 %v702
    %v2372 = vunpack.c.h.b16 %v702
    %v2373 = vunpack.c.l.b16 %v703
    %v2374 = vunpack.c.h.b16 %v703
    %v2375 = vunpack.c.l.b16 %v704
    %v2376 = vunpack.c.h.b16 %v704
    %v2377 = vunpack.c.l.b16 %v705
    %v2378 = vunpack.c.h.b16 %v705
    %v2379 = vunpack.c.l.b16 %v706
    %v2380 = vunpack.c.h.b16 %v706
    %v2381 = vunpack.c.l.b16 %v707
    %v2382 = vunpack.c.h.b16 %v707
    %v2383 = vunpack.c.l.b16 %v708
    %v2384 = vunpack.c.h.b16 %v708
    %v2385 = vunpack.c.l.b16 %v709
    %v2386 = vunpack.c.h.b16 %v709
    %v2387 = vunpack.c.l.b16 %v710
    %v2388 = vunpack.c.h.b16 %v710
    %v2389 = vunpack.c.l.b16 %v711
    %v2390 = vunpack.c.h.b16 %v711
    %v2391 = vunpack.c.l.b16 %v712
    %v2392 = vunpack.c.h.b16 %v712
    %v2393 = vunpack.c.l.b16 %v713
    %v2394 = vunpack.c.h.b16 %v713
    %v2395 = vunpack.c.l.b16 %v714
    %v2396 = vunpack.c.h.b16 %v714
    %v2397 = vunpack.c.l.b16 %v715
    %v2398 = vunpack.c.h.b16 %v715
    %v2399 = vunpack.c.l.b16 %v716
    %v2400 = vunpack.c.h.b16 %v716
    %v2401 = vunpack.c.l.b16 %v717
    %v2402 = vunpack.c.h.b16 %v717
    %v2403 = vunpack.c.l.b16 %v718
    %v2404 = vunpack.c.h.b16 %v718
    %v2405 = vunpack.c.l.b16 %v719
    %v2406 = vunpack.c.h.b16 %v719
    %v2407 = vunpack.c.l.b16 %v720
    %v2408 = vunpack.c.h.b16 %v720
    %v2409 = vunpack.c.l.b16 %v721
    %v2410 = vunpack.c.h.b16 %v721
    %v2411 = vunpack.c.l.b16 %v722
    %v2412 = vunpack.c.h.b16 %v722
    %v2413 = vunpack.c.l.b16 %v723
    %v2414 = vunpack.c.h.b16 %v723
    %v2415 = vunpack.c.l.b16 %v724
    %v2416 = vunpack.c.h.b16 %v724
    %v2417 = vunpack.c.l.b16 %v725
    %v2418 = vunpack.c.h.b16 %v725
    %v2419 = vunpack.c.l.b16 %v726
    %v2420 = vunpack.c.h.b16 %v726
    %v2421 = vunpack.c.l.b16 %v727
    %v2422 = vunpack.c.h.b16 %v727
    %v2423 = vunpack.c.l.b16 %v728
    %v2424 = vunpack.c.h.b16 %v728
    %v2425 = vunpack.c.l.b16 %v729
    %v2426 = vunpack.c.h.b16 %v729
    %v2427 = vunpack.c.l.b16 %v730
    %v2428 = vunpack.c.h.b16 %v730
    %v2429 = vunpack.c.l.b16 %v731
    %v2430 = vunpack.c.h.b16 %v731
    %v2431 = vunpack.c.l.b16 %v732
    %v2432 = vunpack.c.h.b16 %v732
    %v2433 = vunpack.c.l.b16 %v733
    %v2434 = vunpack.c.h.b16 %v733
    %v2435 = vunpack.c.l.b16 %v734
    %v2436 = vunpack.c.h.b16 %v734
    %v2437 = vunpack.c.l.b16 %v735
    %v2438 = vunpack.c.h.b16 %v735
    %v2439 = vunpack.c.l.b16 %v736
    %v2440 = vunpack.c.h.b16 %v736
    %v2441 = vunpack.c.l.b16 %v737
    %v2442 = vunpack.c.h.b16 %v737
    %v2443 = vunpack.c.l.b16 %v738
    %v2444 = vunpack.c.h.b16 %v738
    %v2445 = vunpack.c.l.b16 %v739
    %v2446 = vunpack.c.h.b16 %v739
    %v2447 = vunpack.c.l.b16 %v740
    %v2448 = vunpack.c.h.b16 %v740
    %v2449 = vunpack.c.l.b16 %v741
    %v2450 = vunpack.c.h.b16 %v741
    %v2451 = vunpack.c.l.b16 %v742
    %v2452 = vunpack.c.h.b16 %v742
    %v2453 = vunpack.c.l.b16 %v743
    %v2454 = vunpack.c.h.b16 %v743
    %v2455 = vunpack.c.l.b16 %v744
    %v2456 = vunpack.c.h.b16 %v744
    %v2457 = vunpack.c.l.b16 %v745
    %v2458 = vunpack.c.h.b16 %v745
    %v2459 = vunpack.c.l.b16 %v746
    %v2460 = vunpack.c.h.b16 %v746
    %v2461 = vunpack.c.l.b16 %v747
    %v2462 = vunpack.c.h.b16 %v747
    %v2463 = vunpack.c.l.b16 %v748
    %v2464 = vunpack.c.h.b16 %v748
    %v2465 = vunpack.c.l.b16 %v749
    %v2466 = vunpack.c.h.b16 %v749
    %v2467 = vunpack.c.l.b16 %v750
    %v2468 = vunpack.c.h.b16 %v750
    %v2469 = vunpack.c.l.b16 %v751
    %v2470 = vunpack.c.h.b16 %v751
    %v2471 = vunpack.c.l.b16 %v752
    %v2472 = vunpack.c.h.b16 %v752
    %v2473 = vunpack.c.l.b16 %v753
    %v2474 = vunpack.c.h.b16 %v753
    %v2475 = vunpack.c.l.b16 %v754
    %v2476 = vunpack.c.h.b16 %v754
    %v2477 = vunpack.c.l.b16 %v755
    %v2478 = vunpack.c.h.b16 %v755
    %v2479 = vunpack.c.l.b16 %v756
    %v2480 = vunpack.c.h.b16 %v756
    %v2481 = vunpack.c.l.b16 %v757
    %v2482 = vunpack.c.h.b16 %v757
    %v2483 = vunpack.c.l.b16 %v758
    %v2484 = vunpack.c.h.b16 %v758
    %v2485 = vunpack.c.l.b16 %v759
    %v2486 = vunpack.c.h.b16 %v759
    %v2487 = vunpack.c.l.b16 %v760
    %v2488 = vunpack.c.h.b16 %v760
    %v2489 = vunpack.c.l.b16 %v761
    %v2490 = vunpack.c.h.b16 %v761
    %v2491 = vpack.c.b16 %v1381, %v1371
    %v2492 = vpack.c.b16 %v1382, %v1372
    %v2493 = vpack.c.b16 %v1383, %v1373
    %v2494 = vpack.c.b16 %v1384, %v1374
    %v2495 = vpack.c.b16 %v1385, %v1375
    %v2496 = vpack.c.b16 %v1386, %v1376
    %v2497 = vpack.c.b16 %v1387, %v1377
    %v2498 = vpack.c.b16 %v1388, %v1378
    %v2499 = vpack.c.b16 %v1389, %v1379
    %v2500 = vpack.c.b16 %v1390, %v1380
    %v2501 = vpack.c.b16 %v1401, %v1391
    %v2502 = vpack.c.b16 %v1402, %v1392
    %v2503 = vpack.c.b16 %v1403, %v1393
    %v2504 = vpack.c.b16 %v1404, %v1394
    %v2505 = vpack.c.b16 %v1405, %v1395
    %v2506 = vpack.c.b16 %v1406, %v1396
    %v2507 = vpack.c.b16 %v1407, %v1397
    %v2508 = vpack.c.b16 %v1408, %v1398
    %v2509 = vpack.c.b16 %v1409, %v1399
    %v2510 = vpack.c.b16 %v1410, %v1400
    %v2511 = vpack.c.b16 %v1421, %v1411
    %v2512 = vpack.c.b16 %v1422, %v1412
    %v2513 = vpack.c.b16 %v1423, %v1413
    %v2514 = vpack.c.b16 %v1424, %v1414
    %v2515 = vpack.c.b16 %v1425, %v1415
    %v2516 = vpack.c.b16 %v1426, %v1416
    %v2517 = vpack.c.b16 %v1427, %v1417
    %v2518 = vpack.c.b16 %v1428, %v1418
    %v2519 = vpack.c.b16 %v1429, %v1419
    %v2520 = vpack.c.b16 %v1430, %v1420
    %v2521 = vpack.c.b16 %v1441, %v1431
    %v2522 = vpack.c.b16 %v1442, %v1432
    %v2523 = vpack.c.b16 %v1443, %v1433
    %v2524 = vpack.c.b16 %v1444, %v1434
    %v2525 = vpack.c.b16 %v1445, %v1435
    %v2526 = vpack.c.b16 %v1446, %v1436
    %v2527 = vpack.c.b16 %v1447, %v1437
    %v2528 = vpack.c.b16 %v1448, %v1438
    %v2529 = vpack.c.b16 %v1449, %v1439
    %v2530 = vpack.c.b16 %v1450, %v1440
    %v2531 = vpack.c.b16 %v1461, %v1451
    %v2532 = vpack.c.b16 %v1462, %v1452
    %v2533 = vpack.c.b16 %v1463, %v1453
    %v2534 = vpack.c.b16 %v1464, %v1454
    %v2535 = vpack.c.b16 %v1465, %v1455
    %v2536 = vpack.c.b16 %v1466, %v1456
    %v2537 = vpack.c.b16 %v1467, %v1457
    %v2538 = vpack.c.b16 %v1468, %v1458
    %v2539 = vpack.c.b16 %v1469, %v1459
    %v2540 = vpack.c.b16 %v1470, %v1460
    %v2541 = vpack.c.b16 %v1481, %v1471
    %v2542 = vpack.c.b16 %v1482, %v1472
    %v2543 = vpack.c.b16 %v1483, %v1473
    %v2544 = vpack.c.b16 %v1484, %v1474
    %v2545 = vpack.c.b16 %v1485, %v1475
    %v2546 = vpack.c.b16 %v1486, %v1476
    %v2547 = vpack.c.b16 %v1487, %v1477
    %v2548 = vpack.c.b16 %v1488, %v1478
    %v2549 = vpack.c.b16 %v1489, %v1479
    %v2550 = vpack.c.b16 %v1490, %v1480
    %v2551 = vpack.c.b16 %v1501, %v1491
    %v2552 = vpack.c.b16 %v1502, %v1492
    %v2553 = vpack.c.b16 %v1503, %v1493
    %v2554 = vpack.c.b16 %v1504, %v1494
    %v2555 = vpack.c.b16 %v1505, %v1495
    %v2556 = vpack.c.b16 %v1506, %v1496
    %v2557 = vpack.c.b16 %v1507, %v1497
    %v2558 = vpack.c.b16 %v1508, %v1498
    %v2559 = vpack.c.b16 %v1509, %v1499
    %v2560 = vpack.c.b16 %v1510, %v1500
    %v2561 = vpack.c.b16 %v1521, %v1511
    %v2562 = vpack.c.b16 %v1522, %v1512
    %v2563 = vpack.c.b16 %v1523, %v1513
    %v2564 = vpack.c.b16 %v1524, %v1514
    %v2565 = vpack.c.b16 %v1525, %v1515
    %v2566 = vpack.c.b16 %v1526, %v1516
    %v2567 = vpack.c.b16 %v1527, %v1517
    %v2568 = vpack.c.b16 %v1528, %v1518
    %v2569 = vpack.c.b16 %v1529, %v1519
    %v2570 = vpack.c.b16 %v1530, %v1520
    %v2571 = vpack.c.b16 %v1541, %v1531
    %v2572 = vpack.c.b16 %v1542, %v1532
    %v2573 = vpack.c.b16 %v1543, %v1533
    %v2574 = vpack.c.b16 %v1544, %v1534
    %v2575 = vpack.c.b16 %v1545, %v1535
    %v2576 = vpack.c.b16 %v1546, %v1536
    %v2577 = vpack.c.b16 %v1547, %v1537
    %v2578 = vpack.c.b16 %v1548, %v1538
    %v2579 = vpack.c.b16 %v1549, %v1539
    %v2580 = vpack.c.b16 %v1550, %v1540
    %v2581 = vpack.c.b16 %v1561, %v1551
    %v2582 = vpack.c.b16 %v1562, %v1552
    %v2583 = vpack.c.b16 %v1563, %v1553
    %v2584 = vpack.c.b16 %v1564, %v1554
    %v2585 = vpack.c.b16 %v1565, %v1555
    %v2586 = vpack.c.b16 %v1566, %v1556
    %v2587 = vpack.c.b16 %v1567, %v1557
    %v2588 = vpack.c.b16 %v1568, %v1558
    %v2589 = vpack.c.b16 %v1569, %v1559
    %v2590 = vpack.c.b16 %v1570, %v1560
    %v2591 = vpack.c.b16 %v1581, %v1571
    %v2592 = vpack.c.b16 %v1582, %v1572
    %v2593 = vpack.c.b16 %v1583, %v1573
    %v2594 = vpack.c.b16 %v1584, %v1574
    %v2595 = vpack.c.b16 %v1585, %v1575
    %v2596 = vpack.c.b16 %v1586, %v1576
    %v2597 = vpack.c.b16 %v1587, %v1577
    %v2598 = vpack.c.b16 %v1588, %v1578
    %v2599 = vpack.c.b16 %v1589, %v1579
    %v2600 = vpack.c.b16 %v1590, %v1580
    %v2601 = vpack.c.b16 %v1601, %v1591
    %v2602 = vpack.c.b16 %v1602, %v1592
    %v2603 = vpack.c.b16 %v1603, %v1593
    %v2604 = vpack.c.b16 %v1604, %v1594
    %v2605 = vpack.c.b16 %v1605, %v1595
    %v2606 = vpack.c.b16 %v1606, %v1596
    %v2607 = vpack.c.b16 %v1607, %v1597
    %v2608 = vpack.c.b16 %v1608, %v1598
    %v2609 = vpack.c.b16 %v1609, %v1599
    %v2610 = vpack.c.b16 %v1610, %v1600
    %v2611 = vpack.c.b16 %v1621, %v1611
    %v2612 = vpack.c.b16 %v1622, %v1612
    %v2613 = vpack.c.b16 %v1623, %v1613
    %v2614 = vpack.c.b16 %v1624, %v1614
    %v2615 = vpack.c.b16 %v1625, %v1615
    %v2616 = vpack.c.b16 %v1626, %v1616
    %v2617 = vpack.c.b16 %v1627, %v1617
    %v2618 = vpack.c.b16 %v1628, %v1618
    %v2619 = vpack.c.b16 %v1629, %v1619
    %v2620 = vpack.c.b16 %v1630, %v1620
    %v2621 = vpack.c.b16 %v1641, %v1631
    %v2622 = vpack.c.b16 %v1642, %v1632
    %v2623 = vpack.c.b16 %v1643, %v1633
    %v2624 = vpack.c.b16 %v1644, %v1634
    %v2625 = vpack.c.b16 %v1645, %v1635
    %v2626 = vpack.c.b16 %v1646, %v1636
    %v2627 = vpack.c.b16 %v1647, %v1637
    %v2628 = vpack.c.b16 %v1648, %v1638
    %v2629 = vpack.c.b16 %v1649, %v1639
    %v2630 = vpack.c.b16 %v1650, %v1640
    %v2631 = vpack.c.b16 %v1661, %v1651
    %v2632 = vpack.c.b16 %v1662, %v1652
    %v2633 = vpack.c.b16 %v1663, %v1653
    %v2634 = vpack.c.b16 %v1664, %v1654
    %v2635 = vpack.c.b16 %v1665, %v1655
    %v2636 = vpack.c.b16 %v1666, %v1656
    %v2637 = vpack.c.b16 %v1667, %v1657
    %v2638 = vpack.c.b16 %v1668, %v1658
    %v2639 = vpack.c.b16 %v1669, %v1659
    %v2640 = vpack.c.b16 %v1670, %v1660
    %v2641 = vpack.c.b16 %v1681, %v1671
    %v2642 = vpack.c.b16 %v1682, %v1672
    %v2643 = vpack.c.b16 %v1683, %v1673
    %v2644 = vpack.c.b16 %v1684, %v1674
    %v2645 = vpack.c.b16 %v1685, %v1675
    %v2646 = vpack.c.b16 %v1686, %v1676
    %v2647 = vpack.c.b16 %v1687, %v1677
    %v2648 = vpack.c.b16 %v1688, %v1678
    %v2649 = vpack.c.b16 %v1689, %v1679
    %v2650 = vpack.c.b16 %v1690, %v1680
    %v2651 = vpack.c.b16 %v1701, %v1691
    %v2652 = vpack.c.b16 %v1702, %v1692
    %v2653 = vpack.c.b16 %v1703, %v1693
    %v2654 = vpack.c.b16 %v1704, %v1694
    %v2655 = vpack.c.b16 %v1705, %v1695
    %v2656 = vpack.c.b16 %v1706, %v1696
    %v2657 = vpack.c.b16 %v1707, %v1697
    %v2658 = vpack.c.b16 %v1708, %v1698
    %v2659 = vpack.c.b16 %v1709, %v1699
    %v2660 = vpack.c.b16 %v1710, %v1700
    %v2661 = vpack.c.b16 %v1721, %v1711
    %v2662 = vpack.c.b16 %v1722, %v1712
    %v2663 = vpack.c.b16 %v1723, %v1713
    %v2664 = vpack.c.b16 %v1724, %v1714
    %v2665 = vpack.c.b16 %v1725, %v1715
    %v2666 = vpack.c.b16 %v1726, %v1716
    %v2667 = vpack.c.b16 %v1727, %v1717
    %v2668 = vpack.c.b16 %v1728, %v1718
    %v2669 = vpack.c.b16 %v1729, %v1719
    %v2670 = vpack.c.b16 %v1730, %v1720
    %v2671 = vpack.c.b16 %v1741, %v1731
    %v2672 = vpack.c.b16 %v1742, %v1732
    %v2673 = vpack.c.b16 %v1743, %v1733
    %v2674 = vpack.c.b16 %v1744, %v1734
    %v2675 = vpack.c.b16 %v1745, %v1735
    %v2676 = vpack.c.b16 %v1746, %v1736
    %v2677 = vpack.c.b16 %v1747, %v1737
    %v2678 = vpack.c.b16 %v1748, %v1738
    %v2679 = vpack.c.b16 %v1749, %v1739
    %v2680 = vpack.c.b16 %v1750, %v1740
    %v2681 = vpack.c.b16 %v1761, %v1751
    %v2682 = vpack.c.b16 %v1762, %v1752
    %v2683 = vpack.c.b16 %v1763, %v1753
    %v2684 = vpack.c.b16 %v1764, %v1754
    %v2685 = vpack.c.b16 %v1765, %v1755
    %v2686 = vpack.c.b16 %v1766, %v1756
    %v2687 = vpack.c.b16 %v1767, %v1757
    %v2688 = vpack.c.b16 %v1768, %v1758
    %v2689 = vpack.c.b16 %v1769, %v1759
    %v2690 = vpack.c.b16 %v1770, %v1760
    %v2691 = vpack.c.b16 %v1781, %v1771
    %v2692 = vpack.c.b16 %v1782, %v1772
    %v2693 = vpack.c.b16 %v1783, %v1773
    %v2694 = vpack.c.b16 %v1784, %v1774
    %v2695 = vpack.c.b16 %v1785, %v1775
    %v2696 = vpack.c.b16 %v1786, %v1776
    %v2697 = vpack.c.b16 %v1787, %v1777
    %v2698 = vpack.c.b16 %v1788, %v1778
    %v2699 = vpack.c.b16 %v1789, %v1779
    %v2700 = vpack.c.b16 %v1790, %v1780
    %v2701 = vpack.c.b16 %v1801, %v1791
    %v2702 = vpack.c.b16 %v1802, %v1792
    %v2703 = vpack.c.b16 %v1803, %v1793
    %v2704 = vpack.c.b16 %v1804, %v1794
    %v2705 = vpack.c.b16 %v1805, %v1795
    %v2706 = vpack.c.b16 %v1806, %v1796
    %v2707 = vpack.c.b16 %v1807, %v1797
    %v2708 = vpack.c.b16 %v1808, %v1798
    %v2709 = vpack.c.b16 %v1809, %v1799
    %v2710 = vpack.c.b16 %v1810, %v1800
    %v2711 = vpack.c.b16 %v1821, %v1811
    %v2712 = vpack.c.b16 %v1822, %v1812
    %v2713 = vpack.c.b16 %v1823, %v1813
    %v2714 = vpack.c.b16 %v1824, %v1814
    %v2715 = vpack.c.b16 %v1825, %v1815
    %v2716 = vpack.c.b16 %v1826, %v1816
    %v2717 = vpack.c.b16 %v1827, %v1817
    %v2718 = vpack.c.b16 %v1828, %v1818
    %v2719 = vpack.c.b16 %v1829, %v1819
    %v2720 = vpack.c.b16 %v1830, %v1820
    %v2721 = vpack.c.b16 %v1841, %v1831
    %v2722 = vpack.c.b16 %v1842, %v1832
    %v2723 = vpack.c.b16 %v1843, %v1833
    %v2724 = vpack.c.b16 %v1844, %v1834
    %v2725 = vpack.c.b16 %v1845, %v1835
    %v2726 = vpack.c.b16 %v1846, %v1836
    %v2727 = vpack.c.b16 %v1847, %v1837
    %v2728 = vpack.c.b16 %v1848, %v1838
    %v2729 = vpack.c.b16 %v1849, %v1839
    %v2730 = vpack.c.b16 %v1850, %v1840
    %v2731 = vpack.c.b16 %v1861, %v1851
    %v2732 = vpack.c.b16 %v1862, %v1852
    %v2733 = vpack.c.b16 %v1863, %v1853
    %v2734 = vpack.c.b16 %v1864, %v1854
    %v2735 = vpack.c.b16 %v1865, %v1855
    %v2736 = vpack.c.b16 %v1866, %v1856
    %v2737 = vpack.c.b16 %v1867, %v1857
    %v2738 = vpack.c.b16 %v1868, %v1858
    %v2739 = vpack.c.b16 %v1869, %v1859
    %v2740 = vpack.c.b16 %v1870, %v1860
    %v2741 = vpack.c.b16 %v1881, %v1871
    %v2742 = vpack.c.b16 %v1882, %v1872
    %v2743 = vpack.c.b16 %v1883, %v1873
    %v2744 = vpack.c.b16 %v1884, %v1874
    %v2745 = vpack.c.b16 %v1885, %v1875
    %v2746 = vpack.c.b16 %v1886, %v1876
    %v2747 = vpack.c.b16 %v1887, %v1877
    %v2748 = vpack.c.b16 %v1888, %v1878
    %v2749 = vpack.c.b16 %v1889, %v1879
    %v2750 = vpack.c.b16 %v1890, %v1880
    %v2751 = vpack.c.b16 %v1901, %v1891
    %v2752 = vpack.c.b16 %v1902, %v1892
    %v2753 = vpack.c.b16 %v1903, %v1893
    %v2754 = vpack.c.b16 %v1904, %v1894
    %v2755 = vpack.c.b16 %v1905, %v1895
    %v2756 = vpack.c.b16 %v1906, %v1896
    %v2757 = vpack.c.b16 %v1907, %v1897
    %v2758 = vpack.c.b16 %v1908, %v1898
    %v2759 = vpack.c.b16 %v1909, %v1899
    %v2760 = vpack.c.b16 %v1910, %v1900
    %v2761 = vpack.c.b16 %v1921, %v1911
    %v2762 = vpack.c.b16 %v1922, %v1912
    %v2763 = vpack.c.b16 %v1923, %v1913
    %v2764 = vpack.c.b16 %v1924, %v1914
    %v2765 = vpack.c.b16 %v1925, %v1915
    %v2766 = vpack.c.b16 %v1926, %v1916
    %v2767 = vpack.c.b16 %v1927, %v1917
    %v2768 = vpack.c.b16 %v1928, %v1918
    %v2769 = vpack.c.b16 %v1929, %v1919
    %v2770 = vpack.c.b16 %v1930, %v1920
    %v2771 = vpack.c.b16 %v1941, %v1931
    %v2772 = vpack.c.b16 %v1942, %v1932
    %v2773 = vpack.c.b16 %v1943, %v1933
    %v2774 = vpack.c.b16 %v1944, %v1934
    %v2775 = vpack.c.b16 %v1945, %v1935
    %v2776 = vpack.c.b16 %v1946, %v1936
    %v2777 = vpack.c.b16 %v1947, %v1937
    %v2778 = vpack.c.b16 %v1948, %v1938
    %v2779 = vpack.c.b16 %v1949, %v1939
    %v2780 = vpack.c.b16 %v1950, %v1940
    %v2781 = vpack.c.b16 %v1961, %v1951
    %v2782 = vpack.c.b16 %v1962, %v1952
    %v2783 = vpack.c.b16 %v1963, %v1953
    %v2784 = vpack.c.b16 %v1964, %v1954
    %v2785 = vpack.c.b16 %v1965, %v1955
    %v2786 = vpack.c.b16 %v1966, %v1956
    %v2787 = vpack.c.b16 %v1967, %v1957
    %v2788 = vpack.c.b16 %v1968, %v1958
    %v2789 = vpack.c.b16 %v1969, %v1959
    %v2790 = vpack.c.b16 %v1970, %v1960
    %v2791 = vpack.c.b16 %v1981, %v1971
    %v2792 = vpack.c.b16 %v1982, %v1972
    %v2793 = vpack.c.b16 %v1983, %v1973
    %v2794 = vpack.c.b16 %v1984, %v1974
    %v2795 = vpack.c.b16 %v1985, %v1975
    %v2796 = vpack.c.b16 %v1986, %v1976
    %v2797 = vpack.c.b16 %v1987, %v1977
    %v2798 = vpack.c.b16 %v1988, %v1978
    %v2799 = vpack.c.b16 %v1989, %v1979
    %v2800 = vpack.c.b16 %v1990, %v1980
    %v2801 = vpack.c.b16 %v2001, %v1991
    %v2802 = vpack.c.b16 %v2002, %v1992
    %v2803 = vpack.c.b16 %v2003, %v1993
    %v2804 = vpack.c.b16 %v2004, %v1994
    %v2805 = vpack.c.b16 %v2005, %v1995
    %v2806 = vpack.c.b16 %v2006, %v1996
    %v2807 = vpack.c.b16 %v2007, %v1997
    %v2808 = vpack.c.b16 %v2008, %v1998
    %v2809 = vpack.c.b16 %v2009, %v1999
    %v2810 = vpack.c.b16 %v2010, %v2000
    %v2811 = vpack.c.b16 %v2021, %v2011
    %v2812 = vpack.c.b16 %v2022, %v2012
    %v2813 = vpack.c.b16 %v2023, %v2013
    %v2814 = vpack.c.b16 %v2024, %v2014
    %v2815 = vpack.c.b16 %v2025, %v2015
    %v2816 = vpack.c.b16 %v2026, %v2016
    %v2817 = vpack.c.b16 %v2027, %v2017
    %v2818 = vpack.c.b16 %v2028, %v2018
    %v2819 = vpack.c.b16 %v2029, %v2019
    %v2820 = vpack.c.b16 %v2030, %v2020
    %v2821 = vpack.c.b16 %v2041, %v2031
    %v2822 = vpack.c.b16 %v2042, %v2032
    %v2823 = vpack.c.b16 %v2043, %v2033
    %v2824 = vpack.c.b16 %v2044, %v2034
    %v2825 = vpack.c.b16 %v2045, %v2035
    %v2826 = vpack.c.b16 %v2046, %v2036
    %v2827 = vpack.c.b16 %v2047, %v2037
    %v2828 = vpack.c.b16 %v2048, %v2038
    %v2829 = vpack.c.b16 %v2049, %v2039
    %v2830 = vpack.c.b16 %v2050, %v2040
    %v2831 = vpack.c.b16 %v2061, %v2051
    %v2832 = vpack.c.b16 %v2062, %v2052
    %v2833 = vpack.c.b16 %v2063, %v2053
    %v2834 = vpack.c.b16 %v2064, %v2054
    %v2835 = vpack.c.b16 %v2065, %v2055
    %v2836 = vpack.c.b16 %v2066, %v2056
    %v2837 = vpack.c.b16 %v2067, %v2057
    %v2838 = vpack.c.b16 %v2068, %v2058
    %v2839 = vpack.c.b16 %v2069, %v2059
    %v2840 = vpack.c.b16 %v2070, %v2060
    %v2841 = vpack.c.b16 %v2081, %v2071
    %v2842 = vpack.c.b16 %v2082, %v2072
    %v2843 = vpack.c.b16 %v2083, %v2073
    %v2844 = vpack.c.b16 %v2084, %v2074
    %v2845 = vpack.c.b16 %v2085, %v2075
    %v2846 = vpack.c.b16 %v2086, %v2076
    %v2847 = vpack.c.b16 %v2087, %v2077
    %v2848 = vpack.c.b16 %v2088, %v2078
    %v2849 = vpack.c.b16 %v2089, %v2079
    %v2850 = vpack.c.b16 %v2090, %v2080
    %v2851 = vpack.c.b16 %v2101, %v2091
    %v2852 = vpack.c.b16 %v2102, %v2092
    %v2853 = vpack.c.b16 %v2103, %v2093
    %v2854 = vpack.c.b16 %v2104, %v2094
    %v2855 = vpack.c.b16 %v2105, %v2095
    %v2856 = vpack.c.b16 %v2106, %v2096
    %v2857 = vpack.c.b16 %v2107, %v2097
    %v2858 = vpack.c.b16 %v2108, %v2098
    %v2859 = vpack.c.b16 %v2109, %v2099
    %v2860 = vpack.c.b16 %v2110, %v2100
    %v2861 = vpack.c.b16 %v2121, %v2111
    %v2862 = vpack.c.b16 %v2122, %v2112
    %v2863 = vpack.c.b16 %v2123, %v2113
    %v2864 = vpack.c.b16 %v2124, %v2114
    %v2865 = vpack.c.b16 %v2125, %v2115
    %v2866 = vpack.c.b16 %v2126, %v2116
    %v2867 = vpack.c.b16 %v2127, %v2117
    %v2868 = vpack.c.b16 %v2128, %v2118
    %v2869 = vpack.c.b16 %v2129, %v2119
    %v2870 = vpack.c.b16 %v2130, %v2120
    %v2871 = vpack.c.b16 %v2141, %v2131
    %v2872 = vpack.c.b16 %v2142, %v2132
    %v2873 = vpack.c.b16 %v2143, %v2133
    %v2874 = vpack.c.b16 %v2144, %v2134
    %v2875 = vpack.c.b16 %v2145, %v2135
    %v2876 = vpack.c.b16 %v2146, %v2136
    %v2877 = vpack.c.b16 %v2147, %v2137
    %v2878 = vpack.c.b16 %v2148, %v2138
    %v2879 = vpack.c.b16 %v2149, %v2139
    %v2880 = vpack.c.b16 %v2150, %v2140
    %v2881 = vpack.c.b16 %v2161, %v2151
    %v2882 = vpack.c.b16 %v2162, %v2152
    %v2883 = vpack.c.b16 %v2163, %v2153
    %v2884 = vpack.c.b16 %v2164, %v2154
    %v2885 = vpack.c.b16 %v2165, %v2155
    %v2886 = vpack.c.b16 %v2166, %v2156
    %v2887 = vpack.c.b16 %v2167, %v2157
    %v2888 = vpack.c.b16 %v2168, %v2158
    %v2889 = vpack.c.b16 %v2169, %v2159
    %v2890 = vpack.c.b16 %v2170, %v2160
    %v2891 = vpack.c.b16 %v2181, %v2171
    %v2892 = vpack.c.b16 %v2182, %v2172
    %v2893 = vpack.c.b16 %v2183, %v2173
    %v2894 = vpack.c.b16 %v2184, %v2174
    %v2895 = vpack.c.b16 %v2185, %v2175
    %v2896 = vpack.c.b16 %v2186, %v2176
    %v2897 = vpack.c.b16 %v2187, %v2177
    %v2898 = vpack.c.b16 %v2188, %v2178
    %v2899 = vpack.c.b16 %v2189, %v2179
    %v2900 = vpack.c.b16 %v2190, %v2180
    %v2901 = vpack.c.b16 %v2201, %v2191
    %v2902 = vpack.c.b16 %v2202, %v2192
    %v2903 = vpack.c.b16 %v2203, %v2193
    %v2904 = vpack.c.b16 %v2204, %v2194
    %v2905 = vpack.c.b16 %v2205, %v2195
    %v2906 = vpack.c.b16 %v2206, %v2196
    %v2907 = vpack.c.b16 %v2207, %v2197
    %v2908 = vpack.c.b16 %v2208, %v2198
    %v2909 = vpack.c.b16 %v2209, %v2199
    %v2910 = vpack.c.b16 %v2210, %v2200
    %v2911 = vpack.c.b16 %v2221, %v2211
    %v2912 = vpack.c.b16 %v2222, %v2212
    %v2913 = vpack.c.b16 %v2223, %v2213
    %v2914 = vpack.c.b16 %v2224, %v2214
    %v2915 = vpack.c.b16 %v2225, %v2215
    %v2916 = vpack.c.b16 %v2226, %v2216
    %v2917 = vpack.c.b16 %v2227, %v2217
    %v2918 = vpack.c.b16 %v2228, %v2218
    %v2919 = vpack.c.b16 %v2229, %v2219
    %v2920 = vpack.c.b16 %v2230, %v2220
    %v2921 = vpack.c.b16 %v2241, %v2231
    %v2922 = vpack.c.b16 %v2242, %v2232
    %v2923 = vpack.c.b16 %v2243, %v2233
    %v2924 = vpack.c.b16 %v2244, %v2234
    %v2925 = vpack.c.b16 %v2245, %v2235
    %v2926 = vpack.c.b16 %v2246, %v2236
    %v2927 = vpack.c.b16 %v2247, %v2237
    %v2928 = vpack.c.b16 %v2248, %v2238
    %v2929 = vpack.c.b16 %v2249, %v2239
    %v2930 = vpack.c.b16 %v2250, %v2240
    %v2931 = vpack.c.b16 %v2261, %v2251
    %v2932 = vpack.c.b16 %v2262, %v2252
    %v2933 = vpack.c.b16 %v2263, %v2253
    %v2934 = vpack.c.b16 %v2264, %v2254
    %v2935 = vpack.c.b16 %v2265, %v2255
    %v2936 = vpack.c.b16 %v2266, %v2256
    %v2937 = vpack.c.b16 %v2267, %v2257
    %v2938 = vpack.c.b16 %v2268, %v2258
    %v2939 = vpack.c.b16 %v2269, %v2259
    %v2940 = vpack.c.b16 %v2270, %v2260
    %v2941 = vpack.c.b16 %v2281, %v2271
    %v2942 = vpack.c.b16 %v2282, %v2272
    %v2943 = vpack.c.b16 %v2283, %v2273
    %v2944 = vpack.c.b16 %v2284, %v2274
    %v2945 = vpack.c.b16 %v2285, %v2275
    %v2946 = vpack.c.b16 %v2286, %v2276
    %v2947 = vpack.c.b16 %v2287, %v2277
    %v2948 = vpack.c.b16 %v2288, %v2278
    %v2949 = vpack.c.b16 %v2289, %v2279
    %v2950 = vpack.c.b16 %v2290, %v2280
    %v2951 = vpack.c.b16 %v2301, %v2291
    %v2952 = vpack.c.b16 %v2302, %v2292
    %v2953 = vpack.c.b16 %v2303, %v2293
    %v2954 = vpack.c.b16 %v2304, %v2294
    %v2955 = vpack.c.b16 %v2305, %v2295
    %v2956 = vpack.c.b16 %v2306, %v2296
    %v2957 = vpack.c.b16 %v2307, %v2297
    %v2958 = vpack.c.b16 %v2308, %v2298
    %v2959 = vpack.c.b16 %v2309, %v2299
    %v2960 = vpack.c.b16 %v2310, %v2300
    %v2961 = vpack.c.b16 %v2321, %v2311
    %v2962 = vpack.c.b16 %v2322, %v2312
    %v2963 = vpack.c.b16 %v2323, %v2313
    %v2964 = vpack.c.b16 %v2324, %v2314
    %v2965 = vpack.c.b16 %v2325, %v2315
    %v2966 = vpack.c.b16 %v2326, %v2316
    %v2967 = vpack.c.b16 %v2327, %v2317
    %v2968 = vpack.c.b16 %v2328, %v2318
    %v2969 = vpack.c.b16 %v2329, %v2319
    %v2970 = vpack.c.b16 %v2330, %v2320
    %v2971 = vpack.c.b16 %v2341, %v2331
    %v2972 = vpack.c.b16 %v2342, %v2332
    %v2973 = vpack.c.b16 %v2343, %v2333
    %v2974 = vpack.c.b16 %v2344, %v2334
    %v2975 = vpack.c.b16 %v2345, %v2335
    %v2976 = vpack.c.b16 %v2346, %v2336
    %v2977 = vpack.c.b16 %v2347, %v2337
    %v2978 = vpack.c.b16 %v2348, %v2338
    %v2979 = vpack.c.b16 %v2349, %v2339
    %v2980 = vpack.c.b16 %v2350, %v2340
    %v2981 = vpack.c.b16 %v2361, %v2351
    %v2982 = vpack.c.b16 %v2362, %v2352
    %v2983 = vpack.c.b16 %v2363, %v2353
    %v2984 = vpack.c.b16 %v2364, %v2354
    %v2985 = vpack.c.b16 %v2365, %v2355
    %v2986 = vpack.c.b16 %v2366, %v2356
    %v2987 = vpack.c.b16 %v2367, %v2357
    %v2988 = vpack.c.b16 %v2368, %v2358
    %v2989 = vpack.c.b16 %v2369, %v2359
    %v2990 = vpack.c.b16 %v2370, %v2360
    %v2991 = vpack.c.b16 %v2381, %v2371
    %v2992 = vpack.c.b16 %v2382, %v2372
    %v2993 = vpack.c.b16 %v2383, %v2373
    %v2994 = vpack.c.b16 %v2384, %v2374
    %v2995 = vpack.c.b16 %v2385, %v2375
    %v2996 = vpack.c.b16 %v2386, %v2376
    %v2997 = vpack.c.b16 %v2387, %v2377
    %v2998 = vpack.c.b16 %v2388, %v2378
    %v2999 = vpack.c.b16 %v2389, %v2379
    %v3000 = vpack.c.b16 %v2390, %v2380
    %v3001 = vpack.c.b16 %v2401, %v2391
    %v3002 = vpack.c.b16 %v2402, %v2392
    %v3003 = vpack.c.b16 %v2403, %v2393
    %v3004 = vpack.c.b16 %v2404, %v2394
    %v3005 = vpack.c.b16 %v2405, %v2395
    %v3006 = vpack.c.b16 %v2406, %v2396
    %v3007 = vpack.c.b16 %v2407, %v2397
    %v3008 = vpack.c.b16 %v2408, %v2398
    %v3009 = vpack.c.b16 %v2409, %v2399
    %v3010 = vpack.c.b16 %v2410, %v2400
    %v3011 = vpack.c.b16 %v2421, %v2411
    %v3012 = vpack.c.b16 %v2422, %v2412
    %v3013 = vpack.c.b16 %v2423, %v2413
    %v3014 = vpack.c.b16 %v2424, %v2414
    %v3015 = vpack.c.b16 %v2425, %v2415
    %v3016 = vpack.c.b16 %v2426, %v2416
    %v3017 = vpack.c.b16 %v2427, %v2417
    %v3018 = vpack.c.b16 %v2428, %v2418
    %v3019 = vpack.c.b16 %v2429, %v2419
    %v3020 = vpack.c.b16 %v2430, %v2420
    %v3021 = vpack.c.b16 %v2441, %v2431
    %v3022 = vpack.c.b16 %v2442, %v2432
    %v3023 = vpack.c.b16 %v2443, %v2433
    %v3024 = vpack.c.b16 %v2444, %v2434
    %v3025 = vpack.c.b16 %v2445, %v2435
    %v3026 = vpack.c.b16 %v2446, %v2436
    %v3027 = vpack.c.b16 %v2447, %v2437
    %v3028 = vpack.c.b16 %v2448, %v2438
    %v3029 = vpack.c.b16 %v2449, %v2439
    %v3030 = vpack.c.b16 %v2450, %v2440
    %v3031 = vpack.c.b16 %v2461, %v2451
    %v3032 = vpack.c.b16 %v2462, %v2452
    %v3033 = vpack.c.b16 %v2463, %v2453
    %v3034 = vpack.c.b16 %v2464, %v2454
    %v3035 = vpack.c.b16 %v2465, %v2455
    %v3036 = vpack.c.b16 %v2466, %v2456
    %v3037 = vpack.c.b16 %v2467, %v2457
    %v3038 = vpack.c.b16 %v2468, %v2458
    %v3039 = vpack.c.b16 %v2469, %v2459
    %v3040 = vpack.c.b16 %v2470, %v2460
    %v3041 = vpack.c.b16 %v2481, %v2471
    %v3042 = vpack.c.b16 %v2482, %v2472
    %v3043 = vpack.c.b16 %v2483, %v2473
    %v3044 = vpack.c.b16 %v2484, %v2474
    %v3045 = vpack.c.b16 %v2485, %v2475
    %v3046 = vpack.c.b16 %v2486, %v2476
    %v3047 = vpack.c.b16 %v2487, %v2477
    %v3048 = vpack.c.b16 %v2488, %v2478
    %v3049 = vpack.c.b16 %v2489, %v2479
    %v3050 = vpack.c.b16 %v2490, %v2480
    %3611 = vmatpush.bf16.msra.mxu0 %v2561
    %3612 = vmatpush.bf16.msra.mxu0 %v2551
    %3613 = vmatpush.bf16.msra.mxu0 %v2541
    %3614 = vmatpush.bf16.msra.mxu0 %v2531
    %3615 = vmatpush.bf16.msra.mxu0 %v2521
    %3616 = vmatpush.bf16.msra.mxu0 %v2511
    %3617 = vmatpush.bf16.msra.mxu0 %v2501
    %3618 = vmatpush.bf16.msra.mxu0 %v2491
    %3619 = vmatmul.bf16.gmra.mxu0 %v797
    %v3620 = vpop.f32.mrf.mxu0
    %v3621 = vadd.f32 %v766, %v3620
    %v3622 = vpop.f32.mrf.mxu0
    %3623 = vdwg.mxu0
    %3624 = vmatpush.bf16.msra.mxu0 %v2641
    %3625 = vmatpush.bf16.msra.mxu0 %v2631
    %3626 = vmatpush.bf16.msra.mxu0 %v2621
    %3627 = vmatpush.bf16.msra.mxu0 %v2611
    %3628 = vmatpush.bf16.msra.mxu0 %v2601
    %3629 = vmatpush.bf16.msra.mxu0 %v2591
    %3630 = vmatpush.bf16.msra.mxu0 %v2581
    %3631 = vmatpush.bf16.msra.mxu0 %v2571
    %3632 = vmatmul.bf16.gmra.mxu0 %v798
    %v3633 = vpop.f32.mrf.mxu0
    %v3634 = vadd.f32 %v3621, %v3633
    %v3635 = vpop.f32.mrf.mxu0
    %3636 = vdwg.mxu0
    %3637 = vmatpush.bf16.msra.mxu0 %v2721
    %3638 = vmatpush.bf16.msra.mxu0 %v2711
    %3639 = vmatpush.bf16.msra.mxu0 %v2701
    %3640 = vmatpush.bf16.msra.mxu0 %v2691
    %3641 = vmatpush.bf16.msra.mxu0 %v2681
    %3642 = vmatpush.bf16.msra.mxu0 %v2671
    %3643 = vmatpush.bf16.msra.mxu0 %v2661
    %3644 = vmatpush.bf16.msra.mxu0 %v2651
    %3645 = vmatmul.bf16.gmra.mxu0 %v799
    %v3646 = vpop.f32.mrf.mxu0
    %v3647 = vadd.f32 %v3634, %v3646
    %v3648 = vpop.f32.mrf.mxu0
    %3649 = vdwg.mxu0
    %3650 = vmatpush.bf16.msra.mxu0 %v2801
    %3651 = vmatpush.bf16.msra.mxu0 %v2791
    %3652 = vmatpush.bf16.msra.mxu0 %v2781
    %3653 = vmatpush.bf16.msra.mxu0 %v2771
    %3654 = vmatpush.bf16.msra.mxu0 %v2761
    %3655 = vmatpush.bf16.msra.mxu0 %v2751
    %3656 = vmatpush.bf16.msra.mxu0 %v2741
    %3657 = vmatpush.bf16.msra.mxu0 %v2731
    %3658 = vmatmul.bf16.gmra.mxu0 %v800
    %v3659 = vpop.f32.mrf.mxu0
    %v3660 = vadd.f32 %v3647, %v3659
    %v3661 = vpop.f32.mrf.mxu0
    %3662 = vdwg.mxu0
    %3663 = vmatpush.bf16.msra.mxu0 %v2881
    %3664 = vmatpush.bf16.msra.mxu0 %v2871
    %3665 = vmatpush.bf16.msra.mxu0 %v2861
    %3666 = vmatpush.bf16.msra.mxu0 %v2851
    %3667 = vmatpush.bf16.msra.mxu0 %v2841
    %3668 = vmatpush.bf16.msra.mxu0 %v2831
    %3669 = vmatpush.bf16.msra.mxu0 %v2821
    %3670 = vmatpush.bf16.msra.mxu0 %v2811
    %3671 = vmatmul.bf16.gmra.mxu0 %v801
    %v3672 = vpop.f32.mrf.mxu0
    %v3673 = vadd.f32 %v3660, %v3672
    %v3674 = vpop.f32.mrf.mxu0
    %3675 = vdwg.mxu0
    %3676 = vmatpush.bf16.msra.mxu0 %v2961
    %3677 = vmatpush.bf16.msra.mxu0 %v2951
    %3678 = vmatpush.bf16.msra.mxu0 %v2941
    %3679 = vmatpush.bf16.msra.mxu0 %v2931
    %3680 = vmatpush.bf16.msra.mxu0 %v2921
    %3681 = vmatpush.bf16.msra.mxu0 %v2911
    %3682 = vmatpush.bf16.msra.mxu0 %v2901
    %3683 = vmatpush.bf16.msra.mxu0 %v2891
    %3684 = vmatmul.bf16.gmra.mxu0 %v802
    %v3685 = vpop.f32.mrf.mxu0
    %v3686 = vadd.f32 %v3673, %v3685
    %v3687 = vpop.f32.mrf.mxu0
    %3688 = vdwg.mxu0
    %3689 = vmatpush.bf16.msra.mxu0 %v3041
    %3690 = vmatpush.bf16.msra.mxu0 %v3031
    %3691 = vmatpush.bf16.msra.mxu0 %v3021
    %3692 = vmatpush.bf16.msra.mxu0 %v3011
    %3693 = vmatpush.bf16.msra.mxu0 %v3001
    %3694 = vmatpush.bf16.msra.mxu0 %v2991
    %3695 = vmatpush.bf16.msra.mxu0 %v2981
    %3696 = vmatpush.bf16.msra.mxu0 %v2971
    %3697 = vmatmul.bf16.gmra.mxu0 %v803
    %v3698 = vpop.f32.mrf.mxu0
    %v3699 = vadd.f32 %v3686, %v3698
    %v3700 = vpop.f32.mrf.mxu0
    %3701 = vdwg.mxu0
    %3702 = vmatpush.bf16.msra.mxu0 %v2562
    %3703 = vmatpush.bf16.msra.mxu0 %v2552
    %3704 = vmatpush.bf16.msra.mxu0 %v2542
    %3705 = vmatpush.bf16.msra.mxu0 %v2532
    %3706 = vmatpush.bf16.msra.mxu0 %v2522
    %3707 = vmatpush.bf16.msra.mxu0 %v2512
    %3708 = vmatpush.bf16.msra.mxu0 %v2502
    %3709 = vmatpush.bf16.msra.mxu0 %v2492
    %3710 = vmatmul.bf16.gmra.mxu0 %v797
    %v3711 = vpop.f32.mrf.mxu0
    %v3712 = vadd.f32 %v767, %v3711
    %v3713 = vpop.f32.mrf.mxu0
    %3714 = vdwg.mxu0
    %3715 = vmatpush.bf16.msra.mxu0 %v2642
    %3716 = vmatpush.bf16.msra.mxu0 %v2632
    %3717 = vmatpush.bf16.msra.mxu0 %v2622
    %3718 = vmatpush.bf16.msra.mxu0 %v2612
    %3719 = vmatpush.bf16.msra.mxu0 %v2602
    %3720 = vmatpush.bf16.msra.mxu0 %v2592
    %3721 = vmatpush.bf16.msra.mxu0 %v2582
    %3722 = vmatpush.bf16.msra.mxu0 %v2572
    %3723 = vmatmul.bf16.gmra.mxu0 %v798
    %v3724 = vpop.f32.mrf.mxu0
    %v3725 = vadd.f32 %v3712, %v3724
    %v3726 = vpop.f32.mrf.mxu0
    %3727 = vdwg.mxu0
    %3728 = vmatpush.bf16.msra.mxu0 %v2722
    %3729 = vmatpush.bf16.msra.mxu0 %v2712
    %3730 = vmatpush.bf16.msra.mxu0 %v2702
    %3731 = vmatpush.bf16.msra.mxu0 %v2692
    %3732 = vmatpush.bf16.msra.mxu0 %v2682
    %3733 = vmatpush.bf16.msra.mxu0 %v2672
    %3734 = vmatpush.bf16.msra.mxu0 %v2662
    %3735 = vmatpush.bf16.msra.mxu0 %v2652
    %3736 = vmatmul.bf16.gmra.mxu0 %v799
    %v3737 = vpop.f32.mrf.mxu0
    %v3738 = vadd.f32 %v3725, %v3737
    %v3739 = vpop.f32.mrf.mxu0
    %3740 = vdwg.mxu0
    %3741 = vmatpush.bf16.msra.mxu0 %v2802
    %3742 = vmatpush.bf16.msra.mxu0 %v2792
    %3743 = vmatpush.bf16.msra.mxu0 %v2782
    %3744 = vmatpush.bf16.msra.mxu0 %v2772
    %3745 = vmatpush.bf16.msra.mxu0 %v2762
    %3746 = vmatpush.bf16.msra.mxu0 %v2752
    %3747 = vmatpush.bf16.msra.mxu0 %v2742
    %3748 = vmatpush.bf16.msra.mxu0 %v2732
    %3749 = vmatmul.bf16.gmra.mxu0 %v800
    %v3750 = vpop.f32.mrf.mxu0
    %v3751 = vadd.f32 %v3738, %v3750
    %v3752 = vpop.f32.mrf.mxu0
    %3753 = vdwg.mxu0
    %3754 = vmatpush.bf16.msra.mxu0 %v2882
    %3755 = vmatpush.bf16.msra.mxu0 %v2872
    %3756 = vmatpush.bf16.msra.mxu0 %v2862
    %3757 = vmatpush.bf16.msra.mxu0 %v2852
    %3758 = vmatpush.bf16.msra.mxu0 %v2842
    %3759 = vmatpush.bf16.msra.mxu0 %v2832
    %3760 = vmatpush.bf16.msra.mxu0 %v2822
    %3761 = vmatpush.bf16.msra.mxu0 %v2812
    %3762 = vmatmul.bf16.gmra.mxu0 %v801
    %v3763 = vpop.f32.mrf.mxu0
    %v3764 = vadd.f32 %v3751, %v3763
    %v3765 = vpop.f32.mrf.mxu0
    %3766 = vdwg.mxu0
    %3767 = vmatpush.bf16.msra.mxu0 %v2962
    %3768 = vmatpush.bf16.msra.mxu0 %v2952
    %3769 = vmatpush.bf16.msra.mxu0 %v2942
    %3770 = vmatpush.bf16.msra.mxu0 %v2932
    %3771 = vmatpush.bf16.msra.mxu0 %v2922
    %3772 = vmatpush.bf16.msra.mxu0 %v2912
    %3773 = vmatpush.bf16.msra.mxu0 %v2902
    %3774 = vmatpush.bf16.msra.mxu0 %v2892
    %3775 = vmatmul.bf16.gmra.mxu0 %v802
    %v3776 = vpop.f32.mrf.mxu0
    %v3777 = vadd.f32 %v3764, %v3776
    %v3778 = vpop.f32.mrf.mxu0
    %3779 = vdwg.mxu0
    %3780 = vmatpush.bf16.msra.mxu0 %v3042
    %3781 = vmatpush.bf16.msra.mxu0 %v3032
    %3782 = vmatpush.bf16.msra.mxu0 %v3022
    %3783 = vmatpush.bf16.msra.mxu0 %v3012
    %3784 = vmatpush.bf16.msra.mxu0 %v3002
    %3785 = vmatpush.bf16.msra.mxu0 %v2992
    %3786 = vmatpush.bf16.msra.mxu0 %v2982
    %3787 = vmatpush.bf16.msra.mxu0 %v2972
    %3788 = vmatmul.bf16.gmra.mxu0 %v803
    %v3789 = vpop.f32.mrf.mxu0
    %v3790 = vadd.f32 %v3777, %v3789
    %v3791 = vpop.f32.mrf.mxu0
    %3792 = vdwg.mxu0
    %3793 = vmatpush.bf16.msra.mxu0 %v2563
    %3794 = vmatpush.bf16.msra.mxu0 %v2553
    %3795 = vmatpush.bf16.msra.mxu0 %v2543
    %3796 = vmatpush.bf16.msra.mxu0 %v2533
    %3797 = vmatpush.bf16.msra.mxu0 %v2523
    %3798 = vmatpush.bf16.msra.mxu0 %v2513
    %3799 = vmatpush.bf16.msra.mxu0 %v2503
    %3800 = vmatpush.bf16.msra.mxu0 %v2493
    %3801 = vmatmul.bf16.gmra.mxu0 %v797
    %v3802 = vpop.f32.mrf.mxu0
    %v3803 = vadd.f32 %v768, %v3802
    %v3804 = vpop.f32.mrf.mxu0
    %3805 = vdwg.mxu0
    %3806 = vmatpush.bf16.msra.mxu0 %v2643
    %3807 = vmatpush.bf16.msra.mxu0 %v2633
    %3808 = vmatpush.bf16.msra.mxu0 %v2623
    %3809 = vmatpush.bf16.msra.mxu0 %v2613
    %3810 = vmatpush.bf16.msra.mxu0 %v2603
    %3811 = vmatpush.bf16.msra.mxu0 %v2593
    %3812 = vmatpush.bf16.msra.mxu0 %v2583
    %3813 = vmatpush.bf16.msra.mxu0 %v2573
    %3814 = vmatmul.bf16.gmra.mxu0 %v798
    %v3815 = vpop.f32.mrf.mxu0
    %v3816 = vadd.f32 %v3803, %v3815
    %v3817 = vpop.f32.mrf.mxu0
    %3818 = vdwg.mxu0
    %3819 = vmatpush.bf16.msra.mxu0 %v2723
    %3820 = vmatpush.bf16.msra.mxu0 %v2713
    %3821 = vmatpush.bf16.msra.mxu0 %v2703
    %3822 = vmatpush.bf16.msra.mxu0 %v2693
    %3823 = vmatpush.bf16.msra.mxu0 %v2683
    %3824 = vmatpush.bf16.msra.mxu0 %v2673
    %3825 = vmatpush.bf16.msra.mxu0 %v2663
    %3826 = vmatpush.bf16.msra.mxu0 %v2653
    %3827 = vmatmul.bf16.gmra.mxu0 %v799
    %v3828 = vpop.f32.mrf.mxu0
    %v3829 = vadd.f32 %v3816, %v3828
    %v3830 = vpop.f32.mrf.mxu0
    %3831 = vdwg.mxu0
    %3832 = vmatpush.bf16.msra.mxu0 %v2803
    %3833 = vmatpush.bf16.msra.mxu0 %v2793
    %3834 = vmatpush.bf16.msra.mxu0 %v2783
    %3835 = vmatpush.bf16.msra.mxu0 %v2773
    %3836 = vmatpush.bf16.msra.mxu0 %v2763
    %3837 = vmatpush.bf16.msra.mxu0 %v2753
    %3838 = vmatpush.bf16.msra.mxu0 %v2743
    %3839 = vmatpush.bf16.msra.mxu0 %v2733
    %3840 = vmatmul.bf16.gmra.mxu0 %v800
    %v3841 = vpop.f32.mrf.mxu0
    %v3842 = vadd.f32 %v3829, %v3841
    %v3843 = vpop.f32.mrf.mxu0
    %3844 = vdwg.mxu0
    %3845 = vmatpush.bf16.msra.mxu0 %v2883
    %3846 = vmatpush.bf16.msra.mxu0 %v2873
    %3847 = vmatpush.bf16.msra.mxu0 %v2863
    %3848 = vmatpush.bf16.msra.mxu0 %v2853
    %3849 = vmatpush.bf16.msra.mxu0 %v2843
    %3850 = vmatpush.bf16.msra.mxu0 %v2833
    %3851 = vmatpush.bf16.msra.mxu0 %v2823
    %3852 = vmatpush.bf16.msra.mxu0 %v2813
    %3853 = vmatmul.bf16.gmra.mxu0 %v801
    %v3854 = vpop.f32.mrf.mxu0
    %v3855 = vadd.f32 %v3842, %v3854
    %v3856 = vpop.f32.mrf.mxu0
    %3857 = vdwg.mxu0
    %3858 = vmatpush.bf16.msra.mxu0 %v2963
    %3859 = vmatpush.bf16.msra.mxu0 %v2953
    %3860 = vmatpush.bf16.msra.mxu0 %v2943
    %3861 = vmatpush.bf16.msra.mxu0 %v2933
    %3862 = vmatpush.bf16.msra.mxu0 %v2923
    %3863 = vmatpush.bf16.msra.mxu0 %v2913
    %3864 = vmatpush.bf16.msra.mxu0 %v2903
    %3865 = vmatpush.bf16.msra.mxu0 %v2893
    %3866 = vmatmul.bf16.gmra.mxu0 %v802
    %v3867 = vpop.f32.mrf.mxu0
    %v3868 = vadd.f32 %v3855, %v3867
    %v3869 = vpop.f32.mrf.mxu0
    %3870 = vdwg.mxu0
    %3871 = vmatpush.bf16.msra.mxu0 %v3043
    %3872 = vmatpush.bf16.msra.mxu0 %v3033
    %3873 = vmatpush.bf16.msra.mxu0 %v3023
    %3874 = vmatpush.bf16.msra.mxu0 %v3013
    %3875 = vmatpush.bf16.msra.mxu0 %v3003
    %3876 = vmatpush.bf16.msra.mxu0 %v2993
    %3877 = vmatpush.bf16.msra.mxu0 %v2983
    %3878 = vmatpush.bf16.msra.mxu0 %v2973
    %3879 = vmatmul.bf16.gmra.mxu0 %v803
    %v3880 = vpop.f32.mrf.mxu0
    %v3881 = vadd.f32 %v3868, %v3880
    %v3882 = vpop.f32.mrf.mxu0
    %3883 = vdwg.mxu0
    %3884 = vmatpush.bf16.msra.mxu0 %v2564
    %3885 = vmatpush.bf16.msra.mxu0 %v2554
    %3886 = vmatpush.bf16.msra.mxu0 %v2544
    %3887 = vmatpush.bf16.msra.mxu0 %v2534
    %3888 = vmatpush.bf16.msra.mxu0 %v2524
    %3889 = vmatpush.bf16.msra.mxu0 %v2514
    %3890 = vmatpush.bf16.msra.mxu0 %v2504
    %3891 = vmatpush.bf16.msra.mxu0 %v2494
    %3892 = vmatmul.bf16.gmra.mxu0 %v797
    %v3893 = vpop.f32.mrf.mxu0
    %v3894 = vadd.f32 %v769, %v3893
    %v3895 = vpop.f32.mrf.mxu0
    %3896 = vdwg.mxu0
    %3897 = vmatpush.bf16.msra.mxu0 %v2644
    %3898 = vmatpush.bf16.msra.mxu0 %v2634
    %3899 = vmatpush.bf16.msra.mxu0 %v2624
    %3900 = vmatpush.bf16.msra.mxu0 %v2614
    %3901 = vmatpush.bf16.msra.mxu0 %v2604
    %3902 = vmatpush.bf16.msra.mxu0 %v2594
    %3903 = vmatpush.bf16.msra.mxu0 %v2584
    %3904 = vmatpush.bf16.msra.mxu0 %v2574
    %3905 = vmatmul.bf16.gmra.mxu0 %v798
    %v3906 = vpop.f32.mrf.mxu0
    %v3907 = vadd.f32 %v3894, %v3906
    %v3908 = vpop.f32.mrf.mxu0
    %3909 = vdwg.mxu0
    %3910 = vmatpush.bf16.msra.mxu0 %v2724
    %3911 = vmatpush.bf16.msra.mxu0 %v2714
    %3912 = vmatpush.bf16.msra.mxu0 %v2704
    %3913 = vmatpush.bf16.msra.mxu0 %v2694
    %3914 = vmatpush.bf16.msra.mxu0 %v2684
    %3915 = vmatpush.bf16.msra.mxu0 %v2674
    %3916 = vmatpush.bf16.msra.mxu0 %v2664
    %3917 = vmatpush.bf16.msra.mxu0 %v2654
    %3918 = vmatmul.bf16.gmra.mxu0 %v799
    %v3919 = vpop.f32.mrf.mxu0
    %v3920 = vadd.f32 %v3907, %v3919
    %v3921 = vpop.f32.mrf.mxu0
    %3922 = vdwg.mxu0
    %3923 = vmatpush.bf16.msra.mxu0 %v2804
    %3924 = vmatpush.bf16.msra.mxu0 %v2794
    %3925 = vmatpush.bf16.msra.mxu0 %v2784
    %3926 = vmatpush.bf16.msra.mxu0 %v2774
    %3927 = vmatpush.bf16.msra.mxu0 %v2764
    %3928 = vmatpush.bf16.msra.mxu0 %v2754
    %3929 = vmatpush.bf16.msra.mxu0 %v2744
    %3930 = vmatpush.bf16.msra.mxu0 %v2734
    %3931 = vmatmul.bf16.gmra.mxu0 %v800
    %v3932 = vpop.f32.mrf.mxu0
    %v3933 = vadd.f32 %v3920, %v3932
    %v3934 = vpop.f32.mrf.mxu0
    %3935 = vdwg.mxu0
    %3936 = vmatpush.bf16.msra.mxu0 %v2884
    %3937 = vmatpush.bf16.msra.mxu0 %v2874
    %3938 = vmatpush.bf16.msra.mxu0 %v2864
    %3939 = vmatpush.bf16.msra.mxu0 %v2854
    %3940 = vmatpush.bf16.msra.mxu0 %v2844
    %3941 = vmatpush.bf16.msra.mxu0 %v2834
    %3942 = vmatpush.bf16.msra.mxu0 %v2824
    %3943 = vmatpush.bf16.msra.mxu0 %v2814
    %3944 = vmatmul.bf16.gmra.mxu0 %v801
    %v3945 = vpop.f32.mrf.mxu0
    %v3946 = vadd.f32 %v3933, %v3945
    %v3947 = vpop.f32.mrf.mxu0
    %3948 = vdwg.mxu0
    %3949 = vmatpush.bf16.msra.mxu0 %v2964
    %3950 = vmatpush.bf16.msra.mxu0 %v2954
    %3951 = vmatpush.bf16.msra.mxu0 %v2944
    %3952 = vmatpush.bf16.msra.mxu0 %v2934
    %3953 = vmatpush.bf16.msra.mxu0 %v2924
    %3954 = vmatpush.bf16.msra.mxu0 %v2914
    %3955 = vmatpush.bf16.msra.mxu0 %v2904
    %3956 = vmatpush.bf16.msra.mxu0 %v2894
    %3957 = vmatmul.bf16.gmra.mxu0 %v802
    %v3958 = vpop.f32.mrf.mxu0
    %v3959 = vadd.f32 %v3946, %v3958
    %v3960 = vpop.f32.mrf.mxu0
    %3961 = vdwg.mxu0
    %3962 = vmatpush.bf16.msra.mxu0 %v3044
    %3963 = vmatpush.bf16.msra.mxu0 %v3034
    %3964 = vmatpush.bf16.msra.mxu0 %v3024
    %3965 = vmatpush.bf16.msra.mxu0 %v3014
    %3966 = vmatpush.bf16.msra.mxu0 %v3004
    %3967 = vmatpush.bf16.msra.mxu0 %v2994
    %3968 = vmatpush.bf16.msra.mxu0 %v2984
    %3969 = vmatpush.bf16.msra.mxu0 %v2974
    %3970 = vmatmul.bf16.gmra.mxu0 %v803
    %v3971 = vpop.f32.mrf.mxu0
    %v3972 = vadd.f32 %v3959, %v3971
    %v3973 = vpop.f32.mrf.mxu0
    %3974 = vdwg.mxu0
    %3975 = vmatpush.bf16.msra.mxu0 %v2565
    %3976 = vmatpush.bf16.msra.mxu0 %v2555
    %3977 = vmatpush.bf16.msra.mxu0 %v2545
    %3978 = vmatpush.bf16.msra.mxu0 %v2535
    %3979 = vmatpush.bf16.msra.mxu0 %v2525
    %3980 = vmatpush.bf16.msra.mxu0 %v2515
    %3981 = vmatpush.bf16.msra.mxu0 %v2505
    %3982 = vmatpush.bf16.msra.mxu0 %v2495
    %3983 = vmatmul.bf16.gmra.mxu0 %v797
    %v3984 = vpop.f32.mrf.mxu0
    %v3985 = vadd.f32 %v770, %v3984
    %v3986 = vpop.f32.mrf.mxu0
    %3987 = vdwg.mxu0
    %3988 = vmatpush.bf16.msra.mxu0 %v2645
    %3989 = vmatpush.bf16.msra.mxu0 %v2635
    %3990 = vmatpush.bf16.msra.mxu0 %v2625
    %3991 = vmatpush.bf16.msra.mxu0 %v2615
    %3992 = vmatpush.bf16.msra.mxu0 %v2605
    %3993 = vmatpush.bf16.msra.mxu0 %v2595
    %3994 = vmatpush.bf16.msra.mxu0 %v2585
    %3995 = vmatpush.bf16.msra.mxu0 %v2575
    %3996 = vmatmul.bf16.gmra.mxu0 %v798
    %v3997 = vpop.f32.mrf.mxu0
    %v3998 = vadd.f32 %v3985, %v3997
    %v3999 = vpop.f32.mrf.mxu0
    %4000 = vdwg.mxu0
    %4001 = vmatpush.bf16.msra.mxu0 %v2725
    %4002 = vmatpush.bf16.msra.mxu0 %v2715
    %4003 = vmatpush.bf16.msra.mxu0 %v2705
    %4004 = vmatpush.bf16.msra.mxu0 %v2695
    %4005 = vmatpush.bf16.msra.mxu0 %v2685
    %4006 = vmatpush.bf16.msra.mxu0 %v2675
    %4007 = vmatpush.bf16.msra.mxu0 %v2665
    %4008 = vmatpush.bf16.msra.mxu0 %v2655
    %4009 = vmatmul.bf16.gmra.mxu0 %v799
    %v4010 = vpop.f32.mrf.mxu0
    %v4011 = vadd.f32 %v3998, %v4010
    %v4012 = vpop.f32.mrf.mxu0
    %4013 = vdwg.mxu0
    %4014 = vmatpush.bf16.msra.mxu0 %v2805
    %4015 = vmatpush.bf16.msra.mxu0 %v2795
    %4016 = vmatpush.bf16.msra.mxu0 %v2785
    %4017 = vmatpush.bf16.msra.mxu0 %v2775
    %4018 = vmatpush.bf16.msra.mxu0 %v2765
    %4019 = vmatpush.bf16.msra.mxu0 %v2755
    %4020 = vmatpush.bf16.msra.mxu0 %v2745
    %4021 = vmatpush.bf16.msra.mxu0 %v2735
    %4022 = vmatmul.bf16.gmra.mxu0 %v800
    %v4023 = vpop.f32.mrf.mxu0
    %v4024 = vadd.f32 %v4011, %v4023
    %v4025 = vpop.f32.mrf.mxu0
    %4026 = vdwg.mxu0
    %4027 = vmatpush.bf16.msra.mxu0 %v2885
    %4028 = vmatpush.bf16.msra.mxu0 %v2875
    %4029 = vmatpush.bf16.msra.mxu0 %v2865
    %4030 = vmatpush.bf16.msra.mxu0 %v2855
    %4031 = vmatpush.bf16.msra.mxu0 %v2845
    %4032 = vmatpush.bf16.msra.mxu0 %v2835
    %4033 = vmatpush.bf16.msra.mxu0 %v2825
    %4034 = vmatpush.bf16.msra.mxu0 %v2815
    %4035 = vmatmul.bf16.gmra.mxu0 %v801
    %v4036 = vpop.f32.mrf.mxu0
    %v4037 = vadd.f32 %v4024, %v4036
    %v4038 = vpop.f32.mrf.mxu0
    %4039 = vdwg.mxu0
    %4040 = vmatpush.bf16.msra.mxu0 %v2965
    %4041 = vmatpush.bf16.msra.mxu0 %v2955
    %4042 = vmatpush.bf16.msra.mxu0 %v2945
    %4043 = vmatpush.bf16.msra.mxu0 %v2935
    %4044 = vmatpush.bf16.msra.mxu0 %v2925
    %4045 = vmatpush.bf16.msra.mxu0 %v2915
    %4046 = vmatpush.bf16.msra.mxu0 %v2905
    %4047 = vmatpush.bf16.msra.mxu0 %v2895
    %4048 = vmatmul.bf16.gmra.mxu0 %v802
    %v4049 = vpop.f32.mrf.mxu0
    %v4050 = vadd.f32 %v4037, %v4049
    %v4051 = vpop.f32.mrf.mxu0
    %4052 = vdwg.mxu0
    %4053 = vmatpush.bf16.msra.mxu0 %v3045
    %4054 = vmatpush.bf16.msra.mxu0 %v3035
    %4055 = vmatpush.bf16.msra.mxu0 %v3025
    %4056 = vmatpush.bf16.msra.mxu0 %v3015
    %4057 = vmatpush.bf16.msra.mxu0 %v3005
    %4058 = vmatpush.bf16.msra.mxu0 %v2995
    %4059 = vmatpush.bf16.msra.mxu0 %v2985
    %4060 = vmatpush.bf16.msra.mxu0 %v2975
    %4061 = vmatmul.bf16.gmra.mxu0 %v803
    %v4062 = vpop.f32.mrf.mxu0
    %v4063 = vadd.f32 %v4050, %v4062
    %v4064 = vpop.f32.mrf.mxu0
    %4065 = vdwg.mxu0
    %4066 = vmatpush.bf16.msra.mxu0 %v2566
    %4067 = vmatpush.bf16.msra.mxu0 %v2556
    %4068 = vmatpush.bf16.msra.mxu0 %v2546
    %4069 = vmatpush.bf16.msra.mxu0 %v2536
    %4070 = vmatpush.bf16.msra.mxu0 %v2526
    %4071 = vmatpush.bf16.msra.mxu0 %v2516
    %4072 = vmatpush.bf16.msra.mxu0 %v2506
    %4073 = vmatpush.bf16.msra.mxu0 %v2496
    %4074 = vmatmul.bf16.gmra.mxu0 %v797
    %v4075 = vpop.f32.mrf.mxu0
    %v4076 = vadd.f32 %v771, %v4075
    %v4077 = vpop.f32.mrf.mxu0
    %4078 = vdwg.mxu0
    %4079 = vmatpush.bf16.msra.mxu0 %v2646
    %4080 = vmatpush.bf16.msra.mxu0 %v2636
    %4081 = vmatpush.bf16.msra.mxu0 %v2626
    %4082 = vmatpush.bf16.msra.mxu0 %v2616
    %4083 = vmatpush.bf16.msra.mxu0 %v2606
    %4084 = vmatpush.bf16.msra.mxu0 %v2596
    %4085 = vmatpush.bf16.msra.mxu0 %v2586
    %4086 = vmatpush.bf16.msra.mxu0 %v2576
    %4087 = vmatmul.bf16.gmra.mxu0 %v798
    %v4088 = vpop.f32.mrf.mxu0
    %v4089 = vadd.f32 %v4076, %v4088
    %v4090 = vpop.f32.mrf.mxu0
    %4091 = vdwg.mxu0
    %4092 = vmatpush.bf16.msra.mxu0 %v2726
    %4093 = vmatpush.bf16.msra.mxu0 %v2716
    %4094 = vmatpush.bf16.msra.mxu0 %v2706
    %4095 = vmatpush.bf16.msra.mxu0 %v2696
    %4096 = vmatpush.bf16.msra.mxu0 %v2686
    %4097 = vmatpush.bf16.msra.mxu0 %v2676
    %4098 = vmatpush.bf16.msra.mxu0 %v2666
    %4099 = vmatpush.bf16.msra.mxu0 %v2656
    %4100 = vmatmul.bf16.gmra.mxu0 %v799
    %v4101 = vpop.f32.mrf.mxu0
    %v4102 = vadd.f32 %v4089, %v4101
    %v4103 = vpop.f32.mrf.mxu0
    %4104 = vdwg.mxu0
    %4105 = vmatpush.bf16.msra.mxu0 %v2806
    %4106 = vmatpush.bf16.msra.mxu0 %v2796
    %4107 = vmatpush.bf16.msra.mxu0 %v2786
    %4108 = vmatpush.bf16.msra.mxu0 %v2776
    %4109 = vmatpush.bf16.msra.mxu0 %v2766
    %4110 = vmatpush.bf16.msra.mxu0 %v2756
    %4111 = vmatpush.bf16.msra.mxu0 %v2746
    %4112 = vmatpush.bf16.msra.mxu0 %v2736
    %4113 = vmatmul.bf16.gmra.mxu0 %v800
    %v4114 = vpop.f32.mrf.mxu0
    %v4115 = vadd.f32 %v4102, %v4114
    %v4116 = vpop.f32.mrf.mxu0
    %4117 = vdwg.mxu0
    %4118 = vmatpush.bf16.msra.mxu0 %v2886
    %4119 = vmatpush.bf16.msra.mxu0 %v2876
    %4120 = vmatpush.bf16.msra.mxu0 %v2866
    %4121 = vmatpush.bf16.msra.mxu0 %v2856
    %4122 = vmatpush.bf16.msra.mxu0 %v2846
    %4123 = vmatpush.bf16.msra.mxu0 %v2836
    %4124 = vmatpush.bf16.msra.mxu0 %v2826
    %4125 = vmatpush.bf16.msra.mxu0 %v2816
    %4126 = vmatmul.bf16.gmra.mxu0 %v801
    %v4127 = vpop.f32.mrf.mxu0
    %v4128 = vadd.f32 %v4115, %v4127
    %v4129 = vpop.f32.mrf.mxu0
    %4130 = vdwg.mxu0
    %4131 = vmatpush.bf16.msra.mxu0 %v2966
    %4132 = vmatpush.bf16.msra.mxu0 %v2956
    %4133 = vmatpush.bf16.msra.mxu0 %v2946
    %4134 = vmatpush.bf16.msra.mxu0 %v2936
    %4135 = vmatpush.bf16.msra.mxu0 %v2926
    %4136 = vmatpush.bf16.msra.mxu0 %v2916
    %4137 = vmatpush.bf16.msra.mxu0 %v2906
    %4138 = vmatpush.bf16.msra.mxu0 %v2896
    %4139 = vmatmul.bf16.gmra.mxu0 %v802
    %v4140 = vpop.f32.mrf.mxu0
    %v4141 = vadd.f32 %v4128, %v4140
    %v4142 = vpop.f32.mrf.mxu0
    %4143 = vdwg.mxu0
    %4144 = vmatpush.bf16.msra.mxu0 %v3046
    %4145 = vmatpush.bf16.msra.mxu0 %v3036
    %4146 = vmatpush.bf16.msra.mxu0 %v3026
    %4147 = vmatpush.bf16.msra.mxu0 %v3016
    %4148 = vmatpush.bf16.msra.mxu0 %v3006
    %4149 = vmatpush.bf16.msra.mxu0 %v2996
    %4150 = vmatpush.bf16.msra.mxu0 %v2986
    %4151 = vmatpush.bf16.msra.mxu0 %v2976
    %4152 = vmatmul.bf16.gmra.mxu0 %v803
    %v4153 = vpop.f32.mrf.mxu0
    %v4154 = vadd.f32 %v4141, %v4153
    %v4155 = vpop.f32.mrf.mxu0
    %4156 = vdwg.mxu0
    %4157 = vmatpush.bf16.msra.mxu0 %v2567
    %4158 = vmatpush.bf16.msra.mxu0 %v2557
    %4159 = vmatpush.bf16.msra.mxu0 %v2547
    %4160 = vmatpush.bf16.msra.mxu0 %v2537
    %4161 = vmatpush.bf16.msra.mxu0 %v2527
    %4162 = vmatpush.bf16.msra.mxu0 %v2517
    %4163 = vmatpush.bf16.msra.mxu0 %v2507
    %4164 = vmatpush.bf16.msra.mxu0 %v2497
    %4165 = vmatmul.bf16.gmra.mxu0 %v797
    %v4166 = vpop.f32.mrf.mxu0
    %v4167 = vadd.f32 %v772, %v4166
    %v4168 = vpop.f32.mrf.mxu0
    %4169 = vdwg.mxu0
    %4170 = vmatpush.bf16.msra.mxu0 %v2647
    %4171 = vmatpush.bf16.msra.mxu0 %v2637
    %4172 = vmatpush.bf16.msra.mxu0 %v2627
    %4173 = vmatpush.bf16.msra.mxu0 %v2617
    %4174 = vmatpush.bf16.msra.mxu0 %v2607
    %4175 = vmatpush.bf16.msra.mxu0 %v2597
    %4176 = vmatpush.bf16.msra.mxu0 %v2587
    %4177 = vmatpush.bf16.msra.mxu0 %v2577
    %4178 = vmatmul.bf16.gmra.mxu0 %v798
    %v4179 = vpop.f32.mrf.mxu0
    %v4180 = vadd.f32 %v4167, %v4179
    %v4181 = vpop.f32.mrf.mxu0
    %4182 = vdwg.mxu0
    %4183 = vmatpush.bf16.msra.mxu0 %v2727
    %4184 = vmatpush.bf16.msra.mxu0 %v2717
    %4185 = vmatpush.bf16.msra.mxu0 %v2707
    %4186 = vmatpush.bf16.msra.mxu0 %v2697
    %4187 = vmatpush.bf16.msra.mxu0 %v2687
    %4188 = vmatpush.bf16.msra.mxu0 %v2677
    %4189 = vmatpush.bf16.msra.mxu0 %v2667
    %4190 = vmatpush.bf16.msra.mxu0 %v2657
    %4191 = vmatmul.bf16.gmra.mxu0 %v799
    %v4192 = vpop.f32.mrf.mxu0
    %v4193 = vadd.f32 %v4180, %v4192
    %v4194 = vpop.f32.mrf.mxu0
    %4195 = vdwg.mxu0
    %4196 = vmatpush.bf16.msra.mxu0 %v2807
    %4197 = vmatpush.bf16.msra.mxu0 %v2797
    %4198 = vmatpush.bf16.msra.mxu0 %v2787
    %4199 = vmatpush.bf16.msra.mxu0 %v2777
    %4200 = vmatpush.bf16.msra.mxu0 %v2767
    %4201 = vmatpush.bf16.msra.mxu0 %v2757
    %4202 = vmatpush.bf16.msra.mxu0 %v2747
    %4203 = vmatpush.bf16.msra.mxu0 %v2737
    %4204 = vmatmul.bf16.gmra.mxu0 %v800
    %v4205 = vpop.f32.mrf.mxu0
    %v4206 = vadd.f32 %v4193, %v4205
    %v4207 = vpop.f32.mrf.mxu0
    %4208 = vdwg.mxu0
    %4209 = vmatpush.bf16.msra.mxu0 %v2887
    %4210 = vmatpush.bf16.msra.mxu0 %v2877
    %4211 = vmatpush.bf16.msra.mxu0 %v2867
    %4212 = vmatpush.bf16.msra.mxu0 %v2857
    %4213 = vmatpush.bf16.msra.mxu0 %v2847
    %4214 = vmatpush.bf16.msra.mxu0 %v2837
    %4215 = vmatpush.bf16.msra.mxu0 %v2827
    %4216 = vmatpush.bf16.msra.mxu0 %v2817
    %4217 = vmatmul.bf16.gmra.mxu0 %v801
    %v4218 = vpop.f32.mrf.mxu0
    %v4219 = vadd.f32 %v4206, %v4218
    %v4220 = vpop.f32.mrf.mxu0
    %4221 = vdwg.mxu0
    %4222 = vmatpush.bf16.msra.mxu0 %v2967
    %4223 = vmatpush.bf16.msra.mxu0 %v2957
    %4224 = vmatpush.bf16.msra.mxu0 %v2947
    %4225 = vmatpush.bf16.msra.mxu0 %v2937
    %4226 = vmatpush.bf16.msra.mxu0 %v2927
    %4227 = vmatpush.bf16.msra.mxu0 %v2917
    %4228 = vmatpush.bf16.msra.mxu0 %v2907
    %4229 = vmatpush.bf16.msra.mxu0 %v2897
    %4230 = vmatmul.bf16.gmra.mxu0 %v802
    %v4231 = vpop.f32.mrf.mxu0
    %v4232 = vadd.f32 %v4219, %v4231
    %v4233 = vpop.f32.mrf.mxu0
    %4234 = vdwg.mxu0
    %4235 = vmatpush.bf16.msra.mxu0 %v3047
    %4236 = vmatpush.bf16.msra.mxu0 %v3037
    %4237 = vmatpush.bf16.msra.mxu0 %v3027
    %4238 = vmatpush.bf16.msra.mxu0 %v3017
    %4239 = vmatpush.bf16.msra.mxu0 %v3007
    %4240 = vmatpush.bf16.msra.mxu0 %v2997
    %4241 = vmatpush.bf16.msra.mxu0 %v2987
    %4242 = vmatpush.bf16.msra.mxu0 %v2977
    %4243 = vmatmul.bf16.gmra.mxu0 %v803
    %v4244 = vpop.f32.mrf.mxu0
    %v4245 = vadd.f32 %v4232, %v4244
    %v4246 = vpop.f32.mrf.mxu0
    %4247 = vdwg.mxu0
    %4248 = vmatpush.bf16.msra.mxu0 %v2568
    %4249 = vmatpush.bf16.msra.mxu0 %v2558
    %4250 = vmatpush.bf16.msra.mxu0 %v2548
    %4251 = vmatpush.bf16.msra.mxu0 %v2538
    %4252 = vmatpush.bf16.msra.mxu0 %v2528
    %4253 = vmatpush.bf16.msra.mxu0 %v2518
    %4254 = vmatpush.bf16.msra.mxu0 %v2508
    %4255 = vmatpush.bf16.msra.mxu0 %v2498
    %4256 = vmatmul.bf16.gmra.mxu0 %v797
    %v4257 = vpop.f32.mrf.mxu0
    %v4258 = vadd.f32 %v773, %v4257
    %v4259 = vpop.f32.mrf.mxu0
    %4260 = vdwg.mxu0
    %4261 = vmatpush.bf16.msra.mxu0 %v2648
    %4262 = vmatpush.bf16.msra.mxu0 %v2638
    %4263 = vmatpush.bf16.msra.mxu0 %v2628
    %4264 = vmatpush.bf16.msra.mxu0 %v2618
    %4265 = vmatpush.bf16.msra.mxu0 %v2608
    %4266 = vmatpush.bf16.msra.mxu0 %v2598
    %4267 = vmatpush.bf16.msra.mxu0 %v2588
    %4268 = vmatpush.bf16.msra.mxu0 %v2578
    %4269 = vmatmul.bf16.gmra.mxu0 %v798
    %v4270 = vpop.f32.mrf.mxu0
    %v4271 = vadd.f32 %v4258, %v4270
    %v4272 = vpop.f32.mrf.mxu0
    %4273 = vdwg.mxu0
    %4274 = vmatpush.bf16.msra.mxu0 %v2728
    %4275 = vmatpush.bf16.msra.mxu0 %v2718
    %4276 = vmatpush.bf16.msra.mxu0 %v2708
    %4277 = vmatpush.bf16.msra.mxu0 %v2698
    %4278 = vmatpush.bf16.msra.mxu0 %v2688
    %4279 = vmatpush.bf16.msra.mxu0 %v2678
    %4280 = vmatpush.bf16.msra.mxu0 %v2668
    %4281 = vmatpush.bf16.msra.mxu0 %v2658
    %4282 = vmatmul.bf16.gmra.mxu0 %v799
    %v4283 = vpop.f32.mrf.mxu0
    %v4284 = vadd.f32 %v4271, %v4283
    %v4285 = vpop.f32.mrf.mxu0
    %4286 = vdwg.mxu0
    %4287 = vmatpush.bf16.msra.mxu0 %v2808
    %4288 = vmatpush.bf16.msra.mxu0 %v2798
    %4289 = vmatpush.bf16.msra.mxu0 %v2788
    %4290 = vmatpush.bf16.msra.mxu0 %v2778
    %4291 = vmatpush.bf16.msra.mxu0 %v2768
    %4292 = vmatpush.bf16.msra.mxu0 %v2758
    %4293 = vmatpush.bf16.msra.mxu0 %v2748
    %4294 = vmatpush.bf16.msra.mxu0 %v2738
    %4295 = vmatmul.bf16.gmra.mxu0 %v800
    %v4296 = vpop.f32.mrf.mxu0
    %v4297 = vadd.f32 %v4284, %v4296
    %v4298 = vpop.f32.mrf.mxu0
    %4299 = vdwg.mxu0
    %4300 = vmatpush.bf16.msra.mxu0 %v2888
    %4301 = vmatpush.bf16.msra.mxu0 %v2878
    %4302 = vmatpush.bf16.msra.mxu0 %v2868
    %4303 = vmatpush.bf16.msra.mxu0 %v2858
    %4304 = vmatpush.bf16.msra.mxu0 %v2848
    %4305 = vmatpush.bf16.msra.mxu0 %v2838
    %4306 = vmatpush.bf16.msra.mxu0 %v2828
    %4307 = vmatpush.bf16.msra.mxu0 %v2818
    %4308 = vmatmul.bf16.gmra.mxu0 %v801
    %v4309 = vpop.f32.mrf.mxu0
    %v4310 = vadd.f32 %v4297, %v4309
    %v4311 = vpop.f32.mrf.mxu0
    %4312 = vdwg.mxu0
    %4313 = vmatpush.bf16.msra.mxu0 %v2968
    %4314 = vmatpush.bf16.msra.mxu0 %v2958
    %4315 = vmatpush.bf16.msra.mxu0 %v2948
    %4316 = vmatpush.bf16.msra.mxu0 %v2938
    %4317 = vmatpush.bf16.msra.mxu0 %v2928
    %4318 = vmatpush.bf16.msra.mxu0 %v2918
    %4319 = vmatpush.bf16.msra.mxu0 %v2908
    %4320 = vmatpush.bf16.msra.mxu0 %v2898
    %4321 = vmatmul.bf16.gmra.mxu0 %v802
    %v4322 = vpop.f32.mrf.mxu0
    %v4323 = vadd.f32 %v4310, %v4322
    %v4324 = vpop.f32.mrf.mxu0
    %4325 = vdwg.mxu0
    %4326 = vmatpush.bf16.msra.mxu0 %v3048
    %4327 = vmatpush.bf16.msra.mxu0 %v3038
    %4328 = vmatpush.bf16.msra.mxu0 %v3028
    %4329 = vmatpush.bf16.msra.mxu0 %v3018
    %4330 = vmatpush.bf16.msra.mxu0 %v3008
    %4331 = vmatpush.bf16.msra.mxu0 %v2998
    %4332 = vmatpush.bf16.msra.mxu0 %v2988
    %4333 = vmatpush.bf16.msra.mxu0 %v2978
    %4334 = vmatmul.bf16.gmra.mxu0 %v803
    %v4335 = vpop.f32.mrf.mxu0
    %v4336 = vadd.f32 %v4323, %v4335
    %v4337 = vpop.f32.mrf.mxu0
    %4338 = vdwg.mxu0
    %4339 = vmatpush.bf16.msra.mxu0 %v2569
    %4340 = vmatpush.bf16.msra.mxu0 %v2559
    %4341 = vmatpush.bf16.msra.mxu0 %v2549
    %4342 = vmatpush.bf16.msra.mxu0 %v2539
    %4343 = vmatpush.bf16.msra.mxu0 %v2529
    %4344 = vmatpush.bf16.msra.mxu0 %v2519
    %4345 = vmatpush.bf16.msra.mxu0 %v2509
    %4346 = vmatpush.bf16.msra.mxu0 %v2499
    %4347 = vmatmul.bf16.gmra.mxu0 %v797
    %v4348 = vpop.f32.mrf.mxu0
    %v4349 = vadd.f32 %v774, %v4348
    %v4350 = vpop.f32.mrf.mxu0
    %4351 = vdwg.mxu0
    %4352 = vmatpush.bf16.msra.mxu0 %v2649
    %4353 = vmatpush.bf16.msra.mxu0 %v2639
    %4354 = vmatpush.bf16.msra.mxu0 %v2629
    %4355 = vmatpush.bf16.msra.mxu0 %v2619
    %4356 = vmatpush.bf16.msra.mxu0 %v2609
    %4357 = vmatpush.bf16.msra.mxu0 %v2599
    %4358 = vmatpush.bf16.msra.mxu0 %v2589
    %4359 = vmatpush.bf16.msra.mxu0 %v2579
    %4360 = vmatmul.bf16.gmra.mxu0 %v798
    %v4361 = vpop.f32.mrf.mxu0
    %v4362 = vadd.f32 %v4349, %v4361
    %v4363 = vpop.f32.mrf.mxu0
    %4364 = vdwg.mxu0
    %4365 = vmatpush.bf16.msra.mxu0 %v2729
    %4366 = vmatpush.bf16.msra.mxu0 %v2719
    %4367 = vmatpush.bf16.msra.mxu0 %v2709
    %4368 = vmatpush.bf16.msra.mxu0 %v2699
    %4369 = vmatpush.bf16.msra.mxu0 %v2689
    %4370 = vmatpush.bf16.msra.mxu0 %v2679
    %4371 = vmatpush.bf16.msra.mxu0 %v2669
    %4372 = vmatpush.bf16.msra.mxu0 %v2659
    %4373 = vmatmul.bf16.gmra.mxu0 %v799
    %v4374 = vpop.f32.mrf.mxu0
    %v4375 = vadd.f32 %v4362, %v4374
    %v4376 = vpop.f32.mrf.mxu0
    %4377 = vdwg.mxu0
    %4378 = vmatpush.bf16.msra.mxu0 %v2809
    %4379 = vmatpush.bf16.msra.mxu0 %v2799
    %4380 = vmatpush.bf16.msra.mxu0 %v2789
    %4381 = vmatpush.bf16.msra.mxu0 %v2779
    %4382 = vmatpush.bf16.msra.mxu0 %v2769
    %4383 = vmatpush.bf16.msra.mxu0 %v2759
    %4384 = vmatpush.bf16.msra.mxu0 %v2749
    %4385 = vmatpush.bf16.msra.mxu0 %v2739
    %4386 = vmatmul.bf16.gmra.mxu0 %v800
    %v4387 = vpop.f32.mrf.mxu0
    %v4388 = vadd.f32 %v4375, %v4387
    %v4389 = vpop.f32.mrf.mxu0
    %4390 = vdwg.mxu0
    %4391 = vmatpush.bf16.msra.mxu0 %v2889
    %4392 = vmatpush.bf16.msra.mxu0 %v2879
    %4393 = vmatpush.bf16.msra.mxu0 %v2869
    %4394 = vmatpush.bf16.msra.mxu0 %v2859
    %4395 = vmatpush.bf16.msra.mxu0 %v2849
    %4396 = vmatpush.bf16.msra.mxu0 %v2839
    %4397 = vmatpush.bf16.msra.mxu0 %v2829
    %4398 = vmatpush.bf16.msra.mxu0 %v2819
    %4399 = vmatmul.bf16.gmra.mxu0 %v801
    %v4400 = vpop.f32.mrf.mxu0
    %v4401 = vadd.f32 %v4388, %v4400
    %v4402 = vpop.f32.mrf.mxu0
    %4403 = vdwg.mxu0
    %4404 = vmatpush.bf16.msra.mxu0 %v2969
    %4405 = vmatpush.bf16.msra.mxu0 %v2959
    %4406 = vmatpush.bf16.msra.mxu0 %v2949
    %4407 = vmatpush.bf16.msra.mxu0 %v2939
    %4408 = vmatpush.bf16.msra.mxu0 %v2929
    %4409 = vmatpush.bf16.msra.mxu0 %v2919
    %4410 = vmatpush.bf16.msra.mxu0 %v2909
    %4411 = vmatpush.bf16.msra.mxu0 %v2899
    %4412 = vmatmul.bf16.gmra.mxu0 %v802
    %v4413 = vpop.f32.mrf.mxu0
    %v4414 = vadd.f32 %v4401, %v4413
    %v4415 = vpop.f32.mrf.mxu0
    %4416 = vdwg.mxu0
    %4417 = vmatpush.bf16.msra.mxu0 %v3049
    %4418 = vmatpush.bf16.msra.mxu0 %v3039
    %4419 = vmatpush.bf16.msra.mxu0 %v3029
    %4420 = vmatpush.bf16.msra.mxu0 %v3019
    %4421 = vmatpush.bf16.msra.mxu0 %v3009
    %4422 = vmatpush.bf16.msra.mxu0 %v2999
    %4423 = vmatpush.bf16.msra.mxu0 %v2989
    %4424 = vmatpush.bf16.msra.mxu0 %v2979
    %4425 = vmatmul.bf16.gmra.mxu0 %v803
    %v4426 = vpop.f32.mrf.mxu0
    %v4427 = vadd.f32 %v4414, %v4426
    %v4428 = vpop.f32.mrf.mxu0
    %4429 = vdwg.mxu0
    %4430 = vmatpush.bf16.msra.mxu0 %v2570
    %4431 = vmatpush.bf16.msra.mxu0 %v2560
    %4432 = vmatpush.bf16.msra.mxu0 %v2550
    %4433 = vmatpush.bf16.msra.mxu0 %v2540
    %4434 = vmatpush.bf16.msra.mxu0 %v2530
    %4435 = vmatpush.bf16.msra.mxu0 %v2520
    %4436 = vmatpush.bf16.msra.mxu0 %v2510
    %4437 = vmatpush.bf16.msra.mxu0 %v2500
    %4438 = vmatmul.bf16.gmra.mxu0 %v797
    %v4439 = vpop.f32.mrf.mxu0
    %v4440 = vadd.f32 %v775, %v4439
    %v4441 = vpop.f32.mrf.mxu0
    %4442 = vdwg.mxu0
    %4443 = vmatpush.bf16.msra.mxu0 %v2650
    %4444 = vmatpush.bf16.msra.mxu0 %v2640
    %4445 = vmatpush.bf16.msra.mxu0 %v2630
    %4446 = vmatpush.bf16.msra.mxu0 %v2620
    %4447 = vmatpush.bf16.msra.mxu0 %v2610
    %4448 = vmatpush.bf16.msra.mxu0 %v2600
    %4449 = vmatpush.bf16.msra.mxu0 %v2590
    %4450 = vmatpush.bf16.msra.mxu0 %v2580
    %4451 = vmatmul.bf16.gmra.mxu0 %v798
    %v4452 = vpop.f32.mrf.mxu0
    %v4453 = vadd.f32 %v4440, %v4452
    %v4454 = vpop.f32.mrf.mxu0
    %4455 = vdwg.mxu0
    %4456 = vmatpush.bf16.msra.mxu0 %v2730
    %4457 = vmatpush.bf16.msra.mxu0 %v2720
    %4458 = vmatpush.bf16.msra.mxu0 %v2710
    %4459 = vmatpush.bf16.msra.mxu0 %v2700
    %4460 = vmatpush.bf16.msra.mxu0 %v2690
    %4461 = vmatpush.bf16.msra.mxu0 %v2680
    %4462 = vmatpush.bf16.msra.mxu0 %v2670
    %4463 = vmatpush.bf16.msra.mxu0 %v2660
    %4464 = vmatmul.bf16.gmra.mxu0 %v799
    %v4465 = vpop.f32.mrf.mxu0
    %v4466 = vadd.f32 %v4453, %v4465
    %v4467 = vpop.f32.mrf.mxu0
    %4468 = vdwg.mxu0
    %4469 = vmatpush.bf16.msra.mxu0 %v2810
    %4470 = vmatpush.bf16.msra.mxu0 %v2800
    %4471 = vmatpush.bf16.msra.mxu0 %v2790
    %4472 = vmatpush.bf16.msra.mxu0 %v2780
    %4473 = vmatpush.bf16.msra.mxu0 %v2770
    %4474 = vmatpush.bf16.msra.mxu0 %v2760
    %4475 = vmatpush.bf16.msra.mxu0 %v2750
    %4476 = vmatpush.bf16.msra.mxu0 %v2740
    %4477 = vmatmul.bf16.gmra.mxu0 %v800
    %v4478 = vpop.f32.mrf.mxu0
    %v4479 = vadd.f32 %v4466, %v4478
    %v4480 = vpop.f32.mrf.mxu0
    %4481 = vdwg.mxu0
    %4482 = vmatpush.bf16.msra.mxu0 %v2890
    %4483 = vmatpush.bf16.msra.mxu0 %v2880
    %4484 = vmatpush.bf16.msra.mxu0 %v2870
    %4485 = vmatpush.bf16.msra.mxu0 %v2860
    %4486 = vmatpush.bf16.msra.mxu0 %v2850
    %4487 = vmatpush.bf16.msra.mxu0 %v2840
    %4488 = vmatpush.bf16.msra.mxu0 %v2830
    %4489 = vmatpush.bf16.msra.mxu0 %v2820
    %4490 = vmatmul.bf16.gmra.mxu0 %v801
    %v4491 = vpop.f32.mrf.mxu0
    %v4492 = vadd.f32 %v4479, %v4491
    %v4493 = vpop.f32.mrf.mxu0
    %4494 = vdwg.mxu0
    %4495 = vmatpush.bf16.msra.mxu0 %v2970
    %4496 = vmatpush.bf16.msra.mxu0 %v2960
    %4497 = vmatpush.bf16.msra.mxu0 %v2950
    %4498 = vmatpush.bf16.msra.mxu0 %v2940
    %4499 = vmatpush.bf16.msra.mxu0 %v2930
    %4500 = vmatpush.bf16.msra.mxu0 %v2920
    %4501 = vmatpush.bf16.msra.mxu0 %v2910
    %4502 = vmatpush.bf16.msra.mxu0 %v2900
    %4503 = vmatmul.bf16.gmra.mxu0 %v802
    %v4504 = vpop.f32.mrf.mxu0
    %v4505 = vadd.f32 %v4492, %v4504
    %v4506 = vpop.f32.mrf.mxu0
    %4507 = vdwg.mxu0
    %4508 = vmatpush.bf16.msra.mxu0 %v3050
    %4509 = vmatpush.bf16.msra.mxu0 %v3040
    %4510 = vmatpush.bf16.msra.mxu0 %v3030
    %4511 = vmatpush.bf16.msra.mxu0 %v3020
    %4512 = vmatpush.bf16.msra.mxu0 %v3010
    %4513 = vmatpush.bf16.msra.mxu0 %v3000
    %4514 = vmatpush.bf16.msra.mxu0 %v2990
    %4515 = vmatpush.bf16.msra.mxu0 %v2980
    %4516 = vmatmul.bf16.gmra.mxu0 %v803
    %v4517 = vpop.f32.mrf.mxu0
    %v4518 = vadd.f32 %v4505, %v4517
    %v4519 = vpop.f32.mrf.mxu0
    %4520 = vdwg.mxu0
    %v4521 = vtanh.pop %v3699
    %v4522 = vtanh.pop %v3790
    %v4523 = vtanh.pop %v3881
    %v4524 = vtanh.pop %v3972
    %v4525 = vtanh.pop %v4063
    %v4526 = vtanh.pop %v4154
    %v4527 = vtanh.pop %v4245
    %v4528 = vtanh.pop %v4336
    %v4529 = vtanh.pop %v4427
    %v4530 = vtanh.pop %v4518
    %v4531 = vpack.c.bf16 %v4521, %v4521
    %v4532 = vpack.c.bf16 %v4522, %v4522
    %v4533 = vpack.c.bf16 %v4523, %v4523
    %v4534 = vpack.c.bf16 %v4524, %v4524
    %v4535 = vpack.c.bf16 %v4525, %v4525
    %v4536 = vpack.c.bf16 %v4526, %v4526
    %v4537 = vpack.c.bf16 %v4527, %v4527
    %v4538 = vpack.c.bf16 %v4528, %v4528
    %v4539 = vpack.c.bf16 %v4529, %v4529
    %v4540 = vpack.c.bf16 %v4530, %v4530
    %v4541 = vld [vmem:[#allocation8] sm:$0xff]
    %v4542 = vld [vmem:[#allocation8 + $0x8] sm:$0xff]
    %v4543 = vld [vmem:[#allocation8 + $0x10] sm:$0xff]
    %v4544 = vld [vmem:[#allocation8 + $0x18] sm:$0xff]
    %v4545 = vld [vmem:[#allocation8 + $0x20] sm:$0xff]
    %v4546 = vld [vmem:[#allocation8 + $0x28] sm:$0xff]
    %v4547 = vld [vmem:[#allocation8 + $0x30] sm:$0xff]
    %v4548 = vld [vmem:[#allocation8 + $0x38] sm:$0xff]
    %v4549 = vld [vmem:[#allocation8 + $0x40] sm:$0xff]
    %v4550 = vld [vmem:[#allocation8 + $0x48] sm:$0xff]
    %v4551 = vld [vmem:[#allocation8 + $0x50] sm:$0xff]
    %v4552 = vld [vmem:[#allocation8 + $0x58] sm:$0xff]
    %v4553 = vld [vmem:[#allocation8 + $0x60] sm:$0xff]
    %v4554 = vld [vmem:[#allocation8 + $0x68] sm:$0xff]
    %v4555 = vld [vmem:[#allocation8 + $0x70] sm:$0xff]
    %v4556 = vld [vmem:[#allocation8 + $0x78] sm:$0xff]
    %v4557 = vld [vmem:[#allocation8 + $0x80] sm:$0xff]
    %v4558 = vld [vmem:[#allocation8 + $0x88] sm:$0xff]
    %v4559 = vld [vmem:[#allocation8 + $0x90] sm:$0xff]
    %v4560 = vld [vmem:[#allocation8 + $0x98] sm:$0xff]
    %v4561 = vld [vmem:[#allocation8 + $0xa0] sm:$0xff]
    %v4562 = vld [vmem:[#allocation8 + $0xa8] sm:$0xff]
    %v4563 = vld [vmem:[#allocation8 + $0xb0] sm:$0xff]
    %v4564 = vld [vmem:[#allocation8 + $0xb8] sm:$0xff]
    %v4565 = vld [vmem:[#allocation8 + $0xc0] sm:$0xff]
    %v4566 = vld [vmem:[#allocation8 + $0xc8] sm:$0xff]
    %v4567 = vld [vmem:[#allocation8 + $0xd0] sm:$0xff]
    %v4568 = vld [vmem:[#allocation8 + $0xd8] sm:$0xff]
    %v4569 = vld [vmem:[#allocation8 + $0xe0] sm:$0xff]
    %v4570 = vld [vmem:[#allocation8 + $0xe8] sm:$0xff]
    %v4571 = vld [vmem:[#allocation8 + $0xf0] sm:$0xff]
    %v4572 = vld [vmem:[#allocation8 + $0xf8] sm:$0xff]
    %v4573 = vld [vmem:[#allocation8 + $0x100] sm:$0xff]
    %v4574 = vld [vmem:[#allocation8 + $0x108] sm:$0xff]
    %v4575 = vld [vmem:[#allocation8 + $0x110] sm:$0xff]
    %v4576 = vld [vmem:[#allocation8 + $0x118] sm:$0xff]
    %v4577 = vld [vmem:[#allocation8 + $0x120] sm:$0xff]
    %v4578 = vld [vmem:[#allocation8 + $0x128] sm:$0xff]
    %v4579 = vld [vmem:[#allocation8 + $0x130] sm:$0xff]
    %v4580 = vld [vmem:[#allocation8 + $0x138] sm:$0xff]
    %v4581 = vld [vmem:[#allocation8 + $0x140] sm:$0xff]
    %v4582 = vld [vmem:[#allocation8 + $0x148] sm:$0xff]
    %v4583 = vld [vmem:[#allocation8 + $0x150] sm:$0xff]
    %v4584 = vld [vmem:[#allocation8 + $0x158] sm:$0xff]
    %v4585 = vld [vmem:[#allocation8 + $0x160] sm:$0xff]
    %v4586 = vld [vmem:[#allocation8 + $0x168] sm:$0xff]
    %v4587 = vld [vmem:[#allocation8 + $0x170] sm:$0xff]
    %v4588 = vld [vmem:[#allocation8 + $0x178] sm:$0xff]
    %v4589 = vld [vmem:[#allocation8 + $0x180] sm:$0xff]
    %v4590 = vld [vmem:[#allocation8 + $0x188] sm:$0xff]
    %v4591 = vld [vmem:[#allocation8 + $0x190] sm:$0xff]
    %v4592 = vld [vmem:[#allocation8 + $0x198] sm:$0xff]
    %v4593 = vld [vmem:[#allocation8 + $0x1a0] sm:$0xff]
    %v4594 = vld [vmem:[#allocation8 + $0x1a8] sm:$0xff]
    %v4595 = vld [vmem:[#allocation8 + $0x1b0] sm:$0xff]
    %v4596 = vld [vmem:[#allocation8 + $0x1b8] sm:$0xff]
    %v4597 = vld [vmem:[#allocation8 + $0x1c0] sm:$0xff]
    %v4598 = vld [vmem:[#allocation8 + $0x1c8] sm:$0xff]
    %v4599 = vld [vmem:[#allocation8 + $0x1d0] sm:$0xff]
    %v4600 = vld [vmem:[#allocation8 + $0x1d8] sm:$0xff]
    %v4601 = vld [vmem:[#allocation8 + $0x1e0] sm:$0xff]
    %v4602 = vld [vmem:[#allocation8 + $0x1e8] sm:$0xff]
    %v4603 = vld [vmem:[#allocation8 + $0x1f0] sm:$0xff]
    %v4604 = vld [vmem:[#allocation8 + $0x1f8] sm:$0xff]
    %v4605 = vld [vmem:[#allocation8 + $0x200] sm:$0xff]
    %v4606 = vld [vmem:[#allocation8 + $0x208] sm:$0xff]
    %v4607 = vld [vmem:[#allocation8 + $0x210] sm:$0xff]
    %v4608 = vld [vmem:[#allocation8 + $0x218] sm:$0xff]
    %v4609 = vld [vmem:[#allocation8 + $0x220] sm:$0xff]
    %v4610 = vld [vmem:[#allocation8 + $0x228] sm:$0xff]
    %v4611 = vld [vmem:[#allocation8 + $0x230] sm:$0xff]
    %v4612 = vld [vmem:[#allocation8 + $0x238] sm:$0xff]
    %v4613 = vld [vmem:[#allocation8 + $0x240] sm:$0xff]
    %v4614 = vld [vmem:[#allocation8 + $0x248] sm:$0xff]
    %v4615 = vld [vmem:[#allocation8 + $0x250] sm:$0xff]
    %v4616 = vld [vmem:[#allocation8 + $0x258] sm:$0xff]
    %v4617 = vld [vmem:[#allocation8 + $0x260] sm:$0xff]
    %v4618 = vld [vmem:[#allocation8 + $0x268] sm:$0xff]
    %v4619 = vld [vmem:[#allocation8 + $0x270] sm:$0xff]
    %v4620 = vld [vmem:[#allocation8 + $0x278] sm:$0xff]
    %v4621 = vld [vmem:[#allocation8 + $0x280] sm:$0xff]
    %v4622 = vld [vmem:[#allocation8 + $0x288] sm:$0xff]
    %v4623 = vld [vmem:[#allocation8 + $0x290] sm:$0xff]
    %v4624 = vld [vmem:[#allocation8 + $0x298] sm:$0xff]
    %v4625 = vld [vmem:[#allocation8 + $0x2a0] sm:$0xff]
    %v4626 = vld [vmem:[#allocation8 + $0x2a8] sm:$0xff]
    %v4627 = vld [vmem:[#allocation8 + $0x2b0] sm:$0xff]
    %v4628 = vld [vmem:[#allocation8 + $0x2b8] sm:$0xff]
    %v4629 = vld [vmem:[#allocation8 + $0x2c0] sm:$0xff]
    %v4630 = vld [vmem:[#allocation8 + $0x2c8] sm:$0xff]
    %v4631 = vld [vmem:[#allocation8 + $0x2d0] sm:$0xff]
    %v4632 = vld [vmem:[#allocation8 + $0x2d8] sm:$0xff]
    %v4633 = vld [vmem:[#allocation8 + $0x2e0] sm:$0xff]
    %v4634 = vld [vmem:[#allocation8 + $0x2e8] sm:$0xff]
    %v4635 = vld [vmem:[#allocation8 + $0x2f0] sm:$0xff]
    %v4636 = vld [vmem:[#allocation8 + $0x2f8] sm:$0xff]
    %v4637 = vld [vmem:[#allocation8 + $0x300] sm:$0xff]
    %v4638 = vld [vmem:[#allocation8 + $0x308] sm:$0xff]
    %v4639 = vld [vmem:[#allocation8 + $0x310] sm:$0xff]
    %v4640 = vld [vmem:[#allocation8 + $0x318] sm:$0xff]
    %v4641 = vld [vmem:[#allocation8 + $0x320] sm:$0xff]
    %v4642 = vld [vmem:[#allocation8 + $0x328] sm:$0xff]
    %v4643 = vld [vmem:[#allocation8 + $0x330] sm:$0xff]
    %v4644 = vld [vmem:[#allocation8 + $0x338] sm:$0xff]
    %v4645 = vld [vmem:[#allocation8 + $0x340] sm:$0xff]
    %v4646 = vld [vmem:[#allocation8 + $0x348] sm:$0xff]
    %v4647 = vld [vmem:[#allocation8 + $0x350] sm:$0xff]
    %v4648 = vld [vmem:[#allocation8 + $0x358] sm:$0xff]
    %v4649 = vld [vmem:[#allocation8 + $0x360] sm:$0xff]
    %v4650 = vld [vmem:[#allocation8 + $0x368] sm:$0xff]
    %v4651 = vld [vmem:[#allocation8 + $0x370] sm:$0xff]
    %v4652 = vld [vmem:[#allocation8 + $0x378] sm:$0xff]
    %v4653 = vld [vmem:[#allocation8 + $0x380] sm:$0xff]
    %v4654 = vld [vmem:[#allocation8 + $0x388] sm:$0xff]
    %v4655 = vld [vmem:[#allocation8 + $0x390] sm:$0xff]
    %v4656 = vld [vmem:[#allocation8 + $0x398] sm:$0xff]
    %v4657 = vld [vmem:[#allocation8 + $0x3a0] sm:$0xff]
    %v4658 = vld [vmem:[#allocation8 + $0x3a8] sm:$0xff]
    %v4659 = vld [vmem:[#allocation8 + $0x3b0] sm:$0xff]
    %v4660 = vld [vmem:[#allocation8 + $0x3b8] sm:$0xff]
    %v4661 = vld [vmem:[#allocation8 + $0x3c0] sm:$0xff]
    %v4662 = vld [vmem:[#allocation8 + $0x3c8] sm:$0xff]
    %v4663 = vld [vmem:[#allocation8 + $0x3d0] sm:$0xff]
    %v4664 = vld [vmem:[#allocation8 + $0x3d8] sm:$0xff]
    %v4665 = vld [vmem:[#allocation8 + $0x3e0] sm:$0xff]
    %v4666 = vld [vmem:[#allocation8 + $0x3e8] sm:$0xff]
    %v4667 = vld [vmem:[#allocation8 + $0x3f0] sm:$0xff]
    %v4668 = vld [vmem:[#allocation8 + $0x3f8] sm:$0xff]
    %v4669 = vld [vmem:[#allocation8 + $0x400] sm:$0xff]
    %v4670 = vld [vmem:[#allocation8 + $0x408] sm:$0xff]
    %v4671 = vld [vmem:[#allocation8 + $0x410] sm:$0xff]
    %v4672 = vld [vmem:[#allocation8 + $0x418] sm:$0xff]
    %v4673 = vld [vmem:[#allocation8 + $0x420] sm:$0xff]
    %v4674 = vld [vmem:[#allocation8 + $0x428] sm:$0xff]
    %v4675 = vld [vmem:[#allocation8 + $0x430] sm:$0xff]
    %v4676 = vld [vmem:[#allocation8 + $0x438] sm:$0xff]
    %v4677 = vld [vmem:[#allocation8 + $0x440] sm:$0xff]
    %v4678 = vld [vmem:[#allocation8 + $0x448] sm:$0xff]
    %v4679 = vld [vmem:[#allocation8 + $0x450] sm:$0xff]
    %v4680 = vld [vmem:[#allocation8 + $0x458] sm:$0xff]
    %v4681 = vld [vmem:[#allocation8 + $0x460] sm:$0xff]
    %v4682 = vld [vmem:[#allocation8 + $0x468] sm:$0xff]
    %v4683 = vld [vmem:[#allocation8 + $0x470] sm:$0xff]
    %v4684 = vld [vmem:[#allocation8 + $0x478] sm:$0xff]
    %v4685 = vld [vmem:[#allocation8 + $0x480] sm:$0xff]
    %v4686 = vld [vmem:[#allocation8 + $0x488] sm:$0xff]
    %v4687 = vld [vmem:[#allocation8 + $0x490] sm:$0xff]
    %v4688 = vld [vmem:[#allocation8 + $0x498] sm:$0xff]
    %v4689 = vld [vmem:[#allocation8 + $0x4a0] sm:$0xff]
    %v4690 = vld [vmem:[#allocation8 + $0x4a8] sm:$0xff]
    %v4691 = vld [vmem:[#allocation8 + $0x4b0] sm:$0xff]
    %v4692 = vld [vmem:[#allocation8 + $0x4b8] sm:$0xff]
    %v4693 = vld [vmem:[#allocation8 + $0x4c0] sm:$0xff]
    %v4694 = vld [vmem:[#allocation8 + $0x4c8] sm:$0xff]
    %v4695 = vld [vmem:[#allocation8 + $0x4d0] sm:$0xff]
    %v4696 = vld [vmem:[#allocation8 + $0x4d8] sm:$0xff]
    %v4697 = vld [vmem:[#allocation8 + $0x4e0] sm:$0xff]
    %v4698 = vld [vmem:[#allocation8 + $0x4e8] sm:$0xff]
    %v4699 = vld [vmem:[#allocation8 + $0x4f0] sm:$0xff]
    %v4700 = vld [vmem:[#allocation8 + $0x4f8] sm:$0xff]
    %v4701 = vld [vmem:[#allocation8 + $0x500] sm:$0xff]
    %v4702 = vld [vmem:[#allocation8 + $0x508] sm:$0xff]
    %v4703 = vld [vmem:[#allocation8 + $0x510] sm:$0xff]
    %v4704 = vld [vmem:[#allocation8 + $0x518] sm:$0xff]
    %v4705 = vld [vmem:[#allocation8 + $0x520] sm:$0xff]
    %v4706 = vld [vmem:[#allocation8 + $0x528] sm:$0xff]
    %v4707 = vld [vmem:[#allocation8 + $0x530] sm:$0xff]
    %v4708 = vld [vmem:[#allocation8 + $0x538] sm:$0xff]
    %v4709 = vld [vmem:[#allocation8 + $0x540] sm:$0xff]
    %v4710 = vld [vmem:[#allocation8 + $0x548] sm:$0xff]
    %v4711 = vld [vmem:[#allocation8 + $0x550] sm:$0xff]
    %v4712 = vld [vmem:[#allocation8 + $0x558] sm:$0xff]
    %v4713 = vld [vmem:[#allocation8 + $0x560] sm:$0xff]
    %v4714 = vld [vmem:[#allocation8 + $0x568] sm:$0xff]
    %v4715 = vld [vmem:[#allocation8 + $0x570] sm:$0xff]
    %v4716 = vld [vmem:[#allocation8 + $0x578] sm:$0xff]
    %v4717 = vld [vmem:[#allocation8 + $0x580] sm:$0xff]
    %v4718 = vld [vmem:[#allocation8 + $0x588] sm:$0xff]
    %v4719 = vld [vmem:[#allocation8 + $0x590] sm:$0xff]
    %v4720 = vld [vmem:[#allocation8 + $0x598] sm:$0xff]
    %v4721 = vld [vmem:[#allocation8 + $0x5a0] sm:$0xff]
    %v4722 = vld [vmem:[#allocation8 + $0x5a8] sm:$0xff]
    %v4723 = vld [vmem:[#allocation8 + $0x5b0] sm:$0xff]
    %v4724 = vld [vmem:[#allocation8 + $0x5b8] sm:$0xff]
    %v4725 = vld [vmem:[#allocation8 + $0x5c0] sm:$0xff]
    %v4726 = vld [vmem:[#allocation8 + $0x5c8] sm:$0xff]
    %v4727 = vld [vmem:[#allocation8 + $0x5d0] sm:$0xff]
    %v4728 = vld [vmem:[#allocation8 + $0x5d8] sm:$0xff]
    %v4729 = vld [vmem:[#allocation8 + $0x5e0] sm:$0xff]
    %v4730 = vld [vmem:[#allocation8 + $0x5e8] sm:$0xff]
    %v4731 = vld [vmem:[#allocation8 + $0x5f0] sm:$0xff]
    %v4732 = vld [vmem:[#allocation8 + $0x5f8] sm:$0xff]
    %v4733 = vld [vmem:[#allocation8 + $0x600] sm:$0xff]
    %v4734 = vld [vmem:[#allocation8 + $0x608] sm:$0xff]
    %v4735 = vld [vmem:[#allocation8 + $0x610] sm:$0xff]
    %v4736 = vld [vmem:[#allocation8 + $0x618] sm:$0xff]
    %v4737 = vld [vmem:[#allocation8 + $0x620] sm:$0xff]
    %v4738 = vld [vmem:[#allocation8 + $0x628] sm:$0xff]
    %v4739 = vld [vmem:[#allocation8 + $0x630] sm:$0xff]
    %v4740 = vld [vmem:[#allocation8 + $0x638] sm:$0xff]
    %v4741 = vld [vmem:[#allocation8 + $0x640] sm:$0xff]
    %v4742 = vld [vmem:[#allocation8 + $0x648] sm:$0xff]
    %v4743 = vld [vmem:[#allocation8 + $0x650] sm:$0xff]
    %v4744 = vld [vmem:[#allocation8 + $0x658] sm:$0xff]
    %v4745 = vld [vmem:[#allocation8 + $0x660] sm:$0xff]
    %v4746 = vld [vmem:[#allocation8 + $0x668] sm:$0xff]
    %v4747 = vld [vmem:[#allocation8 + $0x670] sm:$0xff]
    %v4748 = vld [vmem:[#allocation8 + $0x678] sm:$0xff]
    %v4749 = vld [vmem:[#allocation8 + $0x680] sm:$0xff]
    %v4750 = vld [vmem:[#allocation8 + $0x688] sm:$0xff]
    %v4751 = vld [vmem:[#allocation8 + $0x690] sm:$0xff]
    %v4752 = vld [vmem:[#allocation8 + $0x698] sm:$0xff]
    %v4753 = vld [vmem:[#allocation8 + $0x6a0] sm:$0xff]
    %v4754 = vld [vmem:[#allocation8 + $0x6a8] sm:$0xff]
    %v4755 = vld [vmem:[#allocation8 + $0x6b0] sm:$0xff]
    %v4756 = vld [vmem:[#allocation8 + $0x6b8] sm:$0xff]
    %v4757 = vld [vmem:[#allocation8 + $0x6c0] sm:$0xff]
    %v4758 = vld [vmem:[#allocation8 + $0x6c8] sm:$0xff]
    %v4759 = vld [vmem:[#allocation8 + $0x6d0] sm:$0xff]
    %v4760 = vld [vmem:[#allocation8 + $0x6d8] sm:$0xff]
    %v4761 = vld [vmem:[#allocation8 + $0x6e0] sm:$0xff]
    %v4762 = vld [vmem:[#allocation8 + $0x6e8] sm:$0xff]
    %v4763 = vld [vmem:[#allocation8 + $0x6f0] sm:$0xff]
    %v4764 = vld [vmem:[#allocation8 + $0x6f8] sm:$0xff]
    %v4765 = vld [vmem:[#allocation8 + $0x700] sm:$0xff]
    %v4766 = vld [vmem:[#allocation8 + $0x708] sm:$0xff]
    %v4767 = vld [vmem:[#allocation8 + $0x710] sm:$0xff]
    %v4768 = vld [vmem:[#allocation8 + $0x718] sm:$0xff]
    %v4769 = vld [vmem:[#allocation8 + $0x720] sm:$0xff]
    %v4770 = vld [vmem:[#allocation8 + $0x728] sm:$0xff]
    %v4771 = vld [vmem:[#allocation8 + $0x730] sm:$0xff]
    %v4772 = vld [vmem:[#allocation8 + $0x738] sm:$0xff]
    %v4773 = vld [vmem:[#allocation8 + $0x740] sm:$0xff]
    %v4774 = vld [vmem:[#allocation8 + $0x748] sm:$0xff]
    %v4775 = vld [vmem:[#allocation8 + $0x750] sm:$0xff]
    %v4776 = vld [vmem:[#allocation8 + $0x758] sm:$0xff]
    %v4777 = vld [vmem:[#allocation8 + $0x760] sm:$0xff]
    %v4778 = vld [vmem:[#allocation8 + $0x768] sm:$0xff]
    %v4779 = vld [vmem:[#allocation8 + $0x770] sm:$0xff]
    %v4780 = vld [vmem:[#allocation8 + $0x778] sm:$0xff]
    %v4781 = vld [vmem:[#allocation8 + $0x780] sm:$0xff]
    %v4782 = vld [vmem:[#allocation8 + $0x788] sm:$0xff]
    %v4783 = vld [vmem:[#allocation8 + $0x790] sm:$0xff]
    %v4784 = vld [vmem:[#allocation8 + $0x798] sm:$0xff]
    %v4785 = vld [vmem:[#allocation8 + $0x7a0] sm:$0xff]
    %v4786 = vld [vmem:[#allocation8 + $0x7a8] sm:$0xff]
    %v4787 = vld [vmem:[#allocation8 + $0x7b0] sm:$0xff]
    %v4788 = vld [vmem:[#allocation8 + $0x7b8] sm:$0xff]
    %v4789 = vld [vmem:[#allocation8 + $0x7c0] sm:$0xff]
    %v4790 = vld [vmem:[#allocation8 + $0x7c8] sm:$0xff]
    %v4791 = vld [vmem:[#allocation8 + $0x7d0] sm:$0xff]
    %v4792 = vld [vmem:[#allocation8 + $0x7d8] sm:$0xff]
    %v4793 = vld [vmem:[#allocation8 + $0x7e0] sm:$0xff]
    %v4794 = vld [vmem:[#allocation8 + $0x7e8] sm:$0xff]
    %v4795 = vld [vmem:[#allocation8 + $0x7f0] sm:$0xff]
    %v4796 = vld [vmem:[#allocation8 + $0x7f8] sm:$0xff]
    %v4797 = vld [vmem:[#allocation8 + $0x800] sm:$0xff]
    %v4798 = vld [vmem:[#allocation8 + $0x808] sm:$0xff]
    %v4799 = vld [vmem:[#allocation8 + $0x810] sm:$0xff]
    %v4800 = vld [vmem:[#allocation8 + $0x818] sm:$0xff]
    %v4801 = vld [vmem:[#allocation8 + $0x820] sm:$0xff]
    %v4802 = vld [vmem:[#allocation8 + $0x828] sm:$0xff]
    %v4803 = vld [vmem:[#allocation8 + $0x830] sm:$0xff]
    %v4804 = vld [vmem:[#allocation8 + $0x838] sm:$0xff]
    %v4805 = vld [vmem:[#allocation8 + $0x840] sm:$0xff]
    %v4806 = vld [vmem:[#allocation8 + $0x848] sm:$0xff]
    %v4807 = vld [vmem:[#allocation8 + $0x850] sm:$0xff]
    %v4808 = vld [vmem:[#allocation8 + $0x858] sm:$0xff]
    %v4809 = vld [vmem:[#allocation8 + $0x860] sm:$0xff]
    %v4810 = vld [vmem:[#allocation8 + $0x868] sm:$0xff]
    %v4811 = vld [vmem:[#allocation8 + $0x870] sm:$0xff]
    %v4812 = vld [vmem:[#allocation8 + $0x878] sm:$0xff]
    %v4813 = vld [vmem:[#allocation8 + $0x880] sm:$0xff]
    %v4814 = vld [vmem:[#allocation8 + $0x888] sm:$0xff]
    %v4815 = vld [vmem:[#allocation8 + $0x890] sm:$0xff]
    %v4816 = vld [vmem:[#allocation8 + $0x898] sm:$0xff]
    %v4817 = vld [vmem:[#allocation8 + $0x8a0] sm:$0xff]
    %v4818 = vld [vmem:[#allocation8 + $0x8a8] sm:$0xff]
    %v4819 = vld [vmem:[#allocation8 + $0x8b0] sm:$0xff]
    %v4820 = vld [vmem:[#allocation8 + $0x8b8] sm:$0xff]
    %v4821 = vld [vmem:[#allocation8 + $0x8c0] sm:$0xff]
    %v4822 = vld [vmem:[#allocation8 + $0x8c8] sm:$0xff]
    %v4823 = vld [vmem:[#allocation8 + $0x8d0] sm:$0xff]
    %v4824 = vld [vmem:[#allocation8 + $0x8d8] sm:$0xff]
    %v4825 = vld [vmem:[#allocation8 + $0x8e0] sm:$0xff]
    %v4826 = vld [vmem:[#allocation8 + $0x8e8] sm:$0xff]
    %v4827 = vld [vmem:[#allocation8 + $0x8f0] sm:$0xff]
    %v4828 = vld [vmem:[#allocation8 + $0x8f8] sm:$0xff]
    %v4829 = vld [vmem:[#allocation8 + $0x900] sm:$0xff]
    %v4830 = vld [vmem:[#allocation8 + $0x908] sm:$0xff]
    %v4831 = vld [vmem:[#allocation8 + $0x910] sm:$0xff]
    %v4832 = vld [vmem:[#allocation8 + $0x918] sm:$0xff]
    %v4833 = vld [vmem:[#allocation8 + $0x920] sm:$0xff]
    %v4834 = vld [vmem:[#allocation8 + $0x928] sm:$0xff]
    %v4835 = vld [vmem:[#allocation8 + $0x930] sm:$0xff]
    %v4836 = vld [vmem:[#allocation8 + $0x938] sm:$0xff]
    %v4837 = vld [vmem:[#allocation8 + $0x940] sm:$0xff]
    %v4838 = vld [vmem:[#allocation8 + $0x948] sm:$0xff]
    %v4839 = vld [vmem:[#allocation8 + $0x950] sm:$0xff]
    %v4840 = vld [vmem:[#allocation8 + $0x958] sm:$0xff]
    %v4841 = vld [vmem:[#allocation8 + $0x960] sm:$0xff]
    %v4842 = vld [vmem:[#allocation8 + $0x968] sm:$0xff]
    %v4843 = vld [vmem:[#allocation8 + $0x970] sm:$0xff]
    %v4844 = vld [vmem:[#allocation8 + $0x978] sm:$0xff]
    %v4845 = vld [vmem:[#allocation8 + $0x980] sm:$0xff]
    %v4846 = vld [vmem:[#allocation8 + $0x988] sm:$0xff]
    %v4847 = vld [vmem:[#allocation8 + $0x990] sm:$0xff]
    %v4848 = vld [vmem:[#allocation8 + $0x998] sm:$0xff]
    %v4849 = vld [vmem:[#allocation8 + $0x9a0] sm:$0xff]
    %v4850 = vld [vmem:[#allocation8 + $0x9a8] sm:$0xff]
    %v4851 = vld [vmem:[#allocation8 + $0x9b0] sm:$0xff]
    %v4852 = vld [vmem:[#allocation8 + $0x9b8] sm:$0xff]
    %v4853 = vld [vmem:[#allocation8 + $0x9c0] sm:$0xff]
    %v4854 = vld [vmem:[#allocation8 + $0x9c8] sm:$0xff]
    %v4855 = vld [vmem:[#allocation8 + $0x9d0] sm:$0xff]
    %v4856 = vld [vmem:[#allocation8 + $0x9d8] sm:$0xff]
    %v4857 = vld [vmem:[#allocation8 + $0x9e0] sm:$0xff]
    %v4858 = vld [vmem:[#allocation8 + $0x9e8] sm:$0xff]
    %v4859 = vld [vmem:[#allocation8 + $0x9f0] sm:$0xff]
    %v4860 = vld [vmem:[#allocation8 + $0x9f8] sm:$0xff]
    %v4861 = vld [vmem:[#allocation10] sm:$0xf]
    %v4863 = vperm.slane %v4861, 0
    %v4864 = vperm.slane %v4861, 1
    %v4865 = vperm.slane %v4861, 2
    %v4866 = vperm.slane %v4861, 3
    %v5191 = vunpack.c.l.b16 %v4541
    %v5192 = vunpack.c.h.b16 %v4541
    %v5193 = vunpack.c.l.b16 %v4542
    %v5194 = vunpack.c.h.b16 %v4542
    %v5195 = vunpack.c.l.b16 %v4543
    %v5196 = vunpack.c.h.b16 %v4543
    %v5197 = vunpack.c.l.b16 %v4544
    %v5198 = vunpack.c.h.b16 %v4544
    %v5199 = vunpack.c.l.b16 %v4545
    %v5200 = vunpack.c.h.b16 %v4545
    %v5201 = vunpack.c.l.b16 %v4546
    %v5202 = vunpack.c.h.b16 %v4546
    %v5203 = vunpack.c.l.b16 %v4547
    %v5204 = vunpack.c.h.b16 %v4547
    %v5205 = vunpack.c.l.b16 %v4548
    %v5206 = vunpack.c.h.b16 %v4548
    %v5207 = vunpack.c.l.b16 %v4549
    %v5208 = vunpack.c.h.b16 %v4549
    %v5209 = vunpack.c.l.b16 %v4550
    %v5210 = vunpack.c.h.b16 %v4550
    %v5211 = vunpack.c.l.b16 %v4551
    %v5212 = vunpack.c.h.b16 %v4551
    %v5213 = vunpack.c.l.b16 %v4552
    %v5214 = vunpack.c.h.b16 %v4552
    %v5215 = vunpack.c.l.b16 %v4553
    %v5216 = vunpack.c.h.b16 %v4553
    %v5217 = vunpack.c.l.b16 %v4554
    %v5218 = vunpack.c.h.b16 %v4554
    %v5219 = vunpack.c.l.b16 %v4555
    %v5220 = vunpack.c.h.b16 %v4555
    %v5221 = vunpack.c.l.b16 %v4556
    %v5222 = vunpack.c.h.b16 %v4556
    %v5223 = vunpack.c.l.b16 %v4557
    %v5224 = vunpack.c.h.b16 %v4557
    %v5225 = vunpack.c.l.b16 %v4558
    %v5226 = vunpack.c.h.b16 %v4558
    %v5227 = vunpack.c.l.b16 %v4559
    %v5228 = vunpack.c.h.b16 %v4559
    %v5229 = vunpack.c.l.b16 %v4560
    %v5230 = vunpack.c.h.b16 %v4560
    %v5231 = vunpack.c.l.b16 %v4561
    %v5232 = vunpack.c.h.b16 %v4561
    %v5233 = vunpack.c.l.b16 %v4562
    %v5234 = vunpack.c.h.b16 %v4562
    %v5235 = vunpack.c.l.b16 %v4563
    %v5236 = vunpack.c.h.b16 %v4563
    %v5237 = vunpack.c.l.b16 %v4564
    %v5238 = vunpack.c.h.b16 %v4564
    %v5239 = vunpack.c.l.b16 %v4565
    %v5240 = vunpack.c.h.b16 %v4565
    %v5241 = vunpack.c.l.b16 %v4566
    %v5242 = vunpack.c.h.b16 %v4566
    %v5243 = vunpack.c.l.b16 %v4567
    %v5244 = vunpack.c.h.b16 %v4567
    %v5245 = vunpack.c.l.b16 %v4568
    %v5246 = vunpack.c.h.b16 %v4568
    %v5247 = vunpack.c.l.b16 %v4569
    %v5248 = vunpack.c.h.b16 %v4569
    %v5249 = vunpack.c.l.b16 %v4570
    %v5250 = vunpack.c.h.b16 %v4570
    %v5251 = vunpack.c.l.b16 %v4571
    %v5252 = vunpack.c.h.b16 %v4571
    %v5253 = vunpack.c.l.b16 %v4572
    %v5254 = vunpack.c.h.b16 %v4572
    %v5255 = vunpack.c.l.b16 %v4573
    %v5256 = vunpack.c.h.b16 %v4573
    %v5257 = vunpack.c.l.b16 %v4574
    %v5258 = vunpack.c.h.b16 %v4574
    %v5259 = vunpack.c.l.b16 %v4575
    %v5260 = vunpack.c.h.b16 %v4575
    %v5261 = vunpack.c.l.b16 %v4576
    %v5262 = vunpack.c.h.b16 %v4576
    %v5263 = vunpack.c.l.b16 %v4577
    %v5264 = vunpack.c.h.b16 %v4577
    %v5265 = vunpack.c.l.b16 %v4578
    %v5266 = vunpack.c.h.b16 %v4578
    %v5267 = vunpack.c.l.b16 %v4579
    %v5268 = vunpack.c.h.b16 %v4579
    %v5269 = vunpack.c.l.b16 %v4580
    %v5270 = vunpack.c.h.b16 %v4580
    %v5271 = vunpack.c.l.b16 %v4581
    %v5272 = vunpack.c.h.b16 %v4581
    %v5273 = vunpack.c.l.b16 %v4582
    %v5274 = vunpack.c.h.b16 %v4582
    %v5275 = vunpack.c.l.b16 %v4583
    %v5276 = vunpack.c.h.b16 %v4583
    %v5277 = vunpack.c.l.b16 %v4584
    %v5278 = vunpack.c.h.b16 %v4584
    %v5279 = vunpack.c.l.b16 %v4585
    %v5280 = vunpack.c.h.b16 %v4585
    %v5281 = vunpack.c.l.b16 %v4586
    %v5282 = vunpack.c.h.b16 %v4586
    %v5283 = vunpack.c.l.b16 %v4587
    %v5284 = vunpack.c.h.b16 %v4587
    %v5285 = vunpack.c.l.b16 %v4588
    %v5286 = vunpack.c.h.b16 %v4588
    %v5287 = vunpack.c.l.b16 %v4589
    %v5288 = vunpack.c.h.b16 %v4589
    %v5289 = vunpack.c.l.b16 %v4590
    %v5290 = vunpack.c.h.b16 %v4590
    %v5291 = vunpack.c.l.b16 %v4591
    %v5292 = vunpack.c.h.b16 %v4591
    %v5293 = vunpack.c.l.b16 %v4592
    %v5294 = vunpack.c.h.b16 %v4592
    %v5295 = vunpack.c.l.b16 %v4593
    %v5296 = vunpack.c.h.b16 %v4593
    %v5297 = vunpack.c.l.b16 %v4594
    %v5298 = vunpack.c.h.b16 %v4594
    %v5299 = vunpack.c.l.b16 %v4595
    %v5300 = vunpack.c.h.b16 %v4595
    %v5301 = vunpack.c.l.b16 %v4596
    %v5302 = vunpack.c.h.b16 %v4596
    %v5303 = vunpack.c.l.b16 %v4597
    %v5304 = vunpack.c.h.b16 %v4597
    %v5305 = vunpack.c.l.b16 %v4598
    %v5306 = vunpack.c.h.b16 %v4598
    %v5307 = vunpack.c.l.b16 %v4599
    %v5308 = vunpack.c.h.b16 %v4599
    %v5309 = vunpack.c.l.b16 %v4600
    %v5310 = vunpack.c.h.b16 %v4600
    %v5311 = vunpack.c.l.b16 %v4601
    %v5312 = vunpack.c.h.b16 %v4601
    %v5313 = vunpack.c.l.b16 %v4602
    %v5314 = vunpack.c.h.b16 %v4602
    %v5315 = vunpack.c.l.b16 %v4603
    %v5316 = vunpack.c.h.b16 %v4603
    %v5317 = vunpack.c.l.b16 %v4604
    %v5318 = vunpack.c.h.b16 %v4604
    %v5319 = vunpack.c.l.b16 %v4605
    %v5320 = vunpack.c.h.b16 %v4605
    %v5321 = vunpack.c.l.b16 %v4606
    %v5322 = vunpack.c.h.b16 %v4606
    %v5323 = vunpack.c.l.b16 %v4607
    %v5324 = vunpack.c.h.b16 %v4607
    %v5325 = vunpack.c.l.b16 %v4608
    %v5326 = vunpack.c.h.b16 %v4608
    %v5327 = vunpack.c.l.b16 %v4609
    %v5328 = vunpack.c.h.b16 %v4609
    %v5329 = vunpack.c.l.b16 %v4610
    %v5330 = vunpack.c.h.b16 %v4610
    %v5331 = vunpack.c.l.b16 %v4611
    %v5332 = vunpack.c.h.b16 %v4611
    %v5333 = vunpack.c.l.b16 %v4612
    %v5334 = vunpack.c.h.b16 %v4612
    %v5335 = vunpack.c.l.b16 %v4613
    %v5336 = vunpack.c.h.b16 %v4613
    %v5337 = vunpack.c.l.b16 %v4614
    %v5338 = vunpack.c.h.b16 %v4614
    %v5339 = vunpack.c.l.b16 %v4615
    %v5340 = vunpack.c.h.b16 %v4615
    %v5341 = vunpack.c.l.b16 %v4616
    %v5342 = vunpack.c.h.b16 %v4616
    %v5343 = vunpack.c.l.b16 %v4617
    %v5344 = vunpack.c.h.b16 %v4617
    %v5345 = vunpack.c.l.b16 %v4618
    %v5346 = vunpack.c.h.b16 %v4618
    %v5347 = vunpack.c.l.b16 %v4619
    %v5348 = vunpack.c.h.b16 %v4619
    %v5349 = vunpack.c.l.b16 %v4620
    %v5350 = vunpack.c.h.b16 %v4620
    %v5351 = vunpack.c.l.b16 %v4621
    %v5352 = vunpack.c.h.b16 %v4621
    %v5353 = vunpack.c.l.b16 %v4622
    %v5354 = vunpack.c.h.b16 %v4622
    %v5355 = vunpack.c.l.b16 %v4623
    %v5356 = vunpack.c.h.b16 %v4623
    %v5357 = vunpack.c.l.b16 %v4624
    %v5358 = vunpack.c.h.b16 %v4624
    %v5359 = vunpack.c.l.b16 %v4625
    %v5360 = vunpack.c.h.b16 %v4625
    %v5361 = vunpack.c.l.b16 %v4626
    %v5362 = vunpack.c.h.b16 %v4626
    %v5363 = vunpack.c.l.b16 %v4627
    %v5364 = vunpack.c.h.b16 %v4627
    %v5365 = vunpack.c.l.b16 %v4628
    %v5366 = vunpack.c.h.b16 %v4628
    %v5367 = vunpack.c.l.b16 %v4629
    %v5368 = vunpack.c.h.b16 %v4629
    %v5369 = vunpack.c.l.b16 %v4630
    %v5370 = vunpack.c.h.b16 %v4630
    %v5371 = vunpack.c.l.b16 %v4631
    %v5372 = vunpack.c.h.b16 %v4631
    %v5373 = vunpack.c.l.b16 %v4632
    %v5374 = vunpack.c.h.b16 %v4632
    %v5375 = vunpack.c.l.b16 %v4633
    %v5376 = vunpack.c.h.b16 %v4633
    %v5377 = vunpack.c.l.b16 %v4634
    %v5378 = vunpack.c.h.b16 %v4634
    %v5379 = vunpack.c.l.b16 %v4635
    %v5380 = vunpack.c.h.b16 %v4635
    %v5381 = vunpack.c.l.b16 %v4636
    %v5382 = vunpack.c.h.b16 %v4636
    %v5383 = vunpack.c.l.b16 %v4637
    %v5384 = vunpack.c.h.b16 %v4637
    %v5385 = vunpack.c.l.b16 %v4638
    %v5386 = vunpack.c.h.b16 %v4638
    %v5387 = vunpack.c.l.b16 %v4639
    %v5388 = vunpack.c.h.b16 %v4639
    %v5389 = vunpack.c.l.b16 %v4640
    %v5390 = vunpack.c.h.b16 %v4640
    %v5391 = vunpack.c.l.b16 %v4641
    %v5392 = vunpack.c.h.b16 %v4641
    %v5393 = vunpack.c.l.b16 %v4642
    %v5394 = vunpack.c.h.b16 %v4642
    %v5395 = vunpack.c.l.b16 %v4643
    %v5396 = vunpack.c.h.b16 %v4643
    %v5397 = vunpack.c.l.b16 %v4644
    %v5398 = vunpack.c.h.b16 %v4644
    %v5399 = vunpack.c.l.b16 %v4645
    %v5400 = vunpack.c.h.b16 %v4645
    %v5401 = vunpack.c.l.b16 %v4646
    %v5402 = vunpack.c.h.b16 %v4646
    %v5403 = vunpack.c.l.b16 %v4647
    %v5404 = vunpack.c.h.b16 %v4647
    %v5405 = vunpack.c.l.b16 %v4648
    %v5406 = vunpack.c.h.b16 %v4648
    %v5407 = vunpack.c.l.b16 %v4649
    %v5408 = vunpack.c.h.b16 %v4649
    %v5409 = vunpack.c.l.b16 %v4650
    %v5410 = vunpack.c.h.b16 %v4650
    %v5411 = vunpack.c.l.b16 %v4651
    %v5412 = vunpack.c.h.b16 %v4651
    %v5413 = vunpack.c.l.b16 %v4652
    %v5414 = vunpack.c.h.b16 %v4652
    %v5415 = vunpack.c.l.b16 %v4653
    %v5416 = vunpack.c.h.b16 %v4653
    %v5417 = vunpack.c.l.b16 %v4654
    %v5418 = vunpack.c.h.b16 %v4654
    %v5419 = vunpack.c.l.b16 %v4655
    %v5420 = vunpack.c.h.b16 %v4655
    %v5421 = vunpack.c.l.b16 %v4656
    %v5422 = vunpack.c.h.b16 %v4656
    %v5423 = vunpack.c.l.b16 %v4657
    %v5424 = vunpack.c.h.b16 %v4657
    %v5425 = vunpack.c.l.b16 %v4658
    %v5426 = vunpack.c.h.b16 %v4658
    %v5427 = vunpack.c.l.b16 %v4659
    %v5428 = vunpack.c.h.b16 %v4659
    %v5429 = vunpack.c.l.b16 %v4660
    %v5430 = vunpack.c.h.b16 %v4660
    %v5431 = vunpack.c.l.b16 %v4661
    %v5432 = vunpack.c.h.b16 %v4661
    %v5433 = vunpack.c.l.b16 %v4662
    %v5434 = vunpack.c.h.b16 %v4662
    %v5435 = vunpack.c.l.b16 %v4663
    %v5436 = vunpack.c.h.b16 %v4663
    %v5437 = vunpack.c.l.b16 %v4664
    %v5438 = vunpack.c.h.b16 %v4664
    %v5439 = vunpack.c.l.b16 %v4665
    %v5440 = vunpack.c.h.b16 %v4665
    %v5441 = vunpack.c.l.b16 %v4666
    %v5442 = vunpack.c.h.b16 %v4666
    %v5443 = vunpack.c.l.b16 %v4667
    %v5444 = vunpack.c.h.b16 %v4667
    %v5445 = vunpack.c.l.b16 %v4668
    %v5446 = vunpack.c.h.b16 %v4668
    %v5447 = vunpack.c.l.b16 %v4669
    %v5448 = vunpack.c.h.b16 %v4669
    %v5449 = vunpack.c.l.b16 %v4670
    %v5450 = vunpack.c.h.b16 %v4670
    %v5451 = vunpack.c.l.b16 %v4671
    %v5452 = vunpack.c.h.b16 %v4671
    %v5453 = vunpack.c.l.b16 %v4672
    %v5454 = vunpack.c.h.b16 %v4672
    %v5455 = vunpack.c.l.b16 %v4673
    %v5456 = vunpack.c.h.b16 %v4673
    %v5457 = vunpack.c.l.b16 %v4674
    %v5458 = vunpack.c.h.b16 %v4674
    %v5459 = vunpack.c.l.b16 %v4675
    %v5460 = vunpack.c.h.b16 %v4675
    %v5461 = vunpack.c.l.b16 %v4676
    %v5462 = vunpack.c.h.b16 %v4676
    %v5463 = vunpack.c.l.b16 %v4677
    %v5464 = vunpack.c.h.b16 %v4677
    %v5465 = vunpack.c.l.b16 %v4678
    %v5466 = vunpack.c.h.b16 %v4678
    %v5467 = vunpack.c.l.b16 %v4679
    %v5468 = vunpack.c.h.b16 %v4679
    %v5469 = vunpack.c.l.b16 %v4680
    %v5470 = vunpack.c.h.b16 %v4680
    %v5471 = vunpack.c.l.b16 %v4681
    %v5472 = vunpack.c.h.b16 %v4681
    %v5473 = vunpack.c.l.b16 %v4682
    %v5474 = vunpack.c.h.b16 %v4682
    %v5475 = vunpack.c.l.b16 %v4683
    %v5476 = vunpack.c.h.b16 %v4683
    %v5477 = vunpack.c.l.b16 %v4684
    %v5478 = vunpack.c.h.b16 %v4684
    %v5479 = vunpack.c.l.b16 %v4685
    %v5480 = vunpack.c.h.b16 %v4685
    %v5481 = vunpack.c.l.b16 %v4686
    %v5482 = vunpack.c.h.b16 %v4686
    %v5483 = vunpack.c.l.b16 %v4687
    %v5484 = vunpack.c.h.b16 %v4687
    %v5485 = vunpack.c.l.b16 %v4688
    %v5486 = vunpack.c.h.b16 %v4688
    %v5487 = vunpack.c.l.b16 %v4689
    %v5488 = vunpack.c.h.b16 %v4689
    %v5489 = vunpack.c.l.b16 %v4690
    %v5490 = vunpack.c.h.b16 %v4690
    %v5491 = vunpack.c.l.b16 %v4691
    %v5492 = vunpack.c.h.b16 %v4691
    %v5493 = vunpack.c.l.b16 %v4692
    %v5494 = vunpack.c.h.b16 %v4692
    %v5495 = vunpack.c.l.b16 %v4693
    %v5496 = vunpack.c.h.b16 %v4693
    %v5497 = vunpack.c.l.b16 %v4694
    %v5498 = vunpack.c.h.b16 %v4694
    %v5499 = vunpack.c.l.b16 %v4695
    %v5500 = vunpack.c.h.b16 %v4695
    %v5501 = vunpack.c.l.b16 %v4696
    %v5502 = vunpack.c.h.b16 %v4696
    %v5503 = vunpack.c.l.b16 %v4697
    %v5504 = vunpack.c.h.b16 %v4697
    %v5505 = vunpack.c.l.b16 %v4698
    %v5506 = vunpack.c.h.b16 %v4698
    %v5507 = vunpack.c.l.b16 %v4699
    %v5508 = vunpack.c.h.b16 %v4699
    %v5509 = vunpack.c.l.b16 %v4700
    %v5510 = vunpack.c.h.b16 %v4700
    %v5511 = vunpack.c.l.b16 %v4701
    %v5512 = vunpack.c.h.b16 %v4701
    %v5513 = vunpack.c.l.b16 %v4702
    %v5514 = vunpack.c.h.b16 %v4702
    %v5515 = vunpack.c.l.b16 %v4703
    %v5516 = vunpack.c.h.b16 %v4703
    %v5517 = vunpack.c.l.b16 %v4704
    %v5518 = vunpack.c.h.b16 %v4704
    %v5519 = vunpack.c.l.b16 %v4705
    %v5520 = vunpack.c.h.b16 %v4705
    %v5521 = vunpack.c.l.b16 %v4706
    %v5522 = vunpack.c.h.b16 %v4706
    %v5523 = vunpack.c.l.b16 %v4707
    %v5524 = vunpack.c.h.b16 %v4707
    %v5525 = vunpack.c.l.b16 %v4708
    %v5526 = vunpack.c.h.b16 %v4708
    %v5527 = vunpack.c.l.b16 %v4709
    %v5528 = vunpack.c.h.b16 %v4709
    %v5529 = vunpack.c.l.b16 %v4710
    %v5530 = vunpack.c.h.b16 %v4710
    %v5531 = vunpack.c.l.b16 %v4711
    %v5532 = vunpack.c.h.b16 %v4711
    %v5533 = vunpack.c.l.b16 %v4712
    %v5534 = vunpack.c.h.b16 %v4712
    %v5535 = vunpack.c.l.b16 %v4713
    %v5536 = vunpack.c.h.b16 %v4713
    %v5537 = vunpack.c.l.b16 %v4714
    %v5538 = vunpack.c.h.b16 %v4714
    %v5539 = vunpack.c.l.b16 %v4715
    %v5540 = vunpack.c.h.b16 %v4715
    %v5541 = vunpack.c.l.b16 %v4716
    %v5542 = vunpack.c.h.b16 %v4716
    %v5543 = vunpack.c.l.b16 %v4717
    %v5544 = vunpack.c.h.b16 %v4717
    %v5545 = vunpack.c.l.b16 %v4718
    %v5546 = vunpack.c.h.b16 %v4718
    %v5547 = vunpack.c.l.b16 %v4719
    %v5548 = vunpack.c.h.b16 %v4719
    %v5549 = vunpack.c.l.b16 %v4720
    %v5550 = vunpack.c.h.b16 %v4720
    %v5551 = vunpack.c.l.b16 %v4721
    %v5552 = vunpack.c.h.b16 %v4721
    %v5553 = vunpack.c.l.b16 %v4722
    %v5554 = vunpack.c.h.b16 %v4722
    %v5555 = vunpack.c.l.b16 %v4723
    %v5556 = vunpack.c.h.b16 %v4723
    %v5557 = vunpack.c.l.b16 %v4724
    %v5558 = vunpack.c.h.b16 %v4724
    %v5559 = vunpack.c.l.b16 %v4725
    %v5560 = vunpack.c.h.b16 %v4725
    %v5561 = vunpack.c.l.b16 %v4726
    %v5562 = vunpack.c.h.b16 %v4726
    %v5563 = vunpack.c.l.b16 %v4727
    %v5564 = vunpack.c.h.b16 %v4727
    %v5565 = vunpack.c.l.b16 %v4728
    %v5566 = vunpack.c.h.b16 %v4728
    %v5567 = vunpack.c.l.b16 %v4729
    %v5568 = vunpack.c.h.b16 %v4729
    %v5569 = vunpack.c.l.b16 %v4730
    %v5570 = vunpack.c.h.b16 %v4730
    %v5571 = vunpack.c.l.b16 %v4731
    %v5572 = vunpack.c.h.b16 %v4731
    %v5573 = vunpack.c.l.b16 %v4732
    %v5574 = vunpack.c.h.b16 %v4732
    %v5575 = vunpack.c.l.b16 %v4733
    %v5576 = vunpack.c.h.b16 %v4733
    %v5577 = vunpack.c.l.b16 %v4734
    %v5578 = vunpack.c.h.b16 %v4734
    %v5579 = vunpack.c.l.b16 %v4735
    %v5580 = vunpack.c.h.b16 %v4735
    %v5581 = vunpack.c.l.b16 %v4736
    %v5582 = vunpack.c.h.b16 %v4736
    %v5583 = vunpack.c.l.b16 %v4737
    %v5584 = vunpack.c.h.b16 %v4737
    %v5585 = vunpack.c.l.b16 %v4738
    %v5586 = vunpack.c.h.b16 %v4738
    %v5587 = vunpack.c.l.b16 %v4739
    %v5588 = vunpack.c.h.b16 %v4739
    %v5589 = vunpack.c.l.b16 %v4740
    %v5590 = vunpack.c.h.b16 %v4740
    %v5591 = vunpack.c.l.b16 %v4741
    %v5592 = vunpack.c.h.b16 %v4741
    %v5593 = vunpack.c.l.b16 %v4742
    %v5594 = vunpack.c.h.b16 %v4742
    %v5595 = vunpack.c.l.b16 %v4743
    %v5596 = vunpack.c.h.b16 %v4743
    %v5597 = vunpack.c.l.b16 %v4744
    %v5598 = vunpack.c.h.b16 %v4744
    %v5599 = vunpack.c.l.b16 %v4745
    %v5600 = vunpack.c.h.b16 %v4745
    %v5601 = vunpack.c.l.b16 %v4746
    %v5602 = vunpack.c.h.b16 %v4746
    %v5603 = vunpack.c.l.b16 %v4747
    %v5604 = vunpack.c.h.b16 %v4747
    %v5605 = vunpack.c.l.b16 %v4748
    %v5606 = vunpack.c.h.b16 %v4748
    %v5607 = vunpack.c.l.b16 %v4749
    %v5608 = vunpack.c.h.b16 %v4749
    %v5609 = vunpack.c.l.b16 %v4750
    %v5610 = vunpack.c.h.b16 %v4750
    %v5611 = vunpack.c.l.b16 %v4751
    %v5612 = vunpack.c.h.b16 %v4751
    %v5613 = vunpack.c.l.b16 %v4752
    %v5614 = vunpack.c.h.b16 %v4752
    %v5615 = vunpack.c.l.b16 %v4753
    %v5616 = vunpack.c.h.b16 %v4753
    %v5617 = vunpack.c.l.b16 %v4754
    %v5618 = vunpack.c.h.b16 %v4754
    %v5619 = vunpack.c.l.b16 %v4755
    %v5620 = vunpack.c.h.b16 %v4755
    %v5621 = vunpack.c.l.b16 %v4756
    %v5622 = vunpack.c.h.b16 %v4756
    %v5623 = vunpack.c.l.b16 %v4757
    %v5624 = vunpack.c.h.b16 %v4757
    %v5625 = vunpack.c.l.b16 %v4758
    %v5626 = vunpack.c.h.b16 %v4758
    %v5627 = vunpack.c.l.b16 %v4759
    %v5628 = vunpack.c.h.b16 %v4759
    %v5629 = vunpack.c.l.b16 %v4760
    %v5630 = vunpack.c.h.b16 %v4760
    %v5631 = vunpack.c.l.b16 %v4761
    %v5632 = vunpack.c.h.b16 %v4761
    %v5633 = vunpack.c.l.b16 %v4762
    %v5634 = vunpack.c.h.b16 %v4762
    %v5635 = vunpack.c.l.b16 %v4763
    %v5636 = vunpack.c.h.b16 %v4763
    %v5637 = vunpack.c.l.b16 %v4764
    %v5638 = vunpack.c.h.b16 %v4764
    %v5639 = vunpack.c.l.b16 %v4765
    %v5640 = vunpack.c.h.b16 %v4765
    %v5641 = vunpack.c.l.b16 %v4766
    %v5642 = vunpack.c.h.b16 %v4766
    %v5643 = vunpack.c.l.b16 %v4767
    %v5644 = vunpack.c.h.b16 %v4767
    %v5645 = vunpack.c.l.b16 %v4768
    %v5646 = vunpack.c.h.b16 %v4768
    %v5647 = vunpack.c.l.b16 %v4769
    %v5648 = vunpack.c.h.b16 %v4769
    %v5649 = vunpack.c.l.b16 %v4770
    %v5650 = vunpack.c.h.b16 %v4770
    %v5651 = vunpack.c.l.b16 %v4771
    %v5652 = vunpack.c.h.b16 %v4771
    %v5653 = vunpack.c.l.b16 %v4772
    %v5654 = vunpack.c.h.b16 %v4772
    %v5655 = vunpack.c.l.b16 %v4773
    %v5656 = vunpack.c.h.b16 %v4773
    %v5657 = vunpack.c.l.b16 %v4774
    %v5658 = vunpack.c.h.b16 %v4774
    %v5659 = vunpack.c.l.b16 %v4775
    %v5660 = vunpack.c.h.b16 %v4775
    %v5661 = vunpack.c.l.b16 %v4776
    %v5662 = vunpack.c.h.b16 %v4776
    %v5663 = vunpack.c.l.b16 %v4777
    %v5664 = vunpack.c.h.b16 %v4777
    %v5665 = vunpack.c.l.b16 %v4778
    %v5666 = vunpack.c.h.b16 %v4778
    %v5667 = vunpack.c.l.b16 %v4779
    %v5668 = vunpack.c.h.b16 %v4779
    %v5669 = vunpack.c.l.b16 %v4780
    %v5670 = vunpack.c.h.b16 %v4780
    %v5671 = vunpack.c.l.b16 %v4781
    %v5672 = vunpack.c.h.b16 %v4781
    %v5673 = vunpack.c.l.b16 %v4782
    %v5674 = vunpack.c.h.b16 %v4782
    %v5675 = vunpack.c.l.b16 %v4783
    %v5676 = vunpack.c.h.b16 %v4783
    %v5677 = vunpack.c.l.b16 %v4784
    %v5678 = vunpack.c.h.b16 %v4784
    %v5679 = vunpack.c.l.b16 %v4785
    %v5680 = vunpack.c.h.b16 %v4785
    %v5681 = vunpack.c.l.b16 %v4786
    %v5682 = vunpack.c.h.b16 %v4786
    %v5683 = vunpack.c.l.b16 %v4787
    %v5684 = vunpack.c.h.b16 %v4787
    %v5685 = vunpack.c.l.b16 %v4788
    %v5686 = vunpack.c.h.b16 %v4788
    %v5687 = vunpack.c.l.b16 %v4789
    %v5688 = vunpack.c.h.b16 %v4789
    %v5689 = vunpack.c.l.b16 %v4790
    %v5690 = vunpack.c.h.b16 %v4790
    %v5691 = vunpack.c.l.b16 %v4791
    %v5692 = vunpack.c.h.b16 %v4791
    %v5693 = vunpack.c.l.b16 %v4792
    %v5694 = vunpack.c.h.b16 %v4792
    %v5695 = vunpack.c.l.b16 %v4793
    %v5696 = vunpack.c.h.b16 %v4793
    %v5697 = vunpack.c.l.b16 %v4794
    %v5698 = vunpack.c.h.b16 %v4794
    %v5699 = vunpack.c.l.b16 %v4795
    %v5700 = vunpack.c.h.b16 %v4795
    %v5701 = vunpack.c.l.b16 %v4796
    %v5702 = vunpack.c.h.b16 %v4796
    %v5703 = vunpack.c.l.b16 %v4797
    %v5704 = vunpack.c.h.b16 %v4797
    %v5705 = vunpack.c.l.b16 %v4798
    %v5706 = vunpack.c.h.b16 %v4798
    %v5707 = vunpack.c.l.b16 %v4799
    %v5708 = vunpack.c.h.b16 %v4799
    %v5709 = vunpack.c.l.b16 %v4800
    %v5710 = vunpack.c.h.b16 %v4800
    %v5711 = vunpack.c.l.b16 %v4801
    %v5712 = vunpack.c.h.b16 %v4801
    %v5713 = vunpack.c.l.b16 %v4802
    %v5714 = vunpack.c.h.b16 %v4802
    %v5715 = vunpack.c.l.b16 %v4803
    %v5716 = vunpack.c.h.b16 %v4803
    %v5717 = vunpack.c.l.b16 %v4804
    %v5718 = vunpack.c.h.b16 %v4804
    %v5719 = vunpack.c.l.b16 %v4805
    %v5720 = vunpack.c.h.b16 %v4805
    %v5721 = vunpack.c.l.b16 %v4806
    %v5722 = vunpack.c.h.b16 %v4806
    %v5723 = vunpack.c.l.b16 %v4807
    %v5724 = vunpack.c.h.b16 %v4807
    %v5725 = vunpack.c.l.b16 %v4808
    %v5726 = vunpack.c.h.b16 %v4808
    %v5727 = vunpack.c.l.b16 %v4809
    %v5728 = vunpack.c.h.b16 %v4809
    %v5729 = vunpack.c.l.b16 %v4810
    %v5730 = vunpack.c.h.b16 %v4810
    %v5731 = vunpack.c.l.b16 %v4811
    %v5732 = vunpack.c.h.b16 %v4811
    %v5733 = vunpack.c.l.b16 %v4812
    %v5734 = vunpack.c.h.b16 %v4812
    %v5735 = vunpack.c.l.b16 %v4813
    %v5736 = vunpack.c.h.b16 %v4813
    %v5737 = vunpack.c.l.b16 %v4814
    %v5738 = vunpack.c.h.b16 %v4814
    %v5739 = vunpack.c.l.b16 %v4815
    %v5740 = vunpack.c.h.b16 %v4815
    %v5741 = vunpack.c.l.b16 %v4816
    %v5742 = vunpack.c.h.b16 %v4816
    %v5743 = vunpack.c.l.b16 %v4817
    %v5744 = vunpack.c.h.b16 %v4817
    %v5745 = vunpack.c.l.b16 %v4818
    %v5746 = vunpack.c.h.b16 %v4818
    %v5747 = vunpack.c.l.b16 %v4819
    %v5748 = vunpack.c.h.b16 %v4819
    %v5749 = vunpack.c.l.b16 %v4820
    %v5750 = vunpack.c.h.b16 %v4820
    %v5751 = vunpack.c.l.b16 %v4821
    %v5752 = vunpack.c.h.b16 %v4821
    %v5753 = vunpack.c.l.b16 %v4822
    %v5754 = vunpack.c.h.b16 %v4822
    %v5755 = vunpack.c.l.b16 %v4823
    %v5756 = vunpack.c.h.b16 %v4823
    %v5757 = vunpack.c.l.b16 %v4824
    %v5758 = vunpack.c.h.b16 %v4824
    %v5759 = vunpack.c.l.b16 %v4825
    %v5760 = vunpack.c.h.b16 %v4825
    %v5761 = vunpack.c.l.b16 %v4826
    %v5762 = vunpack.c.h.b16 %v4826
    %v5763 = vunpack.c.l.b16 %v4827
    %v5764 = vunpack.c.h.b16 %v4827
    %v5765 = vunpack.c.l.b16 %v4828
    %v5766 = vunpack.c.h.b16 %v4828
    %v5767 = vunpack.c.l.b16 %v4829
    %v5768 = vunpack.c.h.b16 %v4829
    %v5769 = vunpack.c.l.b16 %v4830
    %v5770 = vunpack.c.h.b16 %v4830
    %v5771 = vunpack.c.l.b16 %v4831
    %v5772 = vunpack.c.h.b16 %v4831
    %v5773 = vunpack.c.l.b16 %v4832
    %v5774 = vunpack.c.h.b16 %v4832
    %v5775 = vunpack.c.l.b16 %v4833
    %v5776 = vunpack.c.h.b16 %v4833
    %v5777 = vunpack.c.l.b16 %v4834
    %v5778 = vunpack.c.h.b16 %v4834
    %v5779 = vunpack.c.l.b16 %v4835
    %v5780 = vunpack.c.h.b16 %v4835
    %v5781 = vunpack.c.l.b16 %v4836
    %v5782 = vunpack.c.h.b16 %v4836
    %v5783 = vunpack.c.l.b16 %v4837
    %v5784 = vunpack.c.h.b16 %v4837
    %v5785 = vunpack.c.l.b16 %v4838
    %v5786 = vunpack.c.h.b16 %v4838
    %v5787 = vunpack.c.l.b16 %v4839
    %v5788 = vunpack.c.h.b16 %v4839
    %v5789 = vunpack.c.l.b16 %v4840
    %v5790 = vunpack.c.h.b16 %v4840
    %v5791 = vunpack.c.l.b16 %v4841
    %v5792 = vunpack.c.h.b16 %v4841
    %v5793 = vunpack.c.l.b16 %v4842
    %v5794 = vunpack.c.h.b16 %v4842
    %v5795 = vunpack.c.l.b16 %v4843
    %v5796 = vunpack.c.h.b16 %v4843
    %v5797 = vunpack.c.l.b16 %v4844
    %v5798 = vunpack.c.h.b16 %v4844
    %v5799 = vunpack.c.l.b16 %v4845
    %v5800 = vunpack.c.h.b16 %v4845
    %v5801 = vunpack.c.l.b16 %v4846
    %v5802 = vunpack.c.h.b16 %v4846
    %v5803 = vunpack.c.l.b16 %v4847
    %v5804 = vunpack.c.h.b16 %v4847
    %v5805 = vunpack.c.l.b16 %v4848
    %v5806 = vunpack.c.h.b16 %v4848
    %v5807 = vunpack.c.l.b16 %v4849
    %v5808 = vunpack.c.h.b16 %v4849
    %v5809 = vunpack.c.l.b16 %v4850
    %v5810 = vunpack.c.h.b16 %v4850
    %v5811 = vunpack.c.l.b16 %v4851
    %v5812 = vunpack.c.h.b16 %v4851
    %v5813 = vunpack.c.l.b16 %v4852
    %v5814 = vunpack.c.h.b16 %v4852
    %v5815 = vunpack.c.l.b16 %v4853
    %v5816 = vunpack.c.h.b16 %v4853
    %v5817 = vunpack.c.l.b16 %v4854
    %v5818 = vunpack.c.h.b16 %v4854
    %v5819 = vunpack.c.l.b16 %v4855
    %v5820 = vunpack.c.h.b16 %v4855
    %v5821 = vunpack.c.l.b16 %v4856
    %v5822 = vunpack.c.h.b16 %v4856
    %v5823 = vunpack.c.l.b16 %v4857
    %v5824 = vunpack.c.h.b16 %v4857
    %v5825 = vunpack.c.l.b16 %v4858
    %v5826 = vunpack.c.h.b16 %v4858
    %v5827 = vunpack.c.l.b16 %v4859
    %v5828 = vunpack.c.h.b16 %v4859
    %v5829 = vunpack.c.l.b16 %v4860
    %v5830 = vunpack.c.h.b16 %v4860
    %v5831 = vpack.c.b16 %v5195, %v5191
    %v5832 = vpack.c.b16 %v5196, %v5192
    %v5833 = vpack.c.b16 %v5197, %v5193
    %v5834 = vpack.c.b16 %v5198, %v5194
    %v5835 = vpack.c.b16 %v5203, %v5199
    %v5836 = vpack.c.b16 %v5204, %v5200
    %v5837 = vpack.c.b16 %v5205, %v5201
    %v5838 = vpack.c.b16 %v5206, %v5202
    %v5839 = vpack.c.b16 %v5211, %v5207
    %v5840 = vpack.c.b16 %v5212, %v5208
    %v5841 = vpack.c.b16 %v5213, %v5209
    %v5842 = vpack.c.b16 %v5214, %v5210
    %v5843 = vpack.c.b16 %v5219, %v5215
    %v5844 = vpack.c.b16 %v5220, %v5216
    %v5845 = vpack.c.b16 %v5221, %v5217
    %v5846 = vpack.c.b16 %v5222, %v5218
    %v5847 = vpack.c.b16 %v5227, %v5223
    %v5848 = vpack.c.b16 %v5228, %v5224
    %v5849 = vpack.c.b16 %v5229, %v5225
    %v5850 = vpack.c.b16 %v5230, %v5226
    %v5851 = vpack.c.b16 %v5235, %v5231
    %v5852 = vpack.c.b16 %v5236, %v5232
    %v5853 = vpack.c.b16 %v5237, %v5233
    %v5854 = vpack.c.b16 %v5238, %v5234
    %v5855 = vpack.c.b16 %v5243, %v5239
    %v5856 = vpack.c.b16 %v5244, %v5240
    %v5857 = vpack.c.b16 %v5245, %v5241
    %v5858 = vpack.c.b16 %v5246, %v5242
    %v5859 = vpack.c.b16 %v5251, %v5247
    %v5860 = vpack.c.b16 %v5252, %v5248
    %v5861 = vpack.c.b16 %v5253, %v5249
    %v5862 = vpack.c.b16 %v5254, %v5250
    %v5863 = vpack.c.b16 %v5259, %v5255
    %v5864 = vpack.c.b16 %v5260, %v5256
    %v5865 = vpack.c.b16 %v5261, %v5257
    %v5866 = vpack.c.b16 %v5262, %v5258
    %v5867 = vpack.c.b16 %v5267, %v5263
    %v5868 = vpack.c.b16 %v5268, %v5264
    %v5869 = vpack.c.b16 %v5269, %v5265
    %v5870 = vpack.c.b16 %v5270, %v5266
    %v5871 = vpack.c.b16 %v5275, %v5271
    %v5872 = vpack.c.b16 %v5276, %v5272
    %v5873 = vpack.c.b16 %v5277, %v5273
    %v5874 = vpack.c.b16 %v5278, %v5274
    %v5875 = vpack.c.b16 %v5283, %v5279
    %v5876 = vpack.c.b16 %v5284, %v5280
    %v5877 = vpack.c.b16 %v5285, %v5281
    %v5878 = vpack.c.b16 %v5286, %v5282
    %v5879 = vpack.c.b16 %v5291, %v5287
    %v5880 = vpack.c.b16 %v5292, %v5288
    %v5881 = vpack.c.b16 %v5293, %v5289
    %v5882 = vpack.c.b16 %v5294, %v5290
    %v5883 = vpack.c.b16 %v5299, %v5295
    %v5884 = vpack.c.b16 %v5300, %v5296
    %v5885 = vpack.c.b16 %v5301, %v5297
    %v5886 = vpack.c.b16 %v5302, %v5298
    %v5887 = vpack.c.b16 %v5307, %v5303
    %v5888 = vpack.c.b16 %v5308, %v5304
    %v5889 = vpack.c.b16 %v5309, %v5305
    %v5890 = vpack.c.b16 %v5310, %v5306
    %v5891 = vpack.c.b16 %v5315, %v5311
    %v5892 = vpack.c.b16 %v5316, %v5312
    %v5893 = vpack.c.b16 %v5317, %v5313
    %v5894 = vpack.c.b16 %v5318, %v5314
    %v5895 = vpack.c.b16 %v5323, %v5319
    %v5896 = vpack.c.b16 %v5324, %v5320
    %v5897 = vpack.c.b16 %v5325, %v5321
    %v5898 = vpack.c.b16 %v5326, %v5322
    %v5899 = vpack.c.b16 %v5331, %v5327
    %v5900 = vpack.c.b16 %v5332, %v5328
    %v5901 = vpack.c.b16 %v5333, %v5329
    %v5902 = vpack.c.b16 %v5334, %v5330
    %v5903 = vpack.c.b16 %v5339, %v5335
    %v5904 = vpack.c.b16 %v5340, %v5336
    %v5905 = vpack.c.b16 %v5341, %v5337
    %v5906 = vpack.c.b16 %v5342, %v5338
    %v5907 = vpack.c.b16 %v5347, %v5343
    %v5908 = vpack.c.b16 %v5348, %v5344
    %v5909 = vpack.c.b16 %v5349, %v5345
    %v5910 = vpack.c.b16 %v5350, %v5346
    %v5911 = vpack.c.b16 %v5355, %v5351
    %v5912 = vpack.c.b16 %v5356, %v5352
    %v5913 = vpack.c.b16 %v5357, %v5353
    %v5914 = vpack.c.b16 %v5358, %v5354
    %v5915 = vpack.c.b16 %v5363, %v5359
    %v5916 = vpack.c.b16 %v5364, %v5360
    %v5917 = vpack.c.b16 %v5365, %v5361
    %v5918 = vpack.c.b16 %v5366, %v5362
    %v5919 = vpack.c.b16 %v5371, %v5367
    %v5920 = vpack.c.b16 %v5372, %v5368
    %v5921 = vpack.c.b16 %v5373, %v5369
    %v5922 = vpack.c.b16 %v5374, %v5370
    %v5923 = vpack.c.b16 %v5379, %v5375
    %v5924 = vpack.c.b16 %v5380, %v5376
    %v5925 = vpack.c.b16 %v5381, %v5377
    %v5926 = vpack.c.b16 %v5382, %v5378
    %v5927 = vpack.c.b16 %v5387, %v5383
    %v5928 = vpack.c.b16 %v5388, %v5384
    %v5929 = vpack.c.b16 %v5389, %v5385
    %v5930 = vpack.c.b16 %v5390, %v5386
    %v5931 = vpack.c.b16 %v5395, %v5391
    %v5932 = vpack.c.b16 %v5396, %v5392
    %v5933 = vpack.c.b16 %v5397, %v5393
    %v5934 = vpack.c.b16 %v5398, %v5394
    %v5935 = vpack.c.b16 %v5403, %v5399
    %v5936 = vpack.c.b16 %v5404, %v5400
    %v5937 = vpack.c.b16 %v5405, %v5401
    %v5938 = vpack.c.b16 %v5406, %v5402
    %v5939 = vpack.c.b16 %v5411, %v5407
    %v5940 = vpack.c.b16 %v5412, %v5408
    %v5941 = vpack.c.b16 %v5413, %v5409
    %v5942 = vpack.c.b16 %v5414, %v5410
    %v5943 = vpack.c.b16 %v5419, %v5415
    %v5944 = vpack.c.b16 %v5420, %v5416
    %v5945 = vpack.c.b16 %v5421, %v5417
    %v5946 = vpack.c.b16 %v5422, %v5418
    %v5947 = vpack.c.b16 %v5427, %v5423
    %v5948 = vpack.c.b16 %v5428, %v5424
    %v5949 = vpack.c.b16 %v5429, %v5425
    %v5950 = vpack.c.b16 %v5430, %v5426
    %v5951 = vpack.c.b16 %v5435, %v5431
    %v5952 = vpack.c.b16 %v5436, %v5432
    %v5953 = vpack.c.b16 %v5437, %v5433
    %v5954 = vpack.c.b16 %v5438, %v5434
    %v5955 = vpack.c.b16 %v5443, %v5439
    %v5956 = vpack.c.b16 %v5444, %v5440
    %v5957 = vpack.c.b16 %v5445, %v5441
    %v5958 = vpack.c.b16 %v5446, %v5442
    %v5959 = vpack.c.b16 %v5451, %v5447
    %v5960 = vpack.c.b16 %v5452, %v5448
    %v5961 = vpack.c.b16 %v5453, %v5449
    %v5962 = vpack.c.b16 %v5454, %v5450
    %v5963 = vpack.c.b16 %v5459, %v5455
    %v5964 = vpack.c.b16 %v5460, %v5456
    %v5965 = vpack.c.b16 %v5461, %v5457
    %v5966 = vpack.c.b16 %v5462, %v5458
    %v5967 = vpack.c.b16 %v5467, %v5463
    %v5968 = vpack.c.b16 %v5468, %v5464
    %v5969 = vpack.c.b16 %v5469, %v5465
    %v5970 = vpack.c.b16 %v5470, %v5466
    %v5971 = vpack.c.b16 %v5475, %v5471
    %v5972 = vpack.c.b16 %v5476, %v5472
    %v5973 = vpack.c.b16 %v5477, %v5473
    %v5974 = vpack.c.b16 %v5478, %v5474
    %v5975 = vpack.c.b16 %v5483, %v5479
    %v5976 = vpack.c.b16 %v5484, %v5480
    %v5977 = vpack.c.b16 %v5485, %v5481
    %v5978 = vpack.c.b16 %v5486, %v5482
    %v5979 = vpack.c.b16 %v5491, %v5487
    %v5980 = vpack.c.b16 %v5492, %v5488
    %v5981 = vpack.c.b16 %v5493, %v5489
    %v5982 = vpack.c.b16 %v5494, %v5490
    %v5983 = vpack.c.b16 %v5499, %v5495
    %v5984 = vpack.c.b16 %v5500, %v5496
    %v5985 = vpack.c.b16 %v5501, %v5497
    %v5986 = vpack.c.b16 %v5502, %v5498
    %v5987 = vpack.c.b16 %v5507, %v5503
    %v5988 = vpack.c.b16 %v5508, %v5504
    %v5989 = vpack.c.b16 %v5509, %v5505
    %v5990 = vpack.c.b16 %v5510, %v5506
    %v5991 = vpack.c.b16 %v5515, %v5511
    %v5992 = vpack.c.b16 %v5516, %v5512
    %v5993 = vpack.c.b16 %v5517, %v5513
    %v5994 = vpack.c.b16 %v5518, %v5514
    %v5995 = vpack.c.b16 %v5523, %v5519
    %v5996 = vpack.c.b16 %v5524, %v5520
    %v5997 = vpack.c.b16 %v5525, %v5521
    %v5998 = vpack.c.b16 %v5526, %v5522
    %v5999 = vpack.c.b16 %v5531, %v5527
    %v6000 = vpack.c.b16 %v5532, %v5528
    %v6001 = vpack.c.b16 %v5533, %v5529
    %v6002 = vpack.c.b16 %v5534, %v5530
    %v6003 = vpack.c.b16 %v5539, %v5535
    %v6004 = vpack.c.b16 %v5540, %v5536
    %v6005 = vpack.c.b16 %v5541, %v5537
    %v6006 = vpack.c.b16 %v5542, %v5538
    %v6007 = vpack.c.b16 %v5547, %v5543
    %v6008 = vpack.c.b16 %v5548, %v5544
    %v6009 = vpack.c.b16 %v5549, %v5545
    %v6010 = vpack.c.b16 %v5550, %v5546
    %v6011 = vpack.c.b16 %v5555, %v5551
    %v6012 = vpack.c.b16 %v5556, %v5552
    %v6013 = vpack.c.b16 %v5557, %v5553
    %v6014 = vpack.c.b16 %v5558, %v5554
    %v6015 = vpack.c.b16 %v5563, %v5559
    %v6016 = vpack.c.b16 %v5564, %v5560
    %v6017 = vpack.c.b16 %v5565, %v5561
    %v6018 = vpack.c.b16 %v5566, %v5562
    %v6019 = vpack.c.b16 %v5571, %v5567
    %v6020 = vpack.c.b16 %v5572, %v5568
    %v6021 = vpack.c.b16 %v5573, %v5569
    %v6022 = vpack.c.b16 %v5574, %v5570
    %v6023 = vpack.c.b16 %v5579, %v5575
    %v6024 = vpack.c.b16 %v5580, %v5576
    %v6025 = vpack.c.b16 %v5581, %v5577
    %v6026 = vpack.c.b16 %v5582, %v5578
    %v6027 = vpack.c.b16 %v5587, %v5583
    %v6028 = vpack.c.b16 %v5588, %v5584
    %v6029 = vpack.c.b16 %v5589, %v5585
    %v6030 = vpack.c.b16 %v5590, %v5586
    %v6031 = vpack.c.b16 %v5595, %v5591
    %v6032 = vpack.c.b16 %v5596, %v5592
    %v6033 = vpack.c.b16 %v5597, %v5593
    %v6034 = vpack.c.b16 %v5598, %v5594
    %v6035 = vpack.c.b16 %v5603, %v5599
    %v6036 = vpack.c.b16 %v5604, %v5600
    %v6037 = vpack.c.b16 %v5605, %v5601
    %v6038 = vpack.c.b16 %v5606, %v5602
    %v6039 = vpack.c.b16 %v5611, %v5607
    %v6040 = vpack.c.b16 %v5612, %v5608
    %v6041 = vpack.c.b16 %v5613, %v5609
    %v6042 = vpack.c.b16 %v5614, %v5610
    %v6043 = vpack.c.b16 %v5619, %v5615
    %v6044 = vpack.c.b16 %v5620, %v5616
    %v6045 = vpack.c.b16 %v5621, %v5617
    %v6046 = vpack.c.b16 %v5622, %v5618
    %v6047 = vpack.c.b16 %v5627, %v5623
    %v6048 = vpack.c.b16 %v5628, %v5624
    %v6049 = vpack.c.b16 %v5629, %v5625
    %v6050 = vpack.c.b16 %v5630, %v5626
    %v6051 = vpack.c.b16 %v5635, %v5631
    %v6052 = vpack.c.b16 %v5636, %v5632
    %v6053 = vpack.c.b16 %v5637, %v5633
    %v6054 = vpack.c.b16 %v5638, %v5634
    %v6055 = vpack.c.b16 %v5643, %v5639
    %v6056 = vpack.c.b16 %v5644, %v5640
    %v6057 = vpack.c.b16 %v5645, %v5641
    %v6058 = vpack.c.b16 %v5646, %v5642
    %v6059 = vpack.c.b16 %v5651, %v5647
    %v6060 = vpack.c.b16 %v5652, %v5648
    %v6061 = vpack.c.b16 %v5653, %v5649
    %v6062 = vpack.c.b16 %v5654, %v5650
    %v6063 = vpack.c.b16 %v5659, %v5655
    %v6064 = vpack.c.b16 %v5660, %v5656
    %v6065 = vpack.c.b16 %v5661, %v5657
    %v6066 = vpack.c.b16 %v5662, %v5658
    %v6067 = vpack.c.b16 %v5667, %v5663
    %v6068 = vpack.c.b16 %v5668, %v5664
    %v6069 = vpack.c.b16 %v5669, %v5665
    %v6070 = vpack.c.b16 %v5670, %v5666
    %v6071 = vpack.c.b16 %v5675, %v5671
    %v6072 = vpack.c.b16 %v5676, %v5672
    %v6073 = vpack.c.b16 %v5677, %v5673
    %v6074 = vpack.c.b16 %v5678, %v5674
    %v6075 = vpack.c.b16 %v5683, %v5679
    %v6076 = vpack.c.b16 %v5684, %v5680
    %v6077 = vpack.c.b16 %v5685, %v5681
    %v6078 = vpack.c.b16 %v5686, %v5682
    %v6079 = vpack.c.b16 %v5691, %v5687
    %v6080 = vpack.c.b16 %v5692, %v5688
    %v6081 = vpack.c.b16 %v5693, %v5689
    %v6082 = vpack.c.b16 %v5694, %v5690
    %v6083 = vpack.c.b16 %v5699, %v5695
    %v6084 = vpack.c.b16 %v5700, %v5696
    %v6085 = vpack.c.b16 %v5701, %v5697
    %v6086 = vpack.c.b16 %v5702, %v5698
    %v6087 = vpack.c.b16 %v5707, %v5703
    %v6088 = vpack.c.b16 %v5708, %v5704
    %v6089 = vpack.c.b16 %v5709, %v5705
    %v6090 = vpack.c.b16 %v5710, %v5706
    %v6091 = vpack.c.b16 %v5715, %v5711
    %v6092 = vpack.c.b16 %v5716, %v5712
    %v6093 = vpack.c.b16 %v5717, %v5713
    %v6094 = vpack.c.b16 %v5718, %v5714
    %v6095 = vpack.c.b16 %v5723, %v5719
    %v6096 = vpack.c.b16 %v5724, %v5720
    %v6097 = vpack.c.b16 %v5725, %v5721
    %v6098 = vpack.c.b16 %v5726, %v5722
    %v6099 = vpack.c.b16 %v5731, %v5727
    %v6100 = vpack.c.b16 %v5732, %v5728
    %v6101 = vpack.c.b16 %v5733, %v5729
    %v6102 = vpack.c.b16 %v5734, %v5730
    %v6103 = vpack.c.b16 %v5739, %v5735
    %v6104 = vpack.c.b16 %v5740, %v5736
    %v6105 = vpack.c.b16 %v5741, %v5737
    %v6106 = vpack.c.b16 %v5742, %v5738
    %v6107 = vpack.c.b16 %v5747, %v5743
    %v6108 = vpack.c.b16 %v5748, %v5744
    %v6109 = vpack.c.b16 %v5749, %v5745
    %v6110 = vpack.c.b16 %v5750, %v5746
    %v6111 = vpack.c.b16 %v5755, %v5751
    %v6112 = vpack.c.b16 %v5756, %v5752
    %v6113 = vpack.c.b16 %v5757, %v5753
    %v6114 = vpack.c.b16 %v5758, %v5754
    %v6115 = vpack.c.b16 %v5763, %v5759
    %v6116 = vpack.c.b16 %v5764, %v5760
    %v6117 = vpack.c.b16 %v5765, %v5761
    %v6118 = vpack.c.b16 %v5766, %v5762
    %v6119 = vpack.c.b16 %v5771, %v5767
    %v6120 = vpack.c.b16 %v5772, %v5768
    %v6121 = vpack.c.b16 %v5773, %v5769
    %v6122 = vpack.c.b16 %v5774, %v5770
    %v6123 = vpack.c.b16 %v5779, %v5775
    %v6124 = vpack.c.b16 %v5780, %v5776
    %v6125 = vpack.c.b16 %v5781, %v5777
    %v6126 = vpack.c.b16 %v5782, %v5778
    %v6127 = vpack.c.b16 %v5787, %v5783
    %v6128 = vpack.c.b16 %v5788, %v5784
    %v6129 = vpack.c.b16 %v5789, %v5785
    %v6130 = vpack.c.b16 %v5790, %v5786
    %v6131 = vpack.c.b16 %v5795, %v5791
    %v6132 = vpack.c.b16 %v5796, %v5792
    %v6133 = vpack.c.b16 %v5797, %v5793
    %v6134 = vpack.c.b16 %v5798, %v5794
    %v6135 = vpack.c.b16 %v5803, %v5799
    %v6136 = vpack.c.b16 %v5804, %v5800
    %v6137 = vpack.c.b16 %v5805, %v5801
    %v6138 = vpack.c.b16 %v5806, %v5802
    %v6139 = vpack.c.b16 %v5811, %v5807
    %v6140 = vpack.c.b16 %v5812, %v5808
    %v6141 = vpack.c.b16 %v5813, %v5809
    %v6142 = vpack.c.b16 %v5814, %v5810
    %v6143 = vpack.c.b16 %v5819, %v5815
    %v6144 = vpack.c.b16 %v5820, %v5816
    %v6145 = vpack.c.b16 %v5821, %v5817
    %v6146 = vpack.c.b16 %v5822, %v5818
    %v6147 = vpack.c.b16 %v5827, %v5823
    %v6148 = vpack.c.b16 %v5828, %v5824
    %v6149 = vpack.c.b16 %v5829, %v5825
    %v6150 = vpack.c.b16 %v5830, %v5826
    %6471 = vmatpush.bf16.msra.mxu0 %v5859
    %6472 = vmatpush.bf16.msra.mxu0 %v5855
    %6473 = vmatpush.bf16.msra.mxu0 %v5851
    %6474 = vmatpush.bf16.msra.mxu0 %v5847
    %6475 = vmatpush.bf16.msra.mxu0 %v5843
    %6476 = vmatpush.bf16.msra.mxu0 %v5839
    %6477 = vmatpush.bf16.msra.mxu0 %v5835
    %6478 = vmatpush.bf16.msra.mxu0 %v5831
    %6479 = vmatmul.bf16.gmra.mxu0 %v4531
    %v6480 = vpop.f32.mrf.mxu0
    %v6481 = vadd.f32 %v4863, %v6480
    %v6482 = vpop.f32.mrf.mxu0
    %6483 = vdwg.mxu0
    %6484 = vmatpush.bf16.msra.mxu0 %v5891
    %6485 = vmatpush.bf16.msra.mxu0 %v5887
    %6486 = vmatpush.bf16.msra.mxu0 %v5883
    %6487 = vmatpush.bf16.msra.mxu0 %v5879
    %6488 = vmatpush.bf16.msra.mxu0 %v5875
    %6489 = vmatpush.bf16.msra.mxu0 %v5871
    %6490 = vmatpush.bf16.msra.mxu0 %v5867
    %6491 = vmatpush.bf16.msra.mxu0 %v5863
    %6492 = vmatmul.bf16.gmra.mxu0 %v4532
    %v6493 = vpop.f32.mrf.mxu0
    %v6494 = vadd.f32 %v6481, %v6493
    %v6495 = vpop.f32.mrf.mxu0
    %6496 = vdwg.mxu0
    %6497 = vmatpush.bf16.msra.mxu0 %v5923
    %6498 = vmatpush.bf16.msra.mxu0 %v5919
    %6499 = vmatpush.bf16.msra.mxu0 %v5915
    %6500 = vmatpush.bf16.msra.mxu0 %v5911
    %6501 = vmatpush.bf16.msra.mxu0 %v5907
    %6502 = vmatpush.bf16.msra.mxu0 %v5903
    %6503 = vmatpush.bf16.msra.mxu0 %v5899
    %6504 = vmatpush.bf16.msra.mxu0 %v5895
    %6505 = vmatmul.bf16.gmra.mxu0 %v4533
    %v6506 = vpop.f32.mrf.mxu0
    %v6507 = vadd.f32 %v6494, %v6506
    %v6508 = vpop.f32.mrf.mxu0
    %6509 = vdwg.mxu0
    %6510 = vmatpush.bf16.msra.mxu0 %v5955
    %6511 = vmatpush.bf16.msra.mxu0 %v5951
    %6512 = vmatpush.bf16.msra.mxu0 %v5947
    %6513 = vmatpush.bf16.msra.mxu0 %v5943
    %6514 = vmatpush.bf16.msra.mxu0 %v5939
    %6515 = vmatpush.bf16.msra.mxu0 %v5935
    %6516 = vmatpush.bf16.msra.mxu0 %v5931
    %6517 = vmatpush.bf16.msra.mxu0 %v5927
    %6518 = vmatmul.bf16.gmra.mxu0 %v4534
    %v6519 = vpop.f32.mrf.mxu0
    %v6520 = vadd.f32 %v6507, %v6519
    %v6521 = vpop.f32.mrf.mxu0
    %6522 = vdwg.mxu0
    %6523 = vmatpush.bf16.msra.mxu0 %v5987
    %6524 = vmatpush.bf16.msra.mxu0 %v5983
    %6525 = vmatpush.bf16.msra.mxu0 %v5979
    %6526 = vmatpush.bf16.msra.mxu0 %v5975
    %6527 = vmatpush.bf16.msra.mxu0 %v5971
    %6528 = vmatpush.bf16.msra.mxu0 %v5967
    %6529 = vmatpush.bf16.msra.mxu0 %v5963
    %6530 = vmatpush.bf16.msra.mxu0 %v5959
    %6531 = vmatmul.bf16.gmra.mxu0 %v4535
    %v6532 = vpop.f32.mrf.mxu0
    %v6533 = vadd.f32 %v6520, %v6532
    %v6534 = vpop.f32.mrf.mxu0
    %6535 = vdwg.mxu0
    %6536 = vmatpush.bf16.msra.mxu0 %v6019
    %6537 = vmatpush.bf16.msra.mxu0 %v6015
    %6538 = vmatpush.bf16.msra.mxu0 %v6011
    %6539 = vmatpush.bf16.msra.mxu0 %v6007
    %6540 = vmatpush.bf16.msra.mxu0 %v6003
    %6541 = vmatpush.bf16.msra.mxu0 %v5999
    %6542 = vmatpush.bf16.msra.mxu0 %v5995
    %6543 = vmatpush.bf16.msra.mxu0 %v5991
    %6544 = vmatmul.bf16.gmra.mxu0 %v4536
    %v6545 = vpop.f32.mrf.mxu0
    %v6546 = vadd.f32 %v6533, %v6545
    %v6547 = vpop.f32.mrf.mxu0
    %6548 = vdwg.mxu0
    %6549 = vmatpush.bf16.msra.mxu0 %v6051
    %6550 = vmatpush.bf16.msra.mxu0 %v6047
    %6551 = vmatpush.bf16.msra.mxu0 %v6043
    %6552 = vmatpush.bf16.msra.mxu0 %v6039
    %6553 = vmatpush.bf16.msra.mxu0 %v6035
    %6554 = vmatpush.bf16.msra.mxu0 %v6031
    %6555 = vmatpush.bf16.msra.mxu0 %v6027
    %6556 = vmatpush.bf16.msra.mxu0 %v6023
    %6557 = vmatmul.bf16.gmra.mxu0 %v4537
    %v6558 = vpop.f32.mrf.mxu0
    %v6559 = vadd.f32 %v6546, %v6558
    %v6560 = vpop.f32.mrf.mxu0
    %6561 = vdwg.mxu0
    %6562 = vmatpush.bf16.msra.mxu0 %v6083
    %6563 = vmatpush.bf16.msra.mxu0 %v6079
    %6564 = vmatpush.bf16.msra.mxu0 %v6075
    %6565 = vmatpush.bf16.msra.mxu0 %v6071
    %6566 = vmatpush.bf16.msra.mxu0 %v6067
    %6567 = vmatpush.bf16.msra.mxu0 %v6063
    %6568 = vmatpush.bf16.msra.mxu0 %v6059
    %6569 = vmatpush.bf16.msra.mxu0 %v6055
    %6570 = vmatmul.bf16.gmra.mxu0 %v4538
    %v6571 = vpop.f32.mrf.mxu0
    %v6572 = vadd.f32 %v6559, %v6571
    %v6573 = vpop.f32.mrf.mxu0
    %6574 = vdwg.mxu0
    %6575 = vmatpush.bf16.msra.mxu0 %v6115
    %6576 = vmatpush.bf16.msra.mxu0 %v6111
    %6577 = vmatpush.bf16.msra.mxu0 %v6107
    %6578 = vmatpush.bf16.msra.mxu0 %v6103
    %6579 = vmatpush.bf16.msra.mxu0 %v6099
    %6580 = vmatpush.bf16.msra.mxu0 %v6095
    %6581 = vmatpush.bf16.msra.mxu0 %v6091
    %6582 = vmatpush.bf16.msra.mxu0 %v6087
    %6583 = vmatmul.bf16.gmra.mxu0 %v4539
    %v6584 = vpop.f32.mrf.mxu0
    %v6585 = vadd.f32 %v6572, %v6584
    %v6586 = vpop.f32.mrf.mxu0
    %6587 = vdwg.mxu0
    %6588 = vmatpush.bf16.msra.mxu0 %v6147
    %6589 = vmatpush.bf16.msra.mxu0 %v6143
    %6590 = vmatpush.bf16.msra.mxu0 %v6139
    %6591 = vmatpush.bf16.msra.mxu0 %v6135
    %6592 = vmatpush.bf16.msra.mxu0 %v6131
    %6593 = vmatpush.bf16.msra.mxu0 %v6127
    %6594 = vmatpush.bf16.msra.mxu0 %v6123
    %6595 = vmatpush.bf16.msra.mxu0 %v6119
    %6596 = vmatmul.bf16.gmra.mxu0 %v4540
    %v6597 = vpop.f32.mrf.mxu0
    %v6598 = vadd.f32 %v6585, %v6597
    %v6599 = vpop.f32.mrf.mxu0
    %6600 = vdwg.mxu0
    %6601 = vmatpush.bf16.msra.mxu0 %v5860
    %6602 = vmatpush.bf16.msra.mxu0 %v5856
    %6603 = vmatpush.bf16.msra.mxu0 %v5852
    %6604 = vmatpush.bf16.msra.mxu0 %v5848
    %6605 = vmatpush.bf16.msra.mxu0 %v5844
    %6606 = vmatpush.bf16.msra.mxu0 %v5840
    %6607 = vmatpush.bf16.msra.mxu0 %v5836
    %6608 = vmatpush.bf16.msra.mxu0 %v5832
    %6609 = vmatmul.bf16.gmra.mxu0 %v4531
    %v6610 = vpop.f32.mrf.mxu0
    %v6611 = vadd.f32 %v4864, %v6610
    %v6612 = vpop.f32.mrf.mxu0
    %6613 = vdwg.mxu0
    %6614 = vmatpush.bf16.msra.mxu0 %v5892
    %6615 = vmatpush.bf16.msra.mxu0 %v5888
    %6616 = vmatpush.bf16.msra.mxu0 %v5884
    %6617 = vmatpush.bf16.msra.mxu0 %v5880
    %6618 = vmatpush.bf16.msra.mxu0 %v5876
    %6619 = vmatpush.bf16.msra.mxu0 %v5872
    %6620 = vmatpush.bf16.msra.mxu0 %v5868
    %6621 = vmatpush.bf16.msra.mxu0 %v5864
    %6622 = vmatmul.bf16.gmra.mxu0 %v4532
    %v6623 = vpop.f32.mrf.mxu0
    %v6624 = vadd.f32 %v6611, %v6623
    %v6625 = vpop.f32.mrf.mxu0
    %6626 = vdwg.mxu0
    %6627 = vmatpush.bf16.msra.mxu0 %v5924
    %6628 = vmatpush.bf16.msra.mxu0 %v5920
    %6629 = vmatpush.bf16.msra.mxu0 %v5916
    %6630 = vmatpush.bf16.msra.mxu0 %v5912
    %6631 = vmatpush.bf16.msra.mxu0 %v5908
    %6632 = vmatpush.bf16.msra.mxu0 %v5904
    %6633 = vmatpush.bf16.msra.mxu0 %v5900
    %6634 = vmatpush.bf16.msra.mxu0 %v5896
    %6635 = vmatmul.bf16.gmra.mxu0 %v4533
    %v6636 = vpop.f32.mrf.mxu0
    %v6637 = vadd.f32 %v6624, %v6636
    %v6638 = vpop.f32.mrf.mxu0
    %6639 = vdwg.mxu0
    %6640 = vmatpush.bf16.msra.mxu0 %v5956
    %6641 = vmatpush.bf16.msra.mxu0 %v5952
    %6642 = vmatpush.bf16.msra.mxu0 %v5948
    %6643 = vmatpush.bf16.msra.mxu0 %v5944
    %6644 = vmatpush.bf16.msra.mxu0 %v5940
    %6645 = vmatpush.bf16.msra.mxu0 %v5936
    %6646 = vmatpush.bf16.msra.mxu0 %v5932
    %6647 = vmatpush.bf16.msra.mxu0 %v5928
    %6648 = vmatmul.bf16.gmra.mxu0 %v4534
    %v6649 = vpop.f32.mrf.mxu0
    %v6650 = vadd.f32 %v6637, %v6649
    %v6651 = vpop.f32.mrf.mxu0
    %6652 = vdwg.mxu0
    %6653 = vmatpush.bf16.msra.mxu0 %v5988
    %6654 = vmatpush.bf16.msra.mxu0 %v5984
    %6655 = vmatpush.bf16.msra.mxu0 %v5980
    %6656 = vmatpush.bf16.msra.mxu0 %v5976
    %6657 = vmatpush.bf16.msra.mxu0 %v5972
    %6658 = vmatpush.bf16.msra.mxu0 %v5968
    %6659 = vmatpush.bf16.msra.mxu0 %v5964
    %6660 = vmatpush.bf16.msra.mxu0 %v5960
    %6661 = vmatmul.bf16.gmra.mxu0 %v4535
    %v6662 = vpop.f32.mrf.mxu0
    %v6663 = vadd.f32 %v6650, %v6662
    %v6664 = vpop.f32.mrf.mxu0
    %6665 = vdwg.mxu0
    %6666 = vmatpush.bf16.msra.mxu0 %v6020
    %6667 = vmatpush.bf16.msra.mxu0 %v6016
    %6668 = vmatpush.bf16.msra.mxu0 %v6012
    %6669 = vmatpush.bf16.msra.mxu0 %v6008
    %6670 = vmatpush.bf16.msra.mxu0 %v6004
    %6671 = vmatpush.bf16.msra.mxu0 %v6000
    %6672 = vmatpush.bf16.msra.mxu0 %v5996
    %6673 = vmatpush.bf16.msra.mxu0 %v5992
    %6674 = vmatmul.bf16.gmra.mxu0 %v4536
    %v6675 = vpop.f32.mrf.mxu0
    %v6676 = vadd.f32 %v6663, %v6675
    %v6677 = vpop.f32.mrf.mxu0
    %6678 = vdwg.mxu0
    %6679 = vmatpush.bf16.msra.mxu0 %v6052
    %6680 = vmatpush.bf16.msra.mxu0 %v6048
    %6681 = vmatpush.bf16.msra.mxu0 %v6044
    %6682 = vmatpush.bf16.msra.mxu0 %v6040
    %6683 = vmatpush.bf16.msra.mxu0 %v6036
    %6684 = vmatpush.bf16.msra.mxu0 %v6032
    %6685 = vmatpush.bf16.msra.mxu0 %v6028
    %6686 = vmatpush.bf16.msra.mxu0 %v6024
    %6687 = vmatmul.bf16.gmra.mxu0 %v4537
    %v6688 = vpop.f32.mrf.mxu0
    %v6689 = vadd.f32 %v6676, %v6688
    %v6690 = vpop.f32.mrf.mxu0
    %6691 = vdwg.mxu0
    %6692 = vmatpush.bf16.msra.mxu0 %v6084
    %6693 = vmatpush.bf16.msra.mxu0 %v6080
    %6694 = vmatpush.bf16.msra.mxu0 %v6076
    %6695 = vmatpush.bf16.msra.mxu0 %v6072
    %6696 = vmatpush.bf16.msra.mxu0 %v6068
    %6697 = vmatpush.bf16.msra.mxu0 %v6064
    %6698 = vmatpush.bf16.msra.mxu0 %v6060
    %6699 = vmatpush.bf16.msra.mxu0 %v6056
    %6700 = vmatmul.bf16.gmra.mxu0 %v4538
    %v6701 = vpop.f32.mrf.mxu0
    %v6702 = vadd.f32 %v6689, %v6701
    %v6703 = vpop.f32.mrf.mxu0
    %6704 = vdwg.mxu0
    %6705 = vmatpush.bf16.msra.mxu0 %v6116
    %6706 = vmatpush.bf16.msra.mxu0 %v6112
    %6707 = vmatpush.bf16.msra.mxu0 %v6108
    %6708 = vmatpush.bf16.msra.mxu0 %v6104
    %6709 = vmatpush.bf16.msra.mxu0 %v6100
    %6710 = vmatpush.bf16.msra.mxu0 %v6096
    %6711 = vmatpush.bf16.msra.mxu0 %v6092
    %6712 = vmatpush.bf16.msra.mxu0 %v6088
    %6713 = vmatmul.bf16.gmra.mxu0 %v4539
    %v6714 = vpop.f32.mrf.mxu0
    %v6715 = vadd.f32 %v6702, %v6714
    %v6716 = vpop.f32.mrf.mxu0
    %6717 = vdwg.mxu0
    %6718 = vmatpush.bf16.msra.mxu0 %v6148
    %6719 = vmatpush.bf16.msra.mxu0 %v6144
    %6720 = vmatpush.bf16.msra.mxu0 %v6140
    %6721 = vmatpush.bf16.msra.mxu0 %v6136
    %6722 = vmatpush.bf16.msra.mxu0 %v6132
    %6723 = vmatpush.bf16.msra.mxu0 %v6128
    %6724 = vmatpush.bf16.msra.mxu0 %v6124
    %6725 = vmatpush.bf16.msra.mxu0 %v6120
    %6726 = vmatmul.bf16.gmra.mxu0 %v4540
    %v6727 = vpop.f32.mrf.mxu0
    %v6728 = vadd.f32 %v6715, %v6727
    %v6729 = vpop.f32.mrf.mxu0
    %6730 = vdwg.mxu0
    %6731 = vmatpush.bf16.msra.mxu0 %v5861
    %6732 = vmatpush.bf16.msra.mxu0 %v5857
    %6733 = vmatpush.bf16.msra.mxu0 %v5853
    %6734 = vmatpush.bf16.msra.mxu0 %v5849
    %6735 = vmatpush.bf16.msra.mxu0 %v5845
    %6736 = vmatpush.bf16.msra.mxu0 %v5841
    %6737 = vmatpush.bf16.msra.mxu0 %v5837
    %6738 = vmatpush.bf16.msra.mxu0 %v5833
    %6739 = vmatmul.bf16.gmra.mxu0 %v4531
    %v6740 = vpop.f32.mrf.mxu0
    %v6741 = vadd.f32 %v4865, %v6740
    %v6742 = vpop.f32.mrf.mxu0
    %6743 = vdwg.mxu0
    %6744 = vmatpush.bf16.msra.mxu0 %v5893
    %6745 = vmatpush.bf16.msra.mxu0 %v5889
    %6746 = vmatpush.bf16.msra.mxu0 %v5885
    %6747 = vmatpush.bf16.msra.mxu0 %v5881
    %6748 = vmatpush.bf16.msra.mxu0 %v5877
    %6749 = vmatpush.bf16.msra.mxu0 %v5873
    %6750 = vmatpush.bf16.msra.mxu0 %v5869
    %6751 = vmatpush.bf16.msra.mxu0 %v5865
    %6752 = vmatmul.bf16.gmra.mxu0 %v4532
    %v6753 = vpop.f32.mrf.mxu0
    %v6754 = vadd.f32 %v6741, %v6753
    %v6755 = vpop.f32.mrf.mxu0
    %6756 = vdwg.mxu0
    %6757 = vmatpush.bf16.msra.mxu0 %v5925
    %6758 = vmatpush.bf16.msra.mxu0 %v5921
    %6759 = vmatpush.bf16.msra.mxu0 %v5917
    %6760 = vmatpush.bf16.msra.mxu0 %v5913
    %6761 = vmatpush.bf16.msra.mxu0 %v5909
    %6762 = vmatpush.bf16.msra.mxu0 %v5905
    %6763 = vmatpush.bf16.msra.mxu0 %v5901
    %6764 = vmatpush.bf16.msra.mxu0 %v5897
    %6765 = vmatmul.bf16.gmra.mxu0 %v4533
    %v6766 = vpop.f32.mrf.mxu0
    %v6767 = vadd.f32 %v6754, %v6766
    %v6768 = vpop.f32.mrf.mxu0
    %6769 = vdwg.mxu0
    %6770 = vmatpush.bf16.msra.mxu0 %v5957
    %6771 = vmatpush.bf16.msra.mxu0 %v5953
    %6772 = vmatpush.bf16.msra.mxu0 %v5949
    %6773 = vmatpush.bf16.msra.mxu0 %v5945
    %6774 = vmatpush.bf16.msra.mxu0 %v5941
    %6775 = vmatpush.bf16.msra.mxu0 %v5937
    %6776 = vmatpush.bf16.msra.mxu0 %v5933
    %6777 = vmatpush.bf16.msra.mxu0 %v5929
    %6778 = vmatmul.bf16.gmra.mxu0 %v4534
    %v6779 = vpop.f32.mrf.mxu0
    %v6780 = vadd.f32 %v6767, %v6779
    %v6781 = vpop.f32.mrf.mxu0
    %6782 = vdwg.mxu0
    %6783 = vmatpush.bf16.msra.mxu0 %v5989
    %6784 = vmatpush.bf16.msra.mxu0 %v5985
    %6785 = vmatpush.bf16.msra.mxu0 %v5981
    %6786 = vmatpush.bf16.msra.mxu0 %v5977
    %6787 = vmatpush.bf16.msra.mxu0 %v5973
    %6788 = vmatpush.bf16.msra.mxu0 %v5969
    %6789 = vmatpush.bf16.msra.mxu0 %v5965
    %6790 = vmatpush.bf16.msra.mxu0 %v5961
    %6791 = vmatmul.bf16.gmra.mxu0 %v4535
    %v6792 = vpop.f32.mrf.mxu0
    %v6793 = vadd.f32 %v6780, %v6792
    %v6794 = vpop.f32.mrf.mxu0
    %6795 = vdwg.mxu0
    %6796 = vmatpush.bf16.msra.mxu0 %v6021
    %6797 = vmatpush.bf16.msra.mxu0 %v6017
    %6798 = vmatpush.bf16.msra.mxu0 %v6013
    %6799 = vmatpush.bf16.msra.mxu0 %v6009
    %6800 = vmatpush.bf16.msra.mxu0 %v6005
    %6801 = vmatpush.bf16.msra.mxu0 %v6001
    %6802 = vmatpush.bf16.msra.mxu0 %v5997
    %6803 = vmatpush.bf16.msra.mxu0 %v5993
    %6804 = vmatmul.bf16.gmra.mxu0 %v4536
    %v6805 = vpop.f32.mrf.mxu0
    %v6806 = vadd.f32 %v6793, %v6805
    %v6807 = vpop.f32.mrf.mxu0
    %6808 = vdwg.mxu0
    %6809 = vmatpush.bf16.msra.mxu0 %v6053
    %6810 = vmatpush.bf16.msra.mxu0 %v6049
    %6811 = vmatpush.bf16.msra.mxu0 %v6045
    %6812 = vmatpush.bf16.msra.mxu0 %v6041
    %6813 = vmatpush.bf16.msra.mxu0 %v6037
    %6814 = vmatpush.bf16.msra.mxu0 %v6033
    %6815 = vmatpush.bf16.msra.mxu0 %v6029
    %6816 = vmatpush.bf16.msra.mxu0 %v6025
    %6817 = vmatmul.bf16.gmra.mxu0 %v4537
    %v6818 = vpop.f32.mrf.mxu0
    %v6819 = vadd.f32 %v6806, %v6818
    %v6820 = vpop.f32.mrf.mxu0
    %6821 = vdwg.mxu0
    %6822 = vmatpush.bf16.msra.mxu0 %v6085
    %6823 = vmatpush.bf16.msra.mxu0 %v6081
    %6824 = vmatpush.bf16.msra.mxu0 %v6077
    %6825 = vmatpush.bf16.msra.mxu0 %v6073
    %6826 = vmatpush.bf16.msra.mxu0 %v6069
    %6827 = vmatpush.bf16.msra.mxu0 %v6065
    %6828 = vmatpush.bf16.msra.mxu0 %v6061
    %6829 = vmatpush.bf16.msra.mxu0 %v6057
    %6830 = vmatmul.bf16.gmra.mxu0 %v4538
    %v6831 = vpop.f32.mrf.mxu0
    %v6832 = vadd.f32 %v6819, %v6831
    %v6833 = vpop.f32.mrf.mxu0
    %6834 = vdwg.mxu0
    %6835 = vmatpush.bf16.msra.mxu0 %v6117
    %6836 = vmatpush.bf16.msra.mxu0 %v6113
    %6837 = vmatpush.bf16.msra.mxu0 %v6109
    %6838 = vmatpush.bf16.msra.mxu0 %v6105
    %6839 = vmatpush.bf16.msra.mxu0 %v6101
    %6840 = vmatpush.bf16.msra.mxu0 %v6097
    %6841 = vmatpush.bf16.msra.mxu0 %v6093
    %6842 = vmatpush.bf16.msra.mxu0 %v6089
    %6843 = vmatmul.bf16.gmra.mxu0 %v4539
    %v6844 = vpop.f32.mrf.mxu0
    %v6845 = vadd.f32 %v6832, %v6844
    %v6846 = vpop.f32.mrf.mxu0
    %6847 = vdwg.mxu0
    %6848 = vmatpush.bf16.msra.mxu0 %v6149
    %6849 = vmatpush.bf16.msra.mxu0 %v6145
    %6850 = vmatpush.bf16.msra.mxu0 %v6141
    %6851 = vmatpush.bf16.msra.mxu0 %v6137
    %6852 = vmatpush.bf16.msra.mxu0 %v6133
    %6853 = vmatpush.bf16.msra.mxu0 %v6129
    %6854 = vmatpush.bf16.msra.mxu0 %v6125
    %6855 = vmatpush.bf16.msra.mxu0 %v6121
    %6856 = vmatmul.bf16.gmra.mxu0 %v4540
    %v6857 = vpop.f32.mrf.mxu0
    %v6858 = vadd.f32 %v6845, %v6857
    %v6859 = vpop.f32.mrf.mxu0
    %6860 = vdwg.mxu0
    %6861 = vmatpush.bf16.msra.mxu0 %v5862
    %6862 = vmatpush.bf16.msra.mxu0 %v5858
    %6863 = vmatpush.bf16.msra.mxu0 %v5854
    %6864 = vmatpush.bf16.msra.mxu0 %v5850
    %6865 = vmatpush.bf16.msra.mxu0 %v5846
    %6866 = vmatpush.bf16.msra.mxu0 %v5842
    %6867 = vmatpush.bf16.msra.mxu0 %v5838
    %6868 = vmatpush.bf16.msra.mxu0 %v5834
    %6869 = vmatmul.bf16.gmra.mxu0 %v4531
    %v6870 = vpop.f32.mrf.mxu0
    %v6871 = vadd.f32 %v4866, %v6870
    %v6872 = vpop.f32.mrf.mxu0
    %6873 = vdwg.mxu0
    %6874 = vmatpush.bf16.msra.mxu0 %v5894
    %6875 = vmatpush.bf16.msra.mxu0 %v5890
    %6876 = vmatpush.bf16.msra.mxu0 %v5886
    %6877 = vmatpush.bf16.msra.mxu0 %v5882
    %6878 = vmatpush.bf16.msra.mxu0 %v5878
    %6879 = vmatpush.bf16.msra.mxu0 %v5874
    %6880 = vmatpush.bf16.msra.mxu0 %v5870
    %6881 = vmatpush.bf16.msra.mxu0 %v5866
    %6882 = vmatmul.bf16.gmra.mxu0 %v4532
    %v6883 = vpop.f32.mrf.mxu0
    %v6884 = vadd.f32 %v6871, %v6883
    %v6885 = vpop.f32.mrf.mxu0
    %6886 = vdwg.mxu0
    %6887 = vmatpush.bf16.msra.mxu0 %v5926
    %6888 = vmatpush.bf16.msra.mxu0 %v5922
    %6889 = vmatpush.bf16.msra.mxu0 %v5918
    %6890 = vmatpush.bf16.msra.mxu0 %v5914
    %6891 = vmatpush.bf16.msra.mxu0 %v5910
    %6892 = vmatpush.bf16.msra.mxu0 %v5906
    %6893 = vmatpush.bf16.msra.mxu0 %v5902
    %6894 = vmatpush.bf16.msra.mxu0 %v5898
    %6895 = vmatmul.bf16.gmra.mxu0 %v4533
    %v6896 = vpop.f32.mrf.mxu0
    %v6897 = vadd.f32 %v6884, %v6896
    %v6898 = vpop.f32.mrf.mxu0
    %6899 = vdwg.mxu0
    %6900 = vmatpush.bf16.msra.mxu0 %v5958
    %6901 = vmatpush.bf16.msra.mxu0 %v5954
    %6902 = vmatpush.bf16.msra.mxu0 %v5950
    %6903 = vmatpush.bf16.msra.mxu0 %v5946
    %6904 = vmatpush.bf16.msra.mxu0 %v5942
    %6905 = vmatpush.bf16.msra.mxu0 %v5938
    %6906 = vmatpush.bf16.msra.mxu0 %v5934
    %6907 = vmatpush.bf16.msra.mxu0 %v5930
    %6908 = vmatmul.bf16.gmra.mxu0 %v4534
    %v6909 = vpop.f32.mrf.mxu0
    %v6910 = vadd.f32 %v6897, %v6909
    %v6911 = vpop.f32.mrf.mxu0
    %6912 = vdwg.mxu0
    %6913 = vmatpush.bf16.msra.mxu0 %v5990
    %6914 = vmatpush.bf16.msra.mxu0 %v5986
    %6915 = vmatpush.bf16.msra.mxu0 %v5982
    %6916 = vmatpush.bf16.msra.mxu0 %v5978
    %6917 = vmatpush.bf16.msra.mxu0 %v5974
    %6918 = vmatpush.bf16.msra.mxu0 %v5970
    %6919 = vmatpush.bf16.msra.mxu0 %v5966
    %6920 = vmatpush.bf16.msra.mxu0 %v5962
    %6921 = vmatmul.bf16.gmra.mxu0 %v4535
    %v6922 = vpop.f32.mrf.mxu0
    %v6923 = vadd.f32 %v6910, %v6922
    %v6924 = vpop.f32.mrf.mxu0
    %6925 = vdwg.mxu0
    %6926 = vmatpush.bf16.msra.mxu0 %v6022
    %6927 = vmatpush.bf16.msra.mxu0 %v6018
    %6928 = vmatpush.bf16.msra.mxu0 %v6014
    %6929 = vmatpush.bf16.msra.mxu0 %v6010
    %6930 = vmatpush.bf16.msra.mxu0 %v6006
    %6931 = vmatpush.bf16.msra.mxu0 %v6002
    %6932 = vmatpush.bf16.msra.mxu0 %v5998
    %6933 = vmatpush.bf16.msra.mxu0 %v5994
    %6934 = vmatmul.bf16.gmra.mxu0 %v4536
    %v6935 = vpop.f32.mrf.mxu0
    %v6936 = vadd.f32 %v6923, %v6935
    %v6937 = vpop.f32.mrf.mxu0
    %6938 = vdwg.mxu0
    %6939 = vmatpush.bf16.msra.mxu0 %v6054
    %6940 = vmatpush.bf16.msra.mxu0 %v6050
    %6941 = vmatpush.bf16.msra.mxu0 %v6046
    %6942 = vmatpush.bf16.msra.mxu0 %v6042
    %6943 = vmatpush.bf16.msra.mxu0 %v6038
    %6944 = vmatpush.bf16.msra.mxu0 %v6034
    %6945 = vmatpush.bf16.msra.mxu0 %v6030
    %6946 = vmatpush.bf16.msra.mxu0 %v6026
    %6947 = vmatmul.bf16.gmra.mxu0 %v4537
    %v6948 = vpop.f32.mrf.mxu0
    %v6949 = vadd.f32 %v6936, %v6948
    %v6950 = vpop.f32.mrf.mxu0
    %6951 = vdwg.mxu0
    %6952 = vmatpush.bf16.msra.mxu0 %v6086
    %6953 = vmatpush.bf16.msra.mxu0 %v6082
    %6954 = vmatpush.bf16.msra.mxu0 %v6078
    %6955 = vmatpush.bf16.msra.mxu0 %v6074
    %6956 = vmatpush.bf16.msra.mxu0 %v6070
    %6957 = vmatpush.bf16.msra.mxu0 %v6066
    %6958 = vmatpush.bf16.msra.mxu0 %v6062
    %6959 = vmatpush.bf16.msra.mxu0 %v6058
    %6960 = vmatmul.bf16.gmra.mxu0 %v4538
    %v6961 = vpop.f32.mrf.mxu0
    %v6962 = vadd.f32 %v6949, %v6961
    %v6963 = vpop.f32.mrf.mxu0
    %6964 = vdwg.mxu0
    %6965 = vmatpush.bf16.msra.mxu0 %v6118
    %6966 = vmatpush.bf16.msra.mxu0 %v6114
    %6967 = vmatpush.bf16.msra.mxu0 %v6110
    %6968 = vmatpush.bf16.msra.mxu0 %v6106
    %6969 = vmatpush.bf16.msra.mxu0 %v6102
    %6970 = vmatpush.bf16.msra.mxu0 %v6098
    %6971 = vmatpush.bf16.msra.mxu0 %v6094
    %6972 = vmatpush.bf16.msra.mxu0 %v6090
    %6973 = vmatmul.bf16.gmra.mxu0 %v4539
    %v6974 = vpop.f32.mrf.mxu0
    %v6975 = vadd.f32 %v6962, %v6974
    %v6976 = vpop.f32.mrf.mxu0
    %6977 = vdwg.mxu0
    %6978 = vmatpush.bf16.msra.mxu0 %v6150
    %6979 = vmatpush.bf16.msra.mxu0 %v6146
    %6980 = vmatpush.bf16.msra.mxu0 %v6142
    %6981 = vmatpush.bf16.msra.mxu0 %v6138
    %6982 = vmatpush.bf16.msra.mxu0 %v6134
    %6983 = vmatpush.bf16.msra.mxu0 %v6130
    %6984 = vmatpush.bf16.msra.mxu0 %v6126
    %6985 = vmatpush.bf16.msra.mxu0 %v6122
    %6986 = vmatmul.bf16.gmra.mxu0 %v4540
    %v6987 = vpop.f32.mrf.mxu0
    %v6988 = vadd.f32 %v6975, %v6987
    %v6989 = vpop.f32.mrf.mxu0
    %6990 = vdwg.mxu0
    %v6991 = vtanh.pop %v6598
    %v6992 = vtanh.pop %v6728
    %v6993 = vtanh.pop %v6858
    %v6994 = vtanh.pop %v6988
    %v6995 = vpack.c.bf16 %v6991, %v6991
    %v6996 = vpack.c.bf16 %v6992, %v6992
    %v6997 = vpack.c.bf16 %v6993, %v6993
    %v6998 = vpack.c.bf16 %v6994, %v6994
    %v6999 = vld [vmem:[#allocation11] sm:$0xf]
    %v7000 = vld [vmem:[#allocation11 + $0x4] sm:$0xf]
    %v7001 = vld [vmem:[#allocation11 + $0x8] sm:$0xf]
    %v7002 = vld [vmem:[#allocation11 + $0xc] sm:$0xf]
    %v7003 = vld [vmem:[#allocation11 + $0x10] sm:$0xf]
    %v7004 = vld [vmem:[#allocation11 + $0x14] sm:$0xf]
    %v7005 = vld [vmem:[#allocation11 + $0x18] sm:$0xf]
    %v7006 = vld [vmem:[#allocation11 + $0x1c] sm:$0xf]
    %v7007 = vld [vmem:[#allocation11 + $0x20] sm:$0xf]
    %v7008 = vld [vmem:[#allocation11 + $0x24] sm:$0xf]
    %v7009 = vld [vmem:[#allocation11 + $0x28] sm:$0xf]
    %v7010 = vld [vmem:[#allocation11 + $0x2c] sm:$0xf]
    %v7011 = vld [vmem:[#allocation11 + $0x30] sm:$0xf]
    %v7012 = vld [vmem:[#allocation11 + $0x34] sm:$0xf]
    %v7013 = vld [vmem:[#allocation11 + $0x38] sm:$0xf]
    %v7014 = vld [vmem:[#allocation11 + $0x3c] sm:$0xf]
    %v7015 = vld [vmem:[#allocation11 + $0x40] sm:$0xf]
    %v7016 = vld [vmem:[#allocation11 + $0x44] sm:$0xf]
    %v7017 = vld [vmem:[#allocation11 + $0x48] sm:$0xf]
    %v7018 = vld [vmem:[#allocation11 + $0x4c] sm:$0xf]
    %v7019 = vld [vmem:[#allocation11 + $0x50] sm:$0xf]
    %v7020 = vld [vmem:[#allocation11 + $0x54] sm:$0xf]
    %v7021 = vld [vmem:[#allocation11 + $0x58] sm:$0xf]
    %v7022 = vld [vmem:[#allocation11 + $0x5c] sm:$0xf]
    %v7023 = vld [vmem:[#allocation11 + $0x60] sm:$0xf]
    %v7024 = vld [vmem:[#allocation11 + $0x64] sm:$0xf]
    %v7025 = vld [vmem:[#allocation11 + $0x68] sm:$0xf]
    %v7026 = vld [vmem:[#allocation11 + $0x6c] sm:$0xf]
    %v7027 = vld [vmem:[#allocation11 + $0x70] sm:$0xf]
    %v7028 = vld [vmem:[#allocation11 + $0x74] sm:$0xf]
    %v7029 = vld [vmem:[#allocation11 + $0x78] sm:$0xf]
    %v7030 = vld [vmem:[#allocation11 + $0x7c] sm:$0xf]
    %v7031 = vld [vmem:[#allocation11 + $0x80] sm:$0xf]
    %v7032 = vld [vmem:[#allocation11 + $0x84] sm:$0xf]
    %v7033 = vld [vmem:[#allocation11 + $0x88] sm:$0xf]
    %v7034 = vld [vmem:[#allocation11 + $0x8c] sm:$0xf]
    %v7035 = vld [vmem:[#allocation11 + $0x90] sm:$0xf]
    %v7036 = vld [vmem:[#allocation11 + $0x94] sm:$0xf]
    %v7037 = vld [vmem:[#allocation11 + $0x98] sm:$0xf]
    %v7038 = vld [vmem:[#allocation11 + $0x9c] sm:$0xf]
    %v7039 = vld [vmem:[#allocation11 + $0xa0] sm:$0xf]
    %v7040 = vld [vmem:[#allocation11 + $0xa4] sm:$0xf]
    %v7041 = vld [vmem:[#allocation11 + $0xa8] sm:$0xf]
    %v7042 = vld [vmem:[#allocation11 + $0xac] sm:$0xf]
    %v7043 = vld [vmem:[#allocation11 + $0xb0] sm:$0xf]
    %v7044 = vld [vmem:[#allocation11 + $0xb4] sm:$0xf]
    %v7045 = vld [vmem:[#allocation11 + $0xb8] sm:$0xf]
    %v7046 = vld [vmem:[#allocation11 + $0xbc] sm:$0xf]
    %v7047 = vld [vmem:[#allocation11 + $0xc0] sm:$0xf]
    %v7048 = vld [vmem:[#allocation11 + $0xc4] sm:$0xf]
    %v7049 = vld [vmem:[#allocation11 + $0xc8] sm:$0xf]
    %v7050 = vld [vmem:[#allocation11 + $0xcc] sm:$0xf]
    %v7051 = vld [vmem:[#allocation11 + $0xd0] sm:$0xf]
    %v7052 = vld [vmem:[#allocation11 + $0xd4] sm:$0xf]
    %v7053 = vld [vmem:[#allocation11 + $0xd8] sm:$0xf]
    %v7054 = vld [vmem:[#allocation11 + $0xdc] sm:$0xf]
    %v7055 = vld [vmem:[#allocation11 + $0xe0] sm:$0xf]
    %v7056 = vld [vmem:[#allocation11 + $0xe4] sm:$0xf]
    %v7057 = vld [vmem:[#allocation11 + $0xe8] sm:$0xf]
    %v7058 = vld [vmem:[#allocation11 + $0xec] sm:$0xf]
    %v7059 = vld [vmem:[#allocation11 + $0xf0] sm:$0xf]
    %v7060 = vld [vmem:[#allocation11 + $0xf4] sm:$0xf]
    %v7061 = vld [vmem:[#allocation11 + $0xf8] sm:$0xf]
    %v7062 = vld [vmem:[#allocation11 + $0xfc] sm:$0xf]
    %v7063 = vld [vmem:[#allocation13] sm:$0x1]
    %v7065 = vperm.slane %v7063, 0
    %v7131 = vunpack.c.l.b16 %v6999
    %v7132 = vunpack.c.l.b16 %v7000
    %v7133 = vunpack.c.l.b16 %v7001
    %v7134 = vunpack.c.l.b16 %v7002
    %v7135 = vunpack.c.l.b16 %v7003
    %v7136 = vunpack.c.l.b16 %v7004
    %v7137 = vunpack.c.l.b16 %v7005
    %v7138 = vunpack.c.l.b16 %v7006
    %v7139 = vunpack.c.l.b16 %v7007
    %v7140 = vunpack.c.l.b16 %v7008
    %v7141 = vunpack.c.l.b16 %v7009
    %v7142 = vunpack.c.l.b16 %v7010
    %v7143 = vunpack.c.l.b16 %v7011
    %v7144 = vunpack.c.l.b16 %v7012
    %v7145 = vunpack.c.l.b16 %v7013
    %v7146 = vunpack.c.l.b16 %v7014
    %v7147 = vunpack.c.l.b16 %v7015
    %v7148 = vunpack.c.l.b16 %v7016
    %v7149 = vunpack.c.l.b16 %v7017
    %v7150 = vunpack.c.l.b16 %v7018
    %v7151 = vunpack.c.l.b16 %v7019
    %v7152 = vunpack.c.l.b16 %v7020
    %v7153 = vunpack.c.l.b16 %v7021
    %v7154 = vunpack.c.l.b16 %v7022
    %v7155 = vunpack.c.l.b16 %v7023
    %v7156 = vunpack.c.l.b16 %v7024
    %v7157 = vunpack.c.l.b16 %v7025
    %v7158 = vunpack.c.l.b16 %v7026
    %v7159 = vunpack.c.l.b16 %v7027
    %v7160 = vunpack.c.l.b16 %v7028
    %v7161 = vunpack.c.l.b16 %v7029
    %v7162 = vunpack.c.l.b16 %v7030
    %v7163 = vunpack.c.l.b16 %v7031
    %v7164 = vunpack.c.l.b16 %v7032
    %v7165 = vunpack.c.l.b16 %v7033
    %v7166 = vunpack.c.l.b16 %v7034
    %v7167 = vunpack.c.l.b16 %v7035
    %v7168 = vunpack.c.l.b16 %v7036
    %v7169 = vunpack.c.l.b16 %v7037
    %v7170 = vunpack.c.l.b16 %v7038
    %v7171 = vunpack.c.l.b16 %v7039
    %v7172 = vunpack.c.l.b16 %v7040
    %v7173 = vunpack.c.l.b16 %v7041
    %v7174 = vunpack.c.l.b16 %v7042
    %v7175 = vunpack.c.l.b16 %v7043
    %v7176 = vunpack.c.l.b16 %v7044
    %v7177 = vunpack.c.l.b16 %v7045
    %v7178 = vunpack.c.l.b16 %v7046
    %v7179 = vunpack.c.l.b16 %v7047
    %v7180 = vunpack.c.l.b16 %v7048
    %v7181 = vunpack.c.l.b16 %v7049
    %v7182 = vunpack.c.l.b16 %v7050
    %v7183 = vunpack.c.l.b16 %v7051
    %v7184 = vunpack.c.l.b16 %v7052
    %v7185 = vunpack.c.l.b16 %v7053
    %v7186 = vunpack.c.l.b16 %v7054
    %v7187 = vunpack.c.l.b16 %v7055
    %v7188 = vunpack.c.l.b16 %v7056
    %v7189 = vunpack.c.l.b16 %v7057
    %v7190 = vunpack.c.l.b16 %v7058
    %v7191 = vunpack.c.l.b16 %v7059
    %v7192 = vunpack.c.l.b16 %v7060
    %v7193 = vunpack.c.l.b16 %v7061
    %v7194 = vunpack.c.l.b16 %v7062
    %v7195 = vpack.c.b16 %v7132, %v7131
    %v7196 = vpack.c.b16 %v7134, %v7133
    %v7197 = vpack.c.b16 %v7136, %v7135
    %v7198 = vpack.c.b16 %v7138, %v7137
    %v7199 = vpack.c.b16 %v7140, %v7139
    %v7200 = vpack.c.b16 %v7142, %v7141
    %v7201 = vpack.c.b16 %v7144, %v7143
    %v7202 = vpack.c.b16 %v7146, %v7145
    %v7203 = vpack.c.b16 %v7148, %v7147
    %v7204 = vpack.c.b16 %v7150, %v7149
    %v7205 = vpack.c.b16 %v7152, %v7151
    %v7206 = vpack.c.b16 %v7154, %v7153
    %v7207 = vpack.c.b16 %v7156, %v7155
    %v7208 = vpack.c.b16 %v7158, %v7157
    %v7209 = vpack.c.b16 %v7160, %v7159
    %v7210 = vpack.c.b16 %v7162, %v7161
    %v7211 = vpack.c.b16 %v7164, %v7163
    %v7212 = vpack.c.b16 %v7166, %v7165
    %v7213 = vpack.c.b16 %v7168, %v7167
    %v7214 = vpack.c.b16 %v7170, %v7169
    %v7215 = vpack.c.b16 %v7172, %v7171
    %v7216 = vpack.c.b16 %v7174, %v7173
    %v7217 = vpack.c.b16 %v7176, %v7175
    %v7218 = vpack.c.b16 %v7178, %v7177
    %v7219 = vpack.c.b16 %v7180, %v7179
    %v7220 = vpack.c.b16 %v7182, %v7181
    %v7221 = vpack.c.b16 %v7184, %v7183
    %v7222 = vpack.c.b16 %v7186, %v7185
    %v7223 = vpack.c.b16 %v7188, %v7187
    %v7224 = vpack.c.b16 %v7190, %v7189
    %v7225 = vpack.c.b16 %v7192, %v7191
    %v7226 = vpack.c.b16 %v7194, %v7193
    %7259 = vmatpush.bf16.msra.mxu0 %v7202
    %7260 = vmatpush.bf16.msra.mxu0 %v7201
    %7261 = vmatpush.bf16.msra.mxu0 %v7200
    %7262 = vmatpush.bf16.msra.mxu0 %v7199
    %7263 = vmatpush.bf16.msra.mxu0 %v7198
    %7264 = vmatpush.bf16.msra.mxu0 %v7197
    %7265 = vmatpush.bf16.msra.mxu0 %v7196
    %7266 = vmatpush.bf16.msra.mxu0 %v7195
    %7267 = vmatmul.bf16.gmra.mxu0 %v6995
    %v7268 = vpop.f32.mrf.mxu0
    %v7269 = vadd.f32 %v7065, %v7268
    %v7270 = vpop.f32.mrf.mxu0
    %7271 = vdwg.mxu0
    %7272 = vmatpush.bf16.msra.mxu0 %v7210
    %7273 = vmatpush.bf16.msra.mxu0 %v7209
    %7274 = vmatpush.bf16.msra.mxu0 %v7208
    %7275 = vmatpush.bf16.msra.mxu0 %v7207
    %7276 = vmatpush.bf16.msra.mxu0 %v7206
    %7277 = vmatpush.bf16.msra.mxu0 %v7205
    %7278 = vmatpush.bf16.msra.mxu0 %v7204
    %7279 = vmatpush.bf16.msra.mxu0 %v7203
    %7280 = vmatmul.bf16.gmra.mxu0 %v6996
    %v7281 = vpop.f32.mrf.mxu0
    %v7282 = vadd.f32 %v7269, %v7281
    %v7283 = vpop.f32.mrf.mxu0
    %7284 = vdwg.mxu0
    %7285 = vmatpush.bf16.msra.mxu0 %v7218
    %7286 = vmatpush.bf16.msra.mxu0 %v7217
    %7287 = vmatpush.bf16.msra.mxu0 %v7216
    %7288 = vmatpush.bf16.msra.mxu0 %v7215
    %7289 = vmatpush.bf16.msra.mxu0 %v7214
    %7290 = vmatpush.bf16.msra.mxu0 %v7213
    %7291 = vmatpush.bf16.msra.mxu0 %v7212
    %7292 = vmatpush.bf16.msra.mxu0 %v7211
    %7293 = vmatmul.bf16.gmra.mxu0 %v6997
    %v7294 = vpop.f32.mrf.mxu0
    %v7295 = vadd.f32 %v7282, %v7294
    %v7296 = vpop.f32.mrf.mxu0
    %7297 = vdwg.mxu0
    %7298 = vmatpush.bf16.msra.mxu0 %v7226
    %7299 = vmatpush.bf16.msra.mxu0 %v7225
    %7300 = vmatpush.bf16.msra.mxu0 %v7224
    %7301 = vmatpush.bf16.msra.mxu0 %v7223
    %7302 = vmatpush.bf16.msra.mxu0 %v7222
    %7303 = vmatpush.bf16.msra.mxu0 %v7221
    %7304 = vmatpush.bf16.msra.mxu0 %v7220
    %7305 = vmatpush.bf16.msra.mxu0 %v7219
    %7306 = vmatmul.bf16.gmra.mxu0 %v6998
    %v7307 = vpop.f32.mrf.mxu0
    %v7308 = vadd.f32 %v7295, %v7307
    %v7309 = vpop.f32.mrf.mxu0
    %7310 = vdwg.mxu0
    %v7311 = vtanh.pop %v7308
    %v7312 = vpack.c.bf16 %v7311, %v7311
    %v7313 = vld [vmem:[#allocation14] sm:$0xf]
    %v7314 = vld [vmem:[#allocation14 + $0x4] sm:$0xf]
    %v7315 = vld [vmem:[#allocation14 + $0x8] sm:$0xf]
    %v7316 = vld [vmem:[#allocation14 + $0xc] sm:$0xf]
    %v7317 = vld [vmem:[#allocation14 + $0x10] sm:$0xf]
    %v7318 = vld [vmem:[#allocation14 + $0x14] sm:$0xf]
    %v7319 = vld [vmem:[#allocation14 + $0x18] sm:$0xf]
    %v7320 = vld [vmem:[#allocation14 + $0x1c] sm:$0xf]
    %v7321 = vld [vmem:[#allocation14 + $0x20] sm:$0xf]
    %v7322 = vld [vmem:[#allocation14 + $0x24] sm:$0xf]
    %v7323 = vld [vmem:[#allocation14 + $0x28] sm:$0xf]
    %v7324 = vld [vmem:[#allocation14 + $0x2c] sm:$0xf]
    %v7325 = vld [vmem:[#allocation14 + $0x30] sm:$0xf]
    %v7326 = vld [vmem:[#allocation14 + $0x34] sm:$0xf]
    %v7327 = vld [vmem:[#allocation14 + $0x38] sm:$0xf]
    %v7328 = vld [vmem:[#allocation14 + $0x3c] sm:$0xf]
    %v7329 = vld [vmem:[#allocation16] sm:$0x1]
    %v7331 = vperm.slane %v7329, 0
    %v7349 = vunpack.c.l.b16 %v7313
    %v7350 = vunpack.c.l.b16 %v7314
    %v7351 = vunpack.c.l.b16 %v7315
    %v7352 = vunpack.c.l.b16 %v7316
    %v7353 = vunpack.c.l.b16 %v7317
    %v7354 = vunpack.c.l.b16 %v7318
    %v7355 = vunpack.c.l.b16 %v7319
    %v7356 = vunpack.c.l.b16 %v7320
    %v7357 = vunpack.c.l.b16 %v7321
    %v7358 = vunpack.c.l.b16 %v7322
    %v7359 = vunpack.c.l.b16 %v7323
    %v7360 = vunpack.c.l.b16 %v7324
    %v7361 = vunpack.c.l.b16 %v7325
    %v7362 = vunpack.c.l.b16 %v7326
    %v7363 = vunpack.c.l.b16 %v7327
    %v7364 = vunpack.c.l.b16 %v7328
    %v7365 = vpack.c.b16 %v7350, %v7349
    %v7366 = vpack.c.b16 %v7352, %v7351
    %v7367 = vpack.c.b16 %v7354, %v7353
    %v7368 = vpack.c.b16 %v7356, %v7355
    %v7369 = vpack.c.b16 %v7358, %v7357
    %v7370 = vpack.c.b16 %v7360, %v7359
    %v7371 = vpack.c.b16 %v7362, %v7361
    %v7372 = vpack.c.b16 %v7364, %v7363
    %7381 = vmatpush.bf16.msra.mxu0 %v7372
    %7382 = vmatpush.bf16.msra.mxu0 %v7371
    %7383 = vmatpush.bf16.msra.mxu0 %v7370
    %7384 = vmatpush.bf16.msra.mxu0 %v7369
    %7385 = vmatpush.bf16.msra.mxu0 %v7368
    %7386 = vmatpush.bf16.msra.mxu0 %v7367
    %7387 = vmatpush.bf16.msra.mxu0 %v7366
    %7388 = vmatpush.bf16.msra.mxu0 %v7365
    %7389 = vmatmul.bf16.gmra.mxu0 %v7312
    %v7390 = vpop.f32.mrf.mxu0
    %v7391 = vadd.f32 %v7331, %v7390
    %v7392 = vpop.f32.mrf.mxu0
    %7393 = vdwg.mxu0
    %v7394 = vtanh.pop %v7391
    %v7395 = vpack.c.bf16 %v7394, %v7394
    %v7396 = vld [vmem:[#allocation17] sm:$0xf]
    %v7397 = vld [vmem:[#allocation17 + $0x4] sm:$0xf]
    %v7398 = vld [vmem:[#allocation17 + $0x8] sm:$0xf]
    %v7399 = vld [vmem:[#allocation17 + $0xc] sm:$0xf]
    %v7400 = vld [vmem:[#allocation17 + $0x10] sm:$0xf]
    %v7401 = vld [vmem:[#allocation17 + $0x14] sm:$0xf]
    %v7402 = vld [vmem:[#allocation17 + $0x18] sm:$0xf]
    %v7403 = vld [vmem:[#allocation17 + $0x1c] sm:$0xf]
    %v7404 = vld [vmem:[#allocation17 + $0x20] sm:$0xf]
    %v7405 = vld [vmem:[#allocation17 + $0x24] sm:$0xf]
    %v7406 = vld [vmem:[#allocation17 + $0x28] sm:$0xf]
    %v7407 = vld [vmem:[#allocation17 + $0x2c] sm:$0xf]
    %v7408 = vld [vmem:[#allocation17 + $0x30] sm:$0xf]
    %v7409 = vld [vmem:[#allocation17 + $0x34] sm:$0xf]
    %v7410 = vld [vmem:[#allocation17 + $0x38] sm:$0xf]
    %v7411 = vld [vmem:[#allocation17 + $0x3c] sm:$0xf]
    %v7412 = vld [vmem:[#allocation19] sm:$0x1]
    %v7414 = vperm.slane %v7412, 0
    %v7432 = vunpack.c.l.b16 %v7396
    %v7433 = vunpack.c.l.b16 %v7397
    %v7434 = vunpack.c.l.b16 %v7398
    %v7435 = vunpack.c.l.b16 %v7399
    %v7436 = vunpack.c.l.b16 %v7400
    %v7437 = vunpack.c.l.b16 %v7401
    %v7438 = vunpack.c.l.b16 %v7402
    %v7439 = vunpack.c.l.b16 %v7403
    %v7440 = vunpack.c.l.b16 %v7404
    %v7441 = vunpack.c.l.b16 %v7405
    %v7442 = vunpack.c.l.b16 %v7406
    %v7443 = vunpack.c.l.b16 %v7407
    %v7444 = vunpack.c.l.b16 %v7408
    %v7445 = vunpack.c.l.b16 %v7409
    %v7446 = vunpack.c.l.b16 %v7410
    %v7447 = vunpack.c.l.b16 %v7411
    %v7448 = vpack.c.b16 %v7433, %v7432
    %v7449 = vpack.c.b16 %v7435, %v7434
    %v7450 = vpack.c.b16 %v7437, %v7436
    %v7451 = vpack.c.b16 %v7439, %v7438
    %v7452 = vpack.c.b16 %v7441, %v7440
    %v7453 = vpack.c.b16 %v7443, %v7442
    %v7454 = vpack.c.b16 %v7445, %v7444
    %v7455 = vpack.c.b16 %v7447, %v7446
    %7464 = vmatpush.bf16.msra.mxu0 %v7455
    %7465 = vmatpush.bf16.msra.mxu0 %v7454
    %7466 = vmatpush.bf16.msra.mxu0 %v7453
    %7467 = vmatpush.bf16.msra.mxu0 %v7452
    %7468 = vmatpush.bf16.msra.mxu0 %v7451
    %7469 = vmatpush.bf16.msra.mxu0 %v7450
    %7470 = vmatpush.bf16.msra.mxu0 %v7449
    %7471 = vmatpush.bf16.msra.mxu0 %v7448
    %7472 = vmatmul.bf16.gmra.mxu0 %v7395
    %v7473 = vpop.f32.mrf.mxu0
    %v7474 = vadd.f32 %v7414, %v7473
    %v7475 = vpop.f32.mrf.mxu0
    %7476 = vdwg.mxu0
    %7477 = vst [vmem:[#allocation20] sm:$0xff] %v7474
    // Predicated region
    $region90: #{tpu_custom_call.1} parent=1 // pred_check
      _
    $region91: #{tpu_custom_call.1} parent=1 // pred_check_branch
      %7479 = sbr.rel (0) target = $region93
    $region92: #{tpu_custom_call.1} parent=1 // pred_region
      %7481 = vsyncadd [#allocation4], 0
      %s7483 = sshll.u32 [#allocation20], 4
      %s7484 = int_to_ptr.vmem [resolvable:$true] %s7483
      %s7485 = sshll.u32 %s11, 4
      %s7486 = int_to_ptr.hbm [resolvable:$true] %s7485
      %7488 = dma.vmem_to_hbm [thread:$0]  %s7484, 128, %s7486, [#allocation4]
    $region93: #{tpu_custom_call.1} parent=1 // pred_fallthru
      _
    // Predicated region
    $region94: #{tpu_custom_call.1} parent=1 // pred_check
      _
    $region95: #{tpu_custom_call.1} parent=1 // pred_check_branch
      %7490 = sbr.rel (0) target = $region97
    $region96: #{tpu_custom_call.1} parent=1 // pred_region
      %7492 = dma.done [#allocation4], 128
    $region97: #{tpu_custom_call.1} parent=1 // pred_fallthru
      _
    %7493 = vsyncpa [#allocation3], 1
    %7494 = vsyncpa [#allocation6], 1
    %7495 = vsyncpa [#allocation9], 1
    %7496 = vsyncpa [#allocation12], 1
    %7497 = vsyncpa [#allocation15], 1
    %7498 = vsyncpa [#allocation18], 1
    %7499 = vsyncpa [#allocation4], 1

</llo_original>
